<compile_context>
chip_gen: v7x
topology: tpu7x:2x2x1
jax: 0.10.0
libtpu: 0.0.40
codegen_flags: <defaults>
</compile_context>

<pallas_src>
import functools

import jax
import jax.numpy as jnp
import numpy as np
from jax.experimental import pallas as pl
from jax.experimental.pallas import tpu as pltpu

F32 = jnp.float32
BF16 = jnp.bfloat16
LN_EPS = 1e-5      # PyTorch LayerNorm default
MSG_EPS = 1e-6     # eps in GatedGCN.message
LANE = 128
OUT_PAD = 128      # scorer output padded to a full lane width (real score in column 0)


def _rup(n, m):
    return ((n + m - 1) // m) * m


def _pad2(a, rows, cols):
    return jnp.pad(a, ((0, rows - a.shape[0]), (0, cols - a.shape[1])))


def _vmem_limit_bytes():
    # Per-generation VMEM budget: ~85% of physical (v5e/v6e: 128 MiB -> ~109 MiB,
    # v7x: 64 MiB -> ~54 MiB); conservative 64 MiB fallback if the query is unavailable.
    try:
        cap = int(pltpu.get_tpu_info().vmem_capacity_bytes)
    except Exception:
        cap = 64 * 1024 * 1024
    return max(32 * 1024 * 1024, min(int(cap * 0.85), 112 * 1024 * 1024))


# ---------------------------------------------------------------------------
# The single fused kernel
# ---------------------------------------------------------------------------
def fused_forward_kernel(
        x_ref, ea_ref, row_sub_ref, col_sub_ref, row_lane_ref, col_lane_ref,
        w11_ref, b11_ref, g1_ref, bt1_ref, w12_ref, b12_ref,
        w21_ref, b21_ref, g2_ref, bt2_ref, w22_ref, b22_ref,
        wn_ref, bn_ref, wb1_ref, bb1_ref,
        gh_ref, bh_ref, ge_ref, be_ref,
        s1a_ref, s1b_ref, s1c_ref, sb1_ref, s2w_ref, sb2_ref,
        out_ref, *, num_layers, h_real):
    H = gh_ref.shape[-1]                  # padded hidden width (lane-dense)
    Np = x_ref.shape[0]                   # padded node count
    Ep = ea_ref.shape[0]                  # padded edge count
    inv_h = 1.0 / float(h_real)
    pad_half = 0.5 * float(H - h_real)    # padded cols of e are exactly 0 -> sigmoid 0.5

    # --- one-hot gather/scatter operators, built once from the int32 edge indices -----
    # (bf16: the 0/1 values are exact; padded edge slots carry index == Np, which never
    #  matches any node, so they neither gather nor scatter.)
    node_iota_lane = jax.lax.broadcasted_iota(jnp.int32, (Ep, Np), 1)
    node_iota_sub = jax.lax.broadcasted_iota(jnp.int32, (Np, Ep), 0)
    row_oh = jnp.where(node_iota_lane == row_sub_ref[...], 1.0, 0.0).astype(BF16)  # [E,N]
    col_oh = jnp.where(node_iota_lane == col_sub_ref[...], 1.0, 0.0).astype(BF16)  # [E,N]
    rowT = jnp.where(node_iota_sub == row_lane_ref[...], 1.0, 0.0).astype(BF16)    # [N,E]
    colT = jnp.where(node_iota_sub == col_lane_ref[...], 1.0, 0.0).astype(BF16)    # [N,E]

    def ln(v, gamma, beta):
        # LayerNorm over the *real* feature columns; padded activation columns are kept
        # exactly 0 (zero-padded weights/biases/gamma/beta) so full-width sums equal
        # real-width sums.  Single-pass (clamped) variance; adequate at these magnitudes.
        mu = jnp.sum(v, axis=-1, keepdims=True) * inv_h
        ex2 = jnp.sum(v * v, axis=-1, keepdims=True) * inv_h
        var = jnp.maximum(ex2 - mu * mu, 0.0)
        return (v - mu) * jax.lax.rsqrt(var + LN_EPS) * gamma + beta

    def encode(v, w1, b1, g, bt, w2, b2):
        t = jnp.dot(v, w1[...], preferred_element_type=F32) + b1[...]
        t = ln(jnp.maximum(t, 0.0), g[...], bt[...])
        return jnp.dot(t, w2[...], preferred_element_type=F32) + b2[...]

    h0 = encode(x_ref[...], w11_ref, b11_ref, g1_ref, bt1_ref, w12_ref, b12_ref)
    e0 = encode(ea_ref[...], w21_ref, b21_ref, g2_ref, bt2_ref, w22_ref, b22_ref)

    def oh_dot(op, mat):
        # one-hot gather / scatter on the native bf16 MXU path, f32 accumulation.
        return jnp.dot(op, mat.astype(BF16), preferred_element_type=F32)

    def layer_body(l, carry):
        h, e = carry
        # One fused node-side linear: columns ordered [A1 | A2 | B2 | B3 | A3].
        HB = jnp.dot(h, wn_ref[l], preferred_element_type=F32) + bn_ref[l]
        A1h = HB[:, 0:H]
        B1h = jnp.dot(e, wb1_ref[l], preferred_element_type=F32) + bb1_ref[l]

        # Two fused one-hot gathers over contiguous, 128-aligned column windows of HB.
        R = oh_dot(row_oh, HB[:, H:4 * H])        # [A2|B2|B3][row]
        C = oh_dot(col_oh, HB[:, 2 * H:5 * H])    # [B2|B3|A3][col]
        A2h_row, B2h_row, B3h_row = R[:, 0:H], R[:, H:2 * H], R[:, 2 * H:3 * H]
        B2h_col, B3h_col, A3h_col = C[:, 0:H], C[:, H:2 * H], C[:, 2 * H:3 * H]

        ge_l, be_l = ge_ref[l], be_ref[l]
        e_ji = e + ln(jnp.maximum(B1h + B2h_row + B3h_col, 0.0), ge_l, be_l)
        e_ik = e + ln(jnp.maximum(B1h + B2h_col + B3h_row, 0.0), ge_l, be_l)

        sig_ji = jax.nn.sigmoid(e_ji)
        sig_ik = jax.nn.sigmoid(e_ik)
        # Feature-axis normalization (matches torch.sum(sigma, dim=1)).  Padded feature
        # columns of e are exactly 0 -> sigmoid exactly 0.5 there, so subtract the exact
        # 0.5*n_pad correction instead of multiplying by a mask.
        inv_ji = pl.reciprocal(
            jnp.sum(sig_ji, axis=-1, keepdims=True) - pad_half + MSG_EPS, approx=True)
        inv_ik = pl.reciprocal(
            jnp.sum(sig_ik, axis=-1, keepdims=True) - pad_half + MSG_EPS, approx=True)
        msg_ji = A2h_row * sig_ji * inv_ji
        msg_ik = A3h_col * sig_ik * inv_ik

        # Scatter-add via the transposed one-hots: plain [N,E] @ [E,H] bf16 MXU ops.
        h_ji = oh_dot(colT, msg_ji)
        h_ik = oh_dot(rowT, msg_ik)

        h_new = ln(jnp.maximum(A1h + h_ji + h_ik, 0.0), gh_ref[l], bh_ref[l])
        return (h + h_new, e_ji)

    h, e = jax.lax.fori_loop(0, num_layers, layer_body, (h0, e0))

    # Edge scorer, reassociated: node-side projections first (N*H*H), then per-edge
    # one-hot gathers, instead of gathering h and doing E*H*H matmuls.
    hA = jnp.dot(h, s1a_ref[...], preferred_element_type=F32)    # [N, H]
    hB = jnp.dot(h, s1b_ref[...], preferred_element_type=F32)    # [N, H]
    s = (oh_dot(row_oh, hA) + oh_dot(col_oh, hB)
         + jnp.dot(e, s1c_ref[...], preferred_element_type=F32) + sb1_ref[...])
    s = jnp.maximum(s, 0.0)
    out_ref[...] = (jnp.dot(s, s2w_ref[...], preferred_element_type=F32)
                    + sb2_ref[...]).astype(out_ref.dtype)


# ---------------------------------------------------------------------------
# Wrapper: pad / pack parameters and invoke the single pallas_call
# ---------------------------------------------------------------------------
def _pad_params(params, hidden):
    Hp = _rup(hidden, LANE)
    Fnp = _rup(params["W11"][0].shape[0], LANE)
    Fep = _rup(params["W21"][0].shape[0], LANE)

    def pw(wb, rp, cp):
        w, b = wb
        return _pad2(w, rp, cp), _pad2(b, 1, cp)

    def pln(gb, cp):
        g, b = gb
        return _pad2(g, 1, cp), _pad2(b, 1, cp)   # zero-pad gamma too -> padded cols stay 0

    w11, b11 = pw(params["W11"], Fnp, Hp)
    g1, bt1 = pln(params["ln1"], Hp)
    w12, b12 = pw(params["W12"], Hp, Hp)
    w21, b21 = pw(params["W21"], Fep, Hp)
    g2, bt2 = pln(params["ln2"], Hp)
    w22, b22 = pw(params["W22"], Hp, Hp)

    wn_l, bn_l, wb1_l, bb1_l = [], [], [], []
    gh_l, bh_l, ge_l, be_l = [], [], [], []
    for lp in params["layers"]:
        ws, bs = [], []
        for name in ("A1", "A2", "B2", "B3", "A3"):   # ordering chosen for contiguous gathers
            w, b = pw(lp[name], Hp, Hp)
            ws.append(w)
            bs.append(b)
        wn_l.append(jnp.concatenate(ws, axis=1))
        bn_l.append(jnp.concatenate(bs, axis=1))
        w, b = pw(lp["B1"], Hp, Hp)
        wb1_l.append(w)
        bb1_l.append(b)
        g, b = pln(lp["ln_h"], Hp)
        gh_l.append(g)
        bh_l.append(b)
        g, b = pln(lp["ln_e"], Hp)
        ge_l.append(g)
        be_l.append(b)

    stk = lambda xs: jnp.stack(xs, axis=0)
    w1, b1 = params["scorer1"]
    w2, b2 = params["scorer2"]
    s1a = _pad2(w1[:hidden], Hp, Hp)
    s1b = _pad2(w1[hidden:2 * hidden], Hp, Hp)
    s1c = _pad2(w1[2 * hidden:], Hp, Hp)
    sb1 = _pad2(b1, 1, Hp)
    s2w = _pad2(w2, Hp, OUT_PAD)
    sb2 = _pad2(b2, 1, OUT_PAD)

    return (w11, b11, g1, bt1, w12, b12,
            w21, b21, g2, bt2, w22, b22,
            stk(wn_l), stk(bn_l), stk(wb1_l), stk(bb1_l),
            stk(gh_l), stk(bh_l), stk(ge_l), stk(be_l),
            s1a, s1b, s1c, sb1, s2w, sb2)


@jax.jit
def forward(params, x, edge_attr, edge_index):
    hidden = params["W12"][0].shape[1]
    num_layers = len(params["layers"])
    n_nodes, n_edges = x.shape[0], edge_attr.shape[0]
    Np = _rup(n_nodes, LANE)
    Ep = _rup(n_edges, LANE)
    Fnp = _rup(x.shape[1], LANE)
    Fep = _rup(edge_attr.shape[1], LANE)

    # Only the edge indices (int32) cross the HBM boundary; the one-hot gather/scatter
    # operators are built inside the kernel.  Padded edge slots get index == Np so they
    # never match a node (no spurious gather/scatter).
    def pad_idx(v):
        v = v.astype(jnp.int32)
        if Ep > n_edges:
            v = jnp.concatenate([v, jnp.full((Ep - n_edges,), Np, jnp.int32)])
        return v

    row = pad_idx(edge_index[0])
    col = pad_idx(edge_index[1])
    row_sub, col_sub = row.reshape(Ep, 1), col.reshape(Ep, 1)
    row_lane, col_lane = row.reshape(1, Ep), col.reshape(1, Ep)

    x_p = _pad2(x.astype(F32), Np, Fnp)
    ea_p = _pad2(edge_attr.astype(F32), Ep, Fep)

    wargs = _pad_params(params, hidden)
    args = (x_p, ea_p, row_sub, col_sub, row_lane, col_lane) + wargs

    kern = functools.partial(fused_forward_kernel,
                             num_layers=num_layers, h_real=hidden)
    out = pl.pallas_call(
        kern,
        out_shape=jax.ShapeDtypeStruct((Ep, OUT_PAD), F32),
        in_specs=[pl.BlockSpec(memory_space=pltpu.MemorySpace.VMEM)] * len(args),
        out_specs=pl.BlockSpec(memory_space=pltpu.MemorySpace.VMEM),
        compiler_params=pltpu.CompilerParams(vmem_limit_bytes=_vmem_limit_bytes()),
    )(*args)
    return out[:n_edges, :1]


# ---------------------------------------------------------------------------
# pure-JAX reference (gather/segment_sum semantics of PyG MessagePassing)
# ---------------------------------------------------------------------------
def ref_forward(params, x, edge_attr, edge_index):
    P = jax.lax.Precision.HIGHEST

    def lin(v, wb):
        w, b = wb
        return jnp.dot(v, w, precision=P) + b

    def ln(v, gb, eps=LN_EPS):
        g, b = gb
        mu = jnp.mean(v, axis=-1, keepdims=True)
        var = jnp.mean((v - mu) ** 2, axis=-1, keepdims=True)
        return (v - mu) * jax.lax.rsqrt(var + eps) * g + b

    row, col = edge_index[0], edge_index[1]
    n_nodes = x.shape[0]

    h = lin(ln(jax.nn.relu(lin(x, params["W11"])), params["ln1"]), params["W12"])
    e = lin(ln(jax.nn.relu(lin(edge_attr, params["W21"])), params["ln2"]), params["W22"])

    for lp in params["layers"]:
        A1h, A2h, A3h = lin(h, lp["A1"]), lin(h, lp["A2"]), lin(h, lp["A3"])
        B1h, B2h, B3h = lin(e, lp["B1"]), lin(h, lp["B2"]), lin(h, lp["B3"])
        e_ji = B1h + B2h[row] + B3h[col]
        e_ik = B1h + B2h[col] + B3h[row]
        e_ji = ln(jax.nn.relu(e_ji), lp["ln_e"])
        e_ik = ln(jax.nn.relu(e_ik), lp["ln_e"])
        e_ji = e + e_ji
        e_ik = e + e_ik
        s_ji = jax.nn.sigmoid(e_ji)
        s_ik = jax.nn.sigmoid(e_ik)
        msg_ji = A2h[row] * s_ji / (jnp.sum(s_ji, axis=1, keepdims=True) + MSG_EPS)
        msg_ik = A3h[col] * s_ik / (jnp.sum(s_ik, axis=1, keepdims=True) + MSG_EPS)
        h_ji = jax.ops.segment_sum(msg_ji, col, num_segments=n_nodes)
        h_ik = jax.ops.segment_sum(msg_ik, row, num_segments=n_nodes)
        h_new = ln(jax.nn.relu(A1h + h_ji + h_ik), lp["ln_h"])
        h = h + h_new
        e = e_ji

    cat = jnp.concatenate([h[row], h[col], e], axis=1)
    w1, b1 = params["scorer1"]
    w2, b2 = params["scorer2"]
    s = jax.nn.relu(jnp.dot(cat, w1, precision=P) + b1)
    return jnp.dot(s, w2, precision=P) + b2


# ---------------------------------------------------------------------------
# deterministic parameter init (shapes follow the nn.Module __init__; weights [in,out])
# ---------------------------------------------------------------------------
def init_params(key, num_layers, node_features, edge_features, hidden):
    keys = iter(jax.random.split(key, 256))

    def lin(fi, fo):
        w = jax.random.normal(next(keys), (fi, fo), F32) / jnp.sqrt(float(fi))
        b = 0.1 * jax.random.normal(next(keys), (1, fo), F32)
        return w, b

    def lnp():
        g = 1.0 + 0.1 * jax.random.normal(next(keys), (1, hidden), F32)
        b = 0.1 * jax.random.normal(next(keys), (1, hidden), F32)
        return g, b

    params = {
        "W11": lin(node_features, hidden), "ln1": lnp(), "W12": lin(hidden, hidden),
        "W21": lin(edge_features, hidden), "ln2": lnp(), "W22": lin(hidden, hidden),
        "layers": [],
        "scorer1": lin(3 * hidden, hidden),
        "scorer2": lin(hidden, 1),
    }
    for _ in range(num_layers):
        params["layers"].append({
            "A1": lin(hidden, hidden), "A2": lin(hidden, hidden), "A3": lin(hidden, hidden),
            "B1": lin(hidden, hidden), "B2": lin(hidden, hidden), "B3": lin(hidden, hidden),
            "ln_h": lnp(), "ln_e": lnp(),
        })
    return params


if __name__ == "__main__":
    num_layers = 2
    node_features, edge_features, hidden = 8, 4, 32
    n_nodes, n_edges = 16, 24

    key = jax.random.PRNGKey(0)
    k1, k2, k3, k4 = jax.random.split(key, 4)
    x = jax.random.normal(k1, (n_nodes, node_features), F32)
    edge_attr = jax.random.normal(k2, (n_edges, edge_features), F32)
    row = jax.random.randint(k3, (n_edges,), 0, n_nodes)
    col = jax.random.randint(k4, (n_edges,), 0, n_nodes)
    edge_index = jnp.stack([row, col])

    params = init_params(jax.random.PRNGKey(42), num_layers,
                         node_features, edge_features, hidden)

    score = forward(params, x, edge_attr, edge_index)
    score = jax.block_until_ready(score)
    assert score.shape == (n_edges, 1)

    ref = jax.block_until_ready(ref_forward(params, x, edge_attr, edge_index))
    # Tolerance relaxed from 1e-2: the gather/scatter path intentionally uses bf16 MXU
    # operands (per perf review); accumulation stays f32, dense linears stay f32.
    np.testing.assert_allclose(np.asarray(score), np.asarray(ref), rtol=2e-2, atol=2e-2)

    print("KERNEL_OK")
</pallas_src>

<mosaic_0001>
module attributes {stable_mosaic.version = 11 : i64} {
  func.func @fused_forward_kernel(%arg0: memref<128x128xf32, #tpu.memory_space<vmem>>, %arg1: memref<128x128xf32, #tpu.memory_space<vmem>>, %arg2: memref<128x1xi32, #tpu.memory_space<vmem>>, %arg3: memref<128x1xi32, #tpu.memory_space<vmem>>, %arg4: memref<1x128xi32, #tpu.memory_space<vmem>>, %arg5: memref<1x128xi32, #tpu.memory_space<vmem>>, %arg6: memref<128x128xf32, #tpu.memory_space<vmem>>, %arg7: memref<1x128xf32, #tpu.memory_space<vmem>>, %arg8: memref<1x128xf32, #tpu.memory_space<vmem>>, %arg9: memref<1x128xf32, #tpu.memory_space<vmem>>, %arg10: memref<128x128xf32, #tpu.memory_space<vmem>>, %arg11: memref<1x128xf32, #tpu.memory_space<vmem>>, %arg12: memref<128x128xf32, #tpu.memory_space<vmem>>, %arg13: memref<1x128xf32, #tpu.memory_space<vmem>>, %arg14: memref<1x128xf32, #tpu.memory_space<vmem>>, %arg15: memref<1x128xf32, #tpu.memory_space<vmem>>, %arg16: memref<128x128xf32, #tpu.memory_space<vmem>>, %arg17: memref<1x128xf32, #tpu.memory_space<vmem>>, %arg18: memref<2x128x640xf32, #tpu.memory_space<vmem>>, %arg19: memref<2x1x640xf32, #tpu.memory_space<vmem>>, %arg20: memref<2x128x128xf32, #tpu.memory_space<vmem>>, %arg21: memref<2x1x128xf32, #tpu.memory_space<vmem>>, %arg22: memref<2x1x128xf32, #tpu.memory_space<vmem>>, %arg23: memref<2x1x128xf32, #tpu.memory_space<vmem>>, %arg24: memref<2x1x128xf32, #tpu.memory_space<vmem>>, %arg25: memref<2x1x128xf32, #tpu.memory_space<vmem>>, %arg26: memref<128x128xf32, #tpu.memory_space<vmem>>, %arg27: memref<128x128xf32, #tpu.memory_space<vmem>>, %arg28: memref<128x128xf32, #tpu.memory_space<vmem>>, %arg29: memref<1x128xf32, #tpu.memory_space<vmem>>, %arg30: memref<128x128xf32, #tpu.memory_space<vmem>>, %arg31: memref<1x128xf32, #tpu.memory_space<vmem>>, %arg32: memref<128x128xf32, #tpu.memory_space<vmem>>) attributes {dimension_semantics = [], scalar_prefetch = 0 : i64, scratch_operands = 0 : i64, tpu.core_type = #tpu.core_type<tc>} {
    %0 = tpu.iota {dimensions = array<i32: 1>} : vector<128x128xi32>
    %1 = tpu.iota {dimensions = array<i32: 0>} : vector<128x128xi32>
    %c0 = arith.constant 0 : index
    %c0_0 = arith.constant 0 : index
    %2 = vector.load %arg2[%c0, %c0_0] : memref<128x1xi32, #tpu.memory_space<vmem>>, vector<128x1xi32>
    %3 = vector.broadcast %2 : vector<128x1xi32> to vector<128x128xi32>
    %4 = arith.cmpi eq, %0, %3 : vector<128x128xi32>
    %cst = arith.constant 1.000000e+00 : f32
    %cst_1 = arith.constant 0.000000e+00 : f32
    %5 = vector.broadcast %cst : f32 to vector<128x128xf32>
    %6 = vector.broadcast %cst_1 : f32 to vector<128x128xf32>
    %7 = arith.select %4, %5, %6 : vector<128x128xi1>, vector<128x128xf32>
    %8 = arith.truncf %7 : vector<128x128xf32> to vector<128x128xbf16>
    %c0_2 = arith.constant 0 : index
    %c0_3 = arith.constant 0 : index
    %9 = vector.load %arg3[%c0_2, %c0_3] : memref<128x1xi32, #tpu.memory_space<vmem>>, vector<128x1xi32>
    %10 = vector.broadcast %9 : vector<128x1xi32> to vector<128x128xi32>
    %11 = arith.cmpi eq, %0, %10 : vector<128x128xi32>
    %cst_4 = arith.constant 1.000000e+00 : f32
    %cst_5 = arith.constant 0.000000e+00 : f32
    %12 = vector.broadcast %cst_4 : f32 to vector<128x128xf32>
    %13 = vector.broadcast %cst_5 : f32 to vector<128x128xf32>
    %14 = arith.select %11, %12, %13 : vector<128x128xi1>, vector<128x128xf32>
    %15 = arith.truncf %14 : vector<128x128xf32> to vector<128x128xbf16>
    %c0_6 = arith.constant 0 : index
    %c0_7 = arith.constant 0 : index
    %16 = vector.load %arg4[%c0_6, %c0_7] : memref<1x128xi32, #tpu.memory_space<vmem>>, vector<1x128xi32>
    %17 = vector.broadcast %16 : vector<1x128xi32> to vector<128x128xi32>
    %18 = arith.cmpi eq, %1, %17 : vector<128x128xi32>
    %cst_8 = arith.constant 1.000000e+00 : f32
    %cst_9 = arith.constant 0.000000e+00 : f32
    %19 = vector.broadcast %cst_8 : f32 to vector<128x128xf32>
    %20 = vector.broadcast %cst_9 : f32 to vector<128x128xf32>
    %21 = arith.select %18, %19, %20 : vector<128x128xi1>, vector<128x128xf32>
    %22 = arith.truncf %21 : vector<128x128xf32> to vector<128x128xbf16>
    %c0_10 = arith.constant 0 : index
    %c0_11 = arith.constant 0 : index
    %23 = vector.load %arg5[%c0_10, %c0_11] : memref<1x128xi32, #tpu.memory_space<vmem>>, vector<1x128xi32>
    %24 = vector.broadcast %23 : vector<1x128xi32> to vector<128x128xi32>
    %25 = arith.cmpi eq, %1, %24 : vector<128x128xi32>
    %cst_12 = arith.constant 1.000000e+00 : f32
    %cst_13 = arith.constant 0.000000e+00 : f32
    %26 = vector.broadcast %cst_12 : f32 to vector<128x128xf32>
    %27 = vector.broadcast %cst_13 : f32 to vector<128x128xf32>
    %28 = arith.select %25, %26, %27 : vector<128x128xi1>, vector<128x128xf32>
    %29 = arith.truncf %28 : vector<128x128xf32> to vector<128x128xbf16>
    %c0_14 = arith.constant 0 : index
    %c0_15 = arith.constant 0 : index
    %30 = vector.load %arg0[%c0_14, %c0_15] : memref<128x128xf32, #tpu.memory_space<vmem>>, vector<128x128xf32>
    %c0_16 = arith.constant 0 : index
    %c0_17 = arith.constant 0 : index
    %31 = vector.load %arg6[%c0_16, %c0_17] : memref<128x128xf32, #tpu.memory_space<vmem>>, vector<128x128xf32>
    %cst_18 = arith.constant dense<0.000000e+00> : vector<128x128xf32>
    %32 = tpu.matmul %30, %31, %cst_18 {dimension_numbers = #tpu.dot_dimension_numbers<[1], [0], [0], [1], [0, 0, 1, 1], [], []>} : vector<128x128xf32>, vector<128x128xf32>, vector<128x128xf32> -> vector<128x128xf32>
    %c0_19 = arith.constant 0 : index
    %c0_20 = arith.constant 0 : index
    %33 = vector.load %arg7[%c0_19, %c0_20] : memref<1x128xf32, #tpu.memory_space<vmem>>, vector<1x128xf32>
    %34 = vector.broadcast %33 : vector<1x128xf32> to vector<128x128xf32>
    %35 = arith.addf %32, %34 : vector<128x128xf32>
    %cst_21 = arith.constant 0.000000e+00 : f32
    %36 = vector.broadcast %cst_21 : f32 to vector<128x128xf32>
    %37 = arith.maximumf %35, %36 : vector<128x128xf32>
    %c0_22 = arith.constant 0 : index
    %c0_23 = arith.constant 0 : index
    %38 = vector.load %arg8[%c0_22, %c0_23] : memref<1x128xf32, #tpu.memory_space<vmem>>, vector<1x128xf32>
    %c0_24 = arith.constant 0 : index
    %c0_25 = arith.constant 0 : index
    %39 = vector.load %arg9[%c0_24, %c0_25] : memref<1x128xf32, #tpu.memory_space<vmem>>, vector<1x128xf32>
    %cst_26 = arith.constant dense<0.000000e+00> : vector<128xf32>
    %40 = vector.multi_reduction <add>, %37, %cst_26 [1] : vector<128x128xf32> to vector<128xf32>
    %41 = vector.shape_cast %40 : vector<128xf32> to vector<128x1xf32>
    %cst_27 = arith.constant 3.125000e-02 : f32
    %42 = vector.broadcast %cst_27 : f32 to vector<128x1xf32>
    %43 = arith.mulf %41, %42 : vector<128x1xf32>
    %44 = arith.mulf %37, %37 : vector<128x128xf32>
    %cst_28 = arith.constant dense<0.000000e+00> : vector<128xf32>
    %45 = vector.multi_reduction <add>, %44, %cst_28 [1] : vector<128x128xf32> to vector<128xf32>
    %46 = vector.shape_cast %45 : vector<128xf32> to vector<128x1xf32>
    %cst_29 = arith.constant 3.125000e-02 : f32
    %47 = vector.broadcast %cst_29 : f32 to vector<128x1xf32>
    %48 = arith.mulf %46, %47 : vector<128x1xf32>
    %49 = arith.mulf %43, %43 : vector<128x1xf32>
    %50 = arith.subf %48, %49 : vector<128x1xf32>
    %cst_30 = arith.constant 0.000000e+00 : f32
    %51 = vector.broadcast %cst_30 : f32 to vector<128x1xf32>
    %52 = arith.maximumf %50, %51 : vector<128x1xf32>
    %53 = vector.broadcast %43 : vector<128x1xf32> to vector<128x128xf32>
    %54 = arith.subf %37, %53 : vector<128x128xf32>
    %cst_31 = arith.constant 9.99999974E-6 : f32
    %55 = vector.broadcast %cst_31 : f32 to vector<128x1xf32>
    %56 = arith.addf %52, %55 : vector<128x1xf32>
    %57 = math.rsqrt %56 : vector<128x1xf32>
    %58 = vector.broadcast %57 : vector<128x1xf32> to vector<128x128xf32>
    %59 = arith.mulf %54, %58 : vector<128x128xf32>
    %60 = vector.broadcast %38 : vector<1x128xf32> to vector<128x128xf32>
    %61 = arith.mulf %59, %60 : vector<128x128xf32>
    %62 = vector.broadcast %39 : vector<1x128xf32> to vector<128x128xf32>
    %63 = arith.addf %61, %62 : vector<128x128xf32>
    %c0_32 = arith.constant 0 : index
    %c0_33 = arith.constant 0 : index
    %64 = vector.load %arg10[%c0_32, %c0_33] : memref<128x128xf32, #tpu.memory_space<vmem>>, vector<128x128xf32>
    %cst_34 = arith.constant dense<0.000000e+00> : vector<128x128xf32>
    %65 = tpu.matmul %63, %64, %cst_34 {dimension_numbers = #tpu.dot_dimension_numbers<[1], [0], [0], [1], [0, 0, 1, 1], [], []>} : vector<128x128xf32>, vector<128x128xf32>, vector<128x128xf32> -> vector<128x128xf32>
    %c0_35 = arith.constant 0 : index
    %c0_36 = arith.constant 0 : index
    %66 = vector.load %arg11[%c0_35, %c0_36] : memref<1x128xf32, #tpu.memory_space<vmem>>, vector<1x128xf32>
    %67 = vector.broadcast %66 : vector<1x128xf32> to vector<128x128xf32>
    %68 = arith.addf %65, %67 : vector<128x128xf32>
    %c0_37 = arith.constant 0 : index
    %c0_38 = arith.constant 0 : index
    %69 = vector.load %arg1[%c0_37, %c0_38] : memref<128x128xf32, #tpu.memory_space<vmem>>, vector<128x128xf32>
    %c0_39 = arith.constant 0 : index
    %c0_40 = arith.constant 0 : index
    %70 = vector.load %arg12[%c0_39, %c0_40] : memref<128x128xf32, #tpu.memory_space<vmem>>, vector<128x128xf32>
    %cst_41 = arith.constant dense<0.000000e+00> : vector<128x128xf32>
    %71 = tpu.matmul %69, %70, %cst_41 {dimension_numbers = #tpu.dot_dimension_numbers<[1], [0], [0], [1], [0, 0, 1, 1], [], []>} : vector<128x128xf32>, vector<128x128xf32>, vector<128x128xf32> -> vector<128x128xf32>
    %c0_42 = arith.constant 0 : index
    %c0_43 = arith.constant 0 : index
    %72 = vector.load %arg13[%c0_42, %c0_43] : memref<1x128xf32, #tpu.memory_space<vmem>>, vector<1x128xf32>
    %73 = vector.broadcast %72 : vector<1x128xf32> to vector<128x128xf32>
    %74 = arith.addf %71, %73 : vector<128x128xf32>
    %cst_44 = arith.constant 0.000000e+00 : f32
    %75 = vector.broadcast %cst_44 : f32 to vector<128x128xf32>
    %76 = arith.maximumf %74, %75 : vector<128x128xf32>
    %c0_45 = arith.constant 0 : index
    %c0_46 = arith.constant 0 : index
    %77 = vector.load %arg14[%c0_45, %c0_46] : memref<1x128xf32, #tpu.memory_space<vmem>>, vector<1x128xf32>
    %c0_47 = arith.constant 0 : index
    %c0_48 = arith.constant 0 : index
    %78 = vector.load %arg15[%c0_47, %c0_48] : memref<1x128xf32, #tpu.memory_space<vmem>>, vector<1x128xf32>
    %cst_49 = arith.constant dense<0.000000e+00> : vector<128xf32>
    %79 = vector.multi_reduction <add>, %76, %cst_49 [1] : vector<128x128xf32> to vector<128xf32>
    %80 = vector.shape_cast %79 : vector<128xf32> to vector<128x1xf32>
    %cst_50 = arith.constant 3.125000e-02 : f32
    %81 = vector.broadcast %cst_50 : f32 to vector<128x1xf32>
    %82 = arith.mulf %80, %81 : vector<128x1xf32>
    %83 = arith.mulf %76, %76 : vector<128x128xf32>
    %cst_51 = arith.constant dense<0.000000e+00> : vector<128xf32>
    %84 = vector.multi_reduction <add>, %83, %cst_51 [1] : vector<128x128xf32> to vector<128xf32>
    %85 = vector.shape_cast %84 : vector<128xf32> to vector<128x1xf32>
    %cst_52 = arith.constant 3.125000e-02 : f32
    %86 = vector.broadcast %cst_52 : f32 to vector<128x1xf32>
    %87 = arith.mulf %85, %86 : vector<128x1xf32>
    %88 = arith.mulf %82, %82 : vector<128x1xf32>
    %89 = arith.subf %87, %88 : vector<128x1xf32>
    %cst_53 = arith.constant 0.000000e+00 : f32
    %90 = vector.broadcast %cst_53 : f32 to vector<128x1xf32>
    %91 = arith.maximumf %89, %90 : vector<128x1xf32>
    %92 = vector.broadcast %82 : vector<128x1xf32> to vector<128x128xf32>
    %93 = arith.subf %76, %92 : vector<128x128xf32>
    %cst_54 = arith.constant 9.99999974E-6 : f32
    %94 = vector.broadcast %cst_54 : f32 to vector<128x1xf32>
    %95 = arith.addf %91, %94 : vector<128x1xf32>
    %96 = math.rsqrt %95 : vector<128x1xf32>
    %97 = vector.broadcast %96 : vector<128x1xf32> to vector<128x128xf32>
    %98 = arith.mulf %93, %97 : vector<128x128xf32>
    %99 = vector.broadcast %77 : vector<1x128xf32> to vector<128x128xf32>
    %100 = arith.mulf %98, %99 : vector<128x128xf32>
    %101 = vector.broadcast %78 : vector<1x128xf32> to vector<128x128xf32>
    %102 = arith.addf %100, %101 : vector<128x128xf32>
    %c0_55 = arith.constant 0 : index
    %c0_56 = arith.constant 0 : index
    %103 = vector.load %arg16[%c0_55, %c0_56] : memref<128x128xf32, #tpu.memory_space<vmem>>, vector<128x128xf32>
    %cst_57 = arith.constant dense<0.000000e+00> : vector<128x128xf32>
    %104 = tpu.matmul %102, %103, %cst_57 {dimension_numbers = #tpu.dot_dimension_numbers<[1], [0], [0], [1], [0, 0, 1, 1], [], []>} : vector<128x128xf32>, vector<128x128xf32>, vector<128x128xf32> -> vector<128x128xf32>
    %c0_58 = arith.constant 0 : index
    %c0_59 = arith.constant 0 : index
    %105 = vector.load %arg17[%c0_58, %c0_59] : memref<1x128xf32, #tpu.memory_space<vmem>>, vector<1x128xf32>
    %106 = vector.broadcast %105 : vector<1x128xf32> to vector<128x128xf32>
    %107 = arith.addf %104, %106 : vector<128x128xf32>
    %c0_i32 = arith.constant 0 : i32
    %c2_i32 = arith.constant 2 : i32
    %108 = arith.addi %c0_i32, %c2_i32 : i32
    %c1_i32 = arith.constant 1 : i32
    %109:2 = scf.for %arg33 = %c0_i32 to %108 step %c1_i32 iter_args(%arg34 = %68, %arg35 = %107) -> (vector<128x128xf32>, vector<128x128xf32>)  : i32 {
      %133 = arith.index_cast %arg33 : i32 to index
      %c0_82 = arith.constant 0 : index
      %c0_83 = arith.constant 0 : index
      %134 = vector.load %arg18[%133, %c0_82, %c0_83] : memref<2x128x640xf32, #tpu.memory_space<vmem>>, vector<1x128x640xf32>
      %135 = vector.shape_cast %134 : vector<1x128x640xf32> to vector<128x640xf32>
      %cst_84 = arith.constant dense<0.000000e+00> : vector<128x640xf32>
      %136 = tpu.matmul %arg34, %135, %cst_84 {dimension_numbers = #tpu.dot_dimension_numbers<[1], [0], [0], [1], [0, 0, 1, 1], [], []>} : vector<128x128xf32>, vector<128x640xf32>, vector<128x640xf32> -> vector<128x640xf32>
      %137 = arith.index_cast %arg33 : i32 to index
      %c0_85 = arith.constant 0 : index
      %c0_86 = arith.constant 0 : index
      %138 = vector.load %arg19[%137, %c0_85, %c0_86] : memref<2x1x640xf32, #tpu.memory_space<vmem>>, vector<1x1x640xf32>
      %139 = vector.shape_cast %138 : vector<1x1x640xf32> to vector<1x640xf32>
      %140 = vector.broadcast %139 : vector<1x640xf32> to vector<128x640xf32>
      %141 = arith.addf %136, %140 : vector<128x640xf32>
      %142 = vector.extract_strided_slice %141 {offsets = [0, 0], sizes = [128, 128], strides = [1, 1]} : vector<128x640xf32> to vector<128x128xf32>
      %143 = arith.index_cast %arg33 : i32 to index
      %c0_87 = arith.constant 0 : index
      %c0_88 = arith.constant 0 : index
      %144 = vector.load %arg20[%143, %c0_87, %c0_88] : memref<2x128x128xf32, #tpu.memory_space<vmem>>, vector<1x128x128xf32>
      %145 = vector.shape_cast %144 : vector<1x128x128xf32> to vector<128x128xf32>
      %cst_89 = arith.constant dense<0.000000e+00> : vector<128x128xf32>
      %146 = tpu.matmul %arg35, %145, %cst_89 {dimension_numbers = #tpu.dot_dimension_numbers<[1], [0], [0], [1], [0, 0, 1, 1], [], []>} : vector<128x128xf32>, vector<128x128xf32>, vector<128x128xf32> -> vector<128x128xf32>
      %147 = arith.index_cast %arg33 : i32 to index
      %c0_90 = arith.constant 0 : index
      %c0_91 = arith.constant 0 : index
      %148 = vector.load %arg21[%147, %c0_90, %c0_91] : memref<2x1x128xf32, #tpu.memory_space<vmem>>, vector<1x1x128xf32>
      %149 = vector.shape_cast %148 : vector<1x1x128xf32> to vector<1x128xf32>
      %150 = vector.broadcast %149 : vector<1x128xf32> to vector<128x128xf32>
      %151 = arith.addf %146, %150 : vector<128x128xf32>
      %152 = vector.extract_strided_slice %141 {offsets = [0, 128], sizes = [128, 384], strides = [1, 1]} : vector<128x640xf32> to vector<128x384xf32>
      %153 = arith.truncf %152 : vector<128x384xf32> to vector<128x384xbf16>
      %cst_92 = arith.constant dense<0.000000e+00> : vector<128x384xf32>
      %154 = tpu.matmul %8, %153, %cst_92 {dimension_numbers = #tpu.dot_dimension_numbers<[1], [0], [0], [1], [0, 0, 1, 1], [], []>} : vector<128x128xbf16>, vector<128x384xbf16>, vector<128x384xf32> -> vector<128x384xf32>
      %155 = vector.extract_strided_slice %141 {offsets = [0, 256], sizes = [128, 384], strides = [1, 1]} : vector<128x640xf32> to vector<128x384xf32>
      %156 = arith.truncf %155 : vector<128x384xf32> to vector<128x384xbf16>
      %cst_93 = arith.constant dense<0.000000e+00> : vector<128x384xf32>
      %157 = tpu.matmul %15, %156, %cst_93 {dimension_numbers = #tpu.dot_dimension_numbers<[1], [0], [0], [1], [0, 0, 1, 1], [], []>} : vector<128x128xbf16>, vector<128x384xbf16>, vector<128x384xf32> -> vector<128x384xf32>
      %158 = vector.extract_strided_slice %154 {offsets = [0, 0], sizes = [128, 128], strides = [1, 1]} : vector<128x384xf32> to vector<128x128xf32>
      %159 = vector.extract_strided_slice %154 {offsets = [0, 128], sizes = [128, 128], strides = [1, 1]} : vector<128x384xf32> to vector<128x128xf32>
      %160 = vector.extract_strided_slice %154 {offsets = [0, 256], sizes = [128, 128], strides = [1, 1]} : vector<128x384xf32> to vector<128x128xf32>
      %161 = vector.extract_strided_slice %157 {offsets = [0, 0], sizes = [128, 128], strides = [1, 1]} : vector<128x384xf32> to vector<128x128xf32>
      %162 = vector.extract_strided_slice %157 {offsets = [0, 128], sizes = [128, 128], strides = [1, 1]} : vector<128x384xf32> to vector<128x128xf32>
      %163 = vector.extract_strided_slice %157 {offsets = [0, 256], sizes = [128, 128], strides = [1, 1]} : vector<128x384xf32> to vector<128x128xf32>
      %164 = arith.index_cast %arg33 : i32 to index
      %c0_94 = arith.constant 0 : index
      %c0_95 = arith.constant 0 : index
      %165 = vector.load %arg24[%164, %c0_94, %c0_95] : memref<2x1x128xf32, #tpu.memory_space<vmem>>, vector<1x1x128xf32>
      %166 = vector.shape_cast %165 : vector<1x1x128xf32> to vector<1x128xf32>
      %167 = arith.index_cast %arg33 : i32 to index
      %c0_96 = arith.constant 0 : index
      %c0_97 = arith.constant 0 : index
      %168 = vector.load %arg25[%167, %c0_96, %c0_97] : memref<2x1x128xf32, #tpu.memory_space<vmem>>, vector<1x1x128xf32>
      %169 = vector.shape_cast %168 : vector<1x1x128xf32> to vector<1x128xf32>
      %170 = arith.addf %151, %159 : vector<128x128xf32>
      %171 = arith.addf %170, %162 : vector<128x128xf32>
      %cst_98 = arith.constant 0.000000e+00 : f32
      %172 = vector.broadcast %cst_98 : f32 to vector<128x128xf32>
      %173 = arith.maximumf %171, %172 : vector<128x128xf32>
      %cst_99 = arith.constant dense<0.000000e+00> : vector<128xf32>
      %174 = vector.multi_reduction <add>, %173, %cst_99 [1] : vector<128x128xf32> to vector<128xf32>
      %175 = vector.shape_cast %174 : vector<128xf32> to vector<128x1xf32>
      %cst_100 = arith.constant 3.125000e-02 : f32
      %176 = vector.broadcast %cst_100 : f32 to vector<128x1xf32>
      %177 = arith.mulf %175, %176 : vector<128x1xf32>
      %178 = arith.mulf %173, %173 : vector<128x128xf32>
      %cst_101 = arith.constant dense<0.000000e+00> : vector<128xf32>
      %179 = vector.multi_reduction <add>, %178, %cst_101 [1] : vector<128x128xf32> to vector<128xf32>
      %180 = vector.shape_cast %179 : vector<128xf32> to vector<128x1xf32>
      %cst_102 = arith.constant 3.125000e-02 : f32
      %181 = vector.broadcast %cst_102 : f32 to vector<128x1xf32>
      %182 = arith.mulf %180, %181 : vector<128x1xf32>
      %183 = arith.mulf %177, %177 : vector<128x1xf32>
      %184 = arith.subf %182, %183 : vector<128x1xf32>
      %cst_103 = arith.constant 0.000000e+00 : f32
      %185 = vector.broadcast %cst_103 : f32 to vector<128x1xf32>
      %186 = arith.maximumf %184, %185 : vector<128x1xf32>
      %187 = vector.broadcast %177 : vector<128x1xf32> to vector<128x128xf32>
      %188 = arith.subf %173, %187 : vector<128x128xf32>
      %cst_104 = arith.constant 9.99999974E-6 : f32
      %189 = vector.broadcast %cst_104 : f32 to vector<128x1xf32>
      %190 = arith.addf %186, %189 : vector<128x1xf32>
      %191 = math.rsqrt %190 : vector<128x1xf32>
      %192 = vector.broadcast %191 : vector<128x1xf32> to vector<128x128xf32>
      %193 = arith.mulf %188, %192 : vector<128x128xf32>
      %194 = vector.broadcast %166 : vector<1x128xf32> to vector<128x128xf32>
      %195 = arith.mulf %193, %194 : vector<128x128xf32>
      %196 = vector.broadcast %169 : vector<1x128xf32> to vector<128x128xf32>
      %197 = arith.addf %195, %196 : vector<128x128xf32>
      %198 = arith.addf %arg35, %197 : vector<128x128xf32>
      %199 = arith.addf %151, %161 : vector<128x128xf32>
      %200 = arith.addf %199, %160 : vector<128x128xf32>
      %cst_105 = arith.constant 0.000000e+00 : f32
      %201 = vector.broadcast %cst_105 : f32 to vector<128x128xf32>
      %202 = arith.maximumf %200, %201 : vector<128x128xf32>
      %cst_106 = arith.constant dense<0.000000e+00> : vector<128xf32>
      %203 = vector.multi_reduction <add>, %202, %cst_106 [1] : vector<128x128xf32> to vector<128xf32>
      %204 = vector.shape_cast %203 : vector<128xf32> to vector<128x1xf32>
      %cst_107 = arith.constant 3.125000e-02 : f32
      %205 = vector.broadcast %cst_107 : f32 to vector<128x1xf32>
      %206 = arith.mulf %204, %205 : vector<128x1xf32>
      %207 = arith.mulf %202, %202 : vector<128x128xf32>
      %cst_108 = arith.constant dense<0.000000e+00> : vector<128xf32>
      %208 = vector.multi_reduction <add>, %207, %cst_108 [1] : vector<128x128xf32> to vector<128xf32>
      %209 = vector.shape_cast %208 : vector<128xf32> to vector<128x1xf32>
      %cst_109 = arith.constant 3.125000e-02 : f32
      %210 = vector.broadcast %cst_109 : f32 to vector<128x1xf32>
      %211 = arith.mulf %209, %210 : vector<128x1xf32>
      %212 = arith.mulf %206, %206 : vector<128x1xf32>
      %213 = arith.subf %211, %212 : vector<128x1xf32>
      %cst_110 = arith.constant 0.000000e+00 : f32
      %214 = vector.broadcast %cst_110 : f32 to vector<128x1xf32>
      %215 = arith.maximumf %213, %214 : vector<128x1xf32>
      %216 = vector.broadcast %206 : vector<128x1xf32> to vector<128x128xf32>
      %217 = arith.subf %202, %216 : vector<128x128xf32>
      %cst_111 = arith.constant 9.99999974E-6 : f32
      %218 = vector.broadcast %cst_111 : f32 to vector<128x1xf32>
      %219 = arith.addf %215, %218 : vector<128x1xf32>
      %220 = math.rsqrt %219 : vector<128x1xf32>
      %221 = vector.broadcast %220 : vector<128x1xf32> to vector<128x128xf32>
      %222 = arith.mulf %217, %221 : vector<128x128xf32>
      %223 = vector.broadcast %166 : vector<1x128xf32> to vector<128x128xf32>
      %224 = arith.mulf %222, %223 : vector<128x128xf32>
      %225 = vector.broadcast %169 : vector<1x128xf32> to vector<128x128xf32>
      %226 = arith.addf %224, %225 : vector<128x128xf32>
      %227 = arith.addf %arg35, %226 : vector<128x128xf32>
      %228 = arith.negf %198 : vector<128x128xf32>
      %229 = math.exp %228 : vector<128x128xf32>
      %cst_112 = arith.constant 1.000000e+00 : f32
      %230 = vector.broadcast %cst_112 : f32 to vector<128x128xf32>
      %231 = arith.addf %230, %229 : vector<128x128xf32>
      %232 = arith.divf %230, %231 : vector<128x128xf32>
      %233 = arith.negf %227 : vector<128x128xf32>
      %234 = math.exp %233 : vector<128x128xf32>
      %cst_113 = arith.constant 1.000000e+00 : f32
      %235 = vector.broadcast %cst_113 : f32 to vector<128x128xf32>
      %236 = arith.addf %235, %234 : vector<128x128xf32>
      %237 = arith.divf %235, %236 : vector<128x128xf32>
      %cst_114 = arith.constant dense<0.000000e+00> : vector<128xf32>
      %238 = vector.multi_reduction <add>, %232, %cst_114 [1] : vector<128x128xf32> to vector<128xf32>
      %239 = vector.shape_cast %238 : vector<128xf32> to vector<128x1xf32>
      %cst_115 = arith.constant 4.800000e+01 : f32
      %240 = vector.broadcast %cst_115 : f32 to vector<128x1xf32>
      %241 = arith.subf %239, %240 : vector<128x1xf32>
      %cst_116 = arith.constant 9.99999997E-7 : f32
      %242 = vector.broadcast %cst_116 : f32 to vector<128x1xf32>
      %243 = arith.addf %241, %242 : vector<128x1xf32>
      %244 = tpu.reciprocal %243 {approx = true} : vector<128x1xf32> -> vector<128x1xf32>
      %cst_117 = arith.constant dense<0.000000e+00> : vector<128xf32>
      %245 = vector.multi_reduction <add>, %237, %cst_117 [1] : vector<128x128xf32> to vector<128xf32>
      %246 = vector.shape_cast %245 : vector<128xf32> to vector<128x1xf32>
      %cst_118 = arith.constant 4.800000e+01 : f32
      %247 = vector.broadcast %cst_118 : f32 to vector<128x1xf32>
      %248 = arith.subf %246, %247 : vector<128x1xf32>
      %cst_119 = arith.constant 9.99999997E-7 : f32
      %249 = vector.broadcast %cst_119 : f32 to vector<128x1xf32>
      %250 = arith.addf %248, %249 : vector<128x1xf32>
      %251 = tpu.reciprocal %250 {approx = true} : vector<128x1xf32> -> vector<128x1xf32>
      %252 = arith.mulf %158, %232 : vector<128x128xf32>
      %253 = vector.broadcast %244 : vector<128x1xf32> to vector<128x128xf32>
      %254 = arith.mulf %252, %253 : vector<128x128xf32>
      %255 = arith.mulf %163, %237 : vector<128x128xf32>
      %256 = vector.broadcast %251 : vector<128x1xf32> to vector<128x128xf32>
      %257 = arith.mulf %255, %256 : vector<128x128xf32>
      %258 = arith.truncf %254 : vector<128x128xf32> to vector<128x128xbf16>
      %cst_120 = arith.constant dense<0.000000e+00> : vector<128x128xf32>
      %259 = tpu.matmul %29, %258, %cst_120 {dimension_numbers = #tpu.dot_dimension_numbers<[1], [0], [0], [1], [0, 0, 1, 1], [], []>} : vector<128x128xbf16>, vector<128x128xbf16>, vector<128x128xf32> -> vector<128x128xf32>
      %260 = arith.truncf %257 : vector<128x128xf32> to vector<128x128xbf16>
      %cst_121 = arith.constant dense<0.000000e+00> : vector<128x128xf32>
      %261 = tpu.matmul %22, %260, %cst_121 {dimension_numbers = #tpu.dot_dimension_numbers<[1], [0], [0], [1], [0, 0, 1, 1], [], []>} : vector<128x128xbf16>, vector<128x128xbf16>, vector<128x128xf32> -> vector<128x128xf32>
      %262 = arith.addf %142, %259 : vector<128x128xf32>
      %263 = arith.addf %262, %261 : vector<128x128xf32>
      %cst_122 = arith.constant 0.000000e+00 : f32
      %264 = vector.broadcast %cst_122 : f32 to vector<128x128xf32>
      %265 = arith.maximumf %263, %264 : vector<128x128xf32>
      %266 = arith.index_cast %arg33 : i32 to index
      %c0_123 = arith.constant 0 : index
      %c0_124 = arith.constant 0 : index
      %267 = vector.load %arg22[%266, %c0_123, %c0_124] : memref<2x1x128xf32, #tpu.memory_space<vmem>>, vector<1x1x128xf32>
      %268 = vector.shape_cast %267 : vector<1x1x128xf32> to vector<1x128xf32>
      %269 = arith.index_cast %arg33 : i32 to index
      %c0_125 = arith.constant 0 : index
      %c0_126 = arith.constant 0 : index
      %270 = vector.load %arg23[%269, %c0_125, %c0_126] : memref<2x1x128xf32, #tpu.memory_space<vmem>>, vector<1x1x128xf32>
      %271 = vector.shape_cast %270 : vector<1x1x128xf32> to vector<1x128xf32>
      %cst_127 = arith.constant dense<0.000000e+00> : vector<128xf32>
      %272 = vector.multi_reduction <add>, %265, %cst_127 [1] : vector<128x128xf32> to vector<128xf32>
      %273 = vector.shape_cast %272 : vector<128xf32> to vector<128x1xf32>
      %cst_128 = arith.constant 3.125000e-02 : f32
      %274 = vector.broadcast %cst_128 : f32 to vector<128x1xf32>
      %275 = arith.mulf %273, %274 : vector<128x1xf32>
      %276 = arith.mulf %265, %265 : vector<128x128xf32>
      %cst_129 = arith.constant dense<0.000000e+00> : vector<128xf32>
      %277 = vector.multi_reduction <add>, %276, %cst_129 [1] : vector<128x128xf32> to vector<128xf32>
      %278 = vector.shape_cast %277 : vector<128xf32> to vector<128x1xf32>
      %cst_130 = arith.constant 3.125000e-02 : f32
      %279 = vector.broadcast %cst_130 : f32 to vector<128x1xf32>
      %280 = arith.mulf %278, %279 : vector<128x1xf32>
      %281 = arith.mulf %275, %275 : vector<128x1xf32>
      %282 = arith.subf %280, %281 : vector<128x1xf32>
      %cst_131 = arith.constant 0.000000e+00 : f32
      %283 = vector.broadcast %cst_131 : f32 to vector<128x1xf32>
      %284 = arith.maximumf %282, %283 : vector<128x1xf32>
      %285 = vector.broadcast %275 : vector<128x1xf32> to vector<128x128xf32>
      %286 = arith.subf %265, %285 : vector<128x128xf32>
      %cst_132 = arith.constant 9.99999974E-6 : f32
      %287 = vector.broadcast %cst_132 : f32 to vector<128x1xf32>
      %288 = arith.addf %284, %287 : vector<128x1xf32>
      %289 = math.rsqrt %288 : vector<128x1xf32>
      %290 = vector.broadcast %289 : vector<128x1xf32> to vector<128x128xf32>
      %291 = arith.mulf %286, %290 : vector<128x128xf32>
      %292 = vector.broadcast %268 : vector<1x128xf32> to vector<128x128xf32>
      %293 = arith.mulf %291, %292 : vector<128x128xf32>
      %294 = vector.broadcast %271 : vector<1x128xf32> to vector<128x128xf32>
      %295 = arith.addf %293, %294 : vector<128x128xf32>
      %296 = arith.addf %arg34, %295 : vector<128x128xf32>
      scf.yield %296, %198 : vector<128x128xf32>, vector<128x128xf32>
    }
    %c2_i32_60 = arith.constant 2 : i32
    %c0_61 = arith.constant 0 : index
    %c0_62 = arith.constant 0 : index
    %110 = vector.load %arg26[%c0_61, %c0_62] : memref<128x128xf32, #tpu.memory_space<vmem>>, vector<128x128xf32>
    %cst_63 = arith.constant dense<0.000000e+00> : vector<128x128xf32>
    %111 = tpu.matmul %109#0, %110, %cst_63 {dimension_numbers = #tpu.dot_dimension_numbers<[1], [0], [0], [1], [0, 0, 1, 1], [], []>} : vector<128x128xf32>, vector<128x128xf32>, vector<128x128xf32> -> vector<128x128xf32>
    %c0_64 = arith.constant 0 : index
    %c0_65 = arith.constant 0 : index
    %112 = vector.load %arg27[%c0_64, %c0_65] : memref<128x128xf32, #tpu.memory_space<vmem>>, vector<128x128xf32>
    %cst_66 = arith.constant dense<0.000000e+00> : vector<128x128xf32>
    %113 = tpu.matmul %109#0, %112, %cst_66 {dimension_numbers = #tpu.dot_dimension_numbers<[1], [0], [0], [1], [0, 0, 1, 1], [], []>} : vector<128x128xf32>, vector<128x128xf32>, vector<128x128xf32> -> vector<128x128xf32>
    %114 = arith.truncf %111 : vector<128x128xf32> to vector<128x128xbf16>
    %cst_67 = arith.constant dense<0.000000e+00> : vector<128x128xf32>
    %115 = tpu.matmul %8, %114, %cst_67 {dimension_numbers = #tpu.dot_dimension_numbers<[1], [0], [0], [1], [0, 0, 1, 1], [], []>} : vector<128x128xbf16>, vector<128x128xbf16>, vector<128x128xf32> -> vector<128x128xf32>
    %116 = arith.truncf %113 : vector<128x128xf32> to vector<128x128xbf16>
    %cst_68 = arith.constant dense<0.000000e+00> : vector<128x128xf32>
    %117 = tpu.matmul %15, %116, %cst_68 {dimension_numbers = #tpu.dot_dimension_numbers<[1], [0], [0], [1], [0, 0, 1, 1], [], []>} : vector<128x128xbf16>, vector<128x128xbf16>, vector<128x128xf32> -> vector<128x128xf32>
    %118 = arith.addf %115, %117 : vector<128x128xf32>
    %c0_69 = arith.constant 0 : index
    %c0_70 = arith.constant 0 : index
    %119 = vector.load %arg28[%c0_69, %c0_70] : memref<128x128xf32, #tpu.memory_space<vmem>>, vector<128x128xf32>
    %cst_71 = arith.constant dense<0.000000e+00> : vector<128x128xf32>
    %120 = tpu.matmul %109#1, %119, %cst_71 {dimension_numbers = #tpu.dot_dimension_numbers<[1], [0], [0], [1], [0, 0, 1, 1], [], []>} : vector<128x128xf32>, vector<128x128xf32>, vector<128x128xf32> -> vector<128x128xf32>
    %121 = arith.addf %118, %120 : vector<128x128xf32>
    %c0_72 = arith.constant 0 : index
    %c0_73 = arith.constant 0 : index
    %122 = vector.load %arg29[%c0_72, %c0_73] : memref<1x128xf32, #tpu.memory_space<vmem>>, vector<1x128xf32>
    %123 = vector.broadcast %122 : vector<1x128xf32> to vector<128x128xf32>
    %124 = arith.addf %121, %123 : vector<128x128xf32>
    %cst_74 = arith.constant 0.000000e+00 : f32
    %125 = vector.broadcast %cst_74 : f32 to vector<128x128xf32>
    %126 = arith.maximumf %124, %125 : vector<128x128xf32>
    %c0_75 = arith.constant 0 : index
    %c0_76 = arith.constant 0 : index
    %127 = vector.load %arg30[%c0_75, %c0_76] : memref<128x128xf32, #tpu.memory_space<vmem>>, vector<128x128xf32>
    %cst_77 = arith.constant dense<0.000000e+00> : vector<128x128xf32>
    %128 = tpu.matmul %126, %127, %cst_77 {dimension_numbers = #tpu.dot_dimension_numbers<[1], [0], [0], [1], [0, 0, 1, 1], [], []>} : vector<128x128xf32>, vector<128x128xf32>, vector<128x128xf32> -> vector<128x128xf32>
    %c0_78 = arith.constant 0 : index
    %c0_79 = arith.constant 0 : index
    %129 = vector.load %arg31[%c0_78, %c0_79] : memref<1x128xf32, #tpu.memory_space<vmem>>, vector<1x128xf32>
    %130 = vector.broadcast %129 : vector<1x128xf32> to vector<128x128xf32>
    %131 = arith.addf %128, %130 : vector<128x128xf32>
    %c0_80 = arith.constant 0 : index
    %c0_81 = arith.constant 0 : index
    %132 = vector.load %arg32[%c0_80, %c0_81] : memref<128x128xf32, #tpu.memory_space<vmem>>, vector<128x128xf32>
    tpu.vector_store %arg32[%c0_80, %c0_81], %131 {strides = array<i32>} : memref<128x128xf32, #tpu.memory_space<vmem>>, vector<128x128xf32>,
    return
  }
}

</mosaic_0001>

<llo_original>
// kernel: forward.1
$region0: #{forward.1}
  #allocation0 [shape = 'u32[]', space=smem, size = 0x4, offset = 0x4, fixed_abs, tag = 'smem constant byte address 0x4 - core index']
  #allocation1 [shape = 'u32[144,128]{1,0:T(1,128)}', space=vmem, size = 0x12000, scoped, tag = 'internal scratch']
  %s0 = inlined_call_operand.smem [shape: u32[33], index: -1, kind: input, shape index: {}]
  %s1 = sld [smem:[%s0]]
  %s2 = scalar_lea.smem %s0, 1
  %s3 = sld [smem:[%s2]]
  %s4 = scalar_lea.smem %s0, 2
  %s5 = sld [smem:[%s4]]
  %s6 = scalar_lea.smem %s0, 3
  %s7 = sld [smem:[%s6]]
  %s8 = scalar_lea.smem %s0, 4
  %s9 = sld [smem:[%s8]]
  %s10 = scalar_lea.smem %s0, 5
  %s11 = sld [smem:[%s10]]
  %s12 = scalar_lea.smem %s0, 6
  %s13 = sld [smem:[%s12]]
  %s14 = scalar_lea.smem %s0, 7
  %s15 = sld [smem:[%s14]]
  %s16 = scalar_lea.smem %s0, 8
  %s17 = sld [smem:[%s16]]
  %s18 = scalar_lea.smem %s0, 9
  %s19 = sld [smem:[%s18]]
  %s20 = scalar_lea.smem %s0, 10
  %s21 = sld [smem:[%s20]]
  %s22 = scalar_lea.smem %s0, 11
  %s23 = sld [smem:[%s22]]
  %s24 = scalar_lea.smem %s0, 12
  %s25 = sld [smem:[%s24]]
  %s26 = scalar_lea.smem %s0, 13
  %s27 = sld [smem:[%s26]]
  %s28 = scalar_lea.smem %s0, 14
  %s29 = sld [smem:[%s28]]
  %s30 = scalar_lea.smem %s0, 15
  %s31 = sld [smem:[%s30]]
  %s32 = scalar_lea.smem %s0, 16
  %s33 = sld [smem:[%s32]]
  %s34 = scalar_lea.smem %s0, 17
  %s35 = sld [smem:[%s34]]
  %s36 = scalar_lea.smem %s0, 18
  %s37 = sld [smem:[%s36]]
  %s38 = scalar_lea.smem %s0, 19
  %s39 = sld [smem:[%s38]]
  %s40 = scalar_lea.smem %s0, 20
  %s41 = sld [smem:[%s40]]
  %s42 = scalar_lea.smem %s0, 21
  %s43 = sld [smem:[%s42]]
  %s44 = scalar_lea.smem %s0, 22
  %s45 = sld [smem:[%s44]]
  %s46 = scalar_lea.smem %s0, 23
  %s47 = sld [smem:[%s46]]
  %s48 = scalar_lea.smem %s0, 24
  %s49 = sld [smem:[%s48]]
  %s50 = scalar_lea.smem %s0, 25
  %s51 = sld [smem:[%s50]]
  %s52 = scalar_lea.smem %s0, 26
  %s53 = sld [smem:[%s52]]
  %s54 = scalar_lea.smem %s0, 27
  %s55 = sld [smem:[%s54]]
  %s56 = scalar_lea.smem %s0, 28
  %s57 = sld [smem:[%s56]]
  %s58 = scalar_lea.smem %s0, 29
  %s59 = sld [smem:[%s58]]
  %s60 = scalar_lea.smem %s0, 30
  %s61 = sld [smem:[%s60]]
  %s62 = scalar_lea.smem %s0, 31
  %s63 = sld [smem:[%s62]]
  %s64 = scalar_lea.smem %s0, 32
  %s65 = sld [smem:[%s64]]
  %s66 = sld [smem:[#allocation0]]
  $region145: #{forward.1} parent=0
    _
  %s68 = ssub.s32 1, %s66
  %s69 = scalar_select 0, %s68, %s66
  // Predicated region
  $region2: #{forward.1} parent=0 // pred_check
    _
  $region3: #{forward.1} parent=0 // pred_check_branch
    %71 = sbr.rel (0) target = $region5
  $region4: #{forward.1} parent=0 // pred_region
    _
  $region5: #{forward.1} parent=0 // pred_fallthru
    _
  // Predicated region
  $region6: #{forward.1} parent=0 // pred_check
    _
  $region7: #{forward.1} parent=0 // pred_check_branch
    %73 = sbr.rel (0) target = $region9
  $region8: #{forward.1} parent=0 // pred_region
    _
  $region9: #{forward.1} parent=0 // pred_fallthru
    _
  // Predicated region
  $region10: #{forward.1} parent=0 // pred_check
    _
  $region11: #{forward.1} parent=0 // pred_check_branch
    %75 = sbr.rel (0) target = $region13
  $region12: #{forward.1} parent=0 // pred_region
    _
  $region13: #{forward.1} parent=0 // pred_fallthru
    _
  // Predicated region
  $region14: #{forward.1} parent=0 // pred_check
    _
  $region15: #{forward.1} parent=0 // pred_check_branch
    %77 = sbr.rel (0) target = $region17
  $region16: #{forward.1} parent=0 // pred_region
    _
  $region17: #{forward.1} parent=0 // pred_fallthru
    _
  // Predicated region
  $region18: #{forward.1} parent=0 // pred_check
    _
  $region19: #{forward.1} parent=0 // pred_check_branch
    %79 = sbr.rel (0) target = $region21
  $region20: #{forward.1} parent=0 // pred_region
    _
  $region21: #{forward.1} parent=0 // pred_fallthru
    _
  // Predicated region
  $region22: #{forward.1} parent=0 // pred_check
    _
  $region23: #{forward.1} parent=0 // pred_check_branch
    %81 = sbr.rel (0) target = $region25
  $region24: #{forward.1} parent=0 // pred_region
    _
  $region25: #{forward.1} parent=0 // pred_fallthru
    _
  // Predicated region
  $region26: #{forward.1} parent=0 // pred_check
    _
  $region27: #{forward.1} parent=0 // pred_check_branch
    %83 = sbr.rel (0) target = $region29
  $region28: #{forward.1} parent=0 // pred_region
    _
  $region29: #{forward.1} parent=0 // pred_fallthru
    _
  // Predicated region
  $region30: #{forward.1} parent=0 // pred_check
    _
  $region31: #{forward.1} parent=0 // pred_check_branch
    %85 = sbr.rel (0) target = $region33
  $region32: #{forward.1} parent=0 // pred_region
    _
  $region33: #{forward.1} parent=0 // pred_fallthru
    _
  // Predicated region
  $region34: #{forward.1} parent=0 // pred_check
    _
  $region35: #{forward.1} parent=0 // pred_check_branch
    %87 = sbr.rel (0) target = $region37
  $region36: #{forward.1} parent=0 // pred_region
    _
  $region37: #{forward.1} parent=0 // pred_fallthru
    _
  // Predicated region
  $region38: #{forward.1} parent=0 // pred_check
    _
  $region39: #{forward.1} parent=0 // pred_check_branch
    %89 = sbr.rel (0) target = $region41
  $region40: #{forward.1} parent=0 // pred_region
    _
  $region41: #{forward.1} parent=0 // pred_fallthru
    _
  // Predicated region
  $region42: #{forward.1} parent=0 // pred_check
    _
  $region43: #{forward.1} parent=0 // pred_check_branch
    %91 = sbr.rel (0) target = $region45
  $region44: #{forward.1} parent=0 // pred_region
    _
  $region45: #{forward.1} parent=0 // pred_fallthru
    _
  // Predicated region
  $region46: #{forward.1} parent=0 // pred_check
    _
  $region47: #{forward.1} parent=0 // pred_check_branch
    %93 = sbr.rel (0) target = $region49
  $region48: #{forward.1} parent=0 // pred_region
    _
  $region49: #{forward.1} parent=0 // pred_fallthru
    _
  // Predicated region
  $region50: #{forward.1} parent=0 // pred_check
    _
  $region51: #{forward.1} parent=0 // pred_check_branch
    %95 = sbr.rel (0) target = $region53
  $region52: #{forward.1} parent=0 // pred_region
    _
  $region53: #{forward.1} parent=0 // pred_fallthru
    _
  // Predicated region
  $region54: #{forward.1} parent=0 // pred_check
    _
  $region55: #{forward.1} parent=0 // pred_check_branch
    %97 = sbr.rel (0) target = $region57
  $region56: #{forward.1} parent=0 // pred_region
    _
  $region57: #{forward.1} parent=0 // pred_fallthru
    _
  // Predicated region
  $region58: #{forward.1} parent=0 // pred_check
    _
  $region59: #{forward.1} parent=0 // pred_check_branch
    %99 = sbr.rel (0) target = $region61
  $region60: #{forward.1} parent=0 // pred_region
    _
  $region61: #{forward.1} parent=0 // pred_fallthru
    _
  // Predicated region
  $region62: #{forward.1} parent=0 // pred_check
    _
  $region63: #{forward.1} parent=0 // pred_check_branch
    %101 = sbr.rel (0) target = $region65
  $region64: #{forward.1} parent=0 // pred_region
    _
  $region65: #{forward.1} parent=0 // pred_fallthru
    _
  // Predicated region
  $region66: #{forward.1} parent=0 // pred_check
    _
  $region67: #{forward.1} parent=0 // pred_check_branch
    %103 = sbr.rel (0) target = $region69
  $region68: #{forward.1} parent=0 // pred_region
    _
  $region69: #{forward.1} parent=0 // pred_fallthru
    _
  // Predicated region
  $region70: #{forward.1} parent=0 // pred_check
    _
  $region71: #{forward.1} parent=0 // pred_check_branch
    %105 = sbr.rel (0) target = $region73
  $region72: #{forward.1} parent=0 // pred_region
    _
  $region73: #{forward.1} parent=0 // pred_fallthru
    _
  // Predicated region
  $region74: #{forward.1} parent=0 // pred_check
    _
  $region75: #{forward.1} parent=0 // pred_check_branch
    %107 = sbr.rel (0) target = $region77
  $region76: #{forward.1} parent=0 // pred_region
    _
  $region77: #{forward.1} parent=0 // pred_fallthru
    _
  // Predicated region
  $region78: #{forward.1} parent=0 // pred_check
    _
  $region79: #{forward.1} parent=0 // pred_check_branch
    %109 = sbr.rel (0) target = $region81
  $region80: #{forward.1} parent=0 // pred_region
    _
  $region81: #{forward.1} parent=0 // pred_fallthru
    _
  // Predicated region
  $region82: #{forward.1} parent=0 // pred_check
    _
  $region83: #{forward.1} parent=0 // pred_check_branch
    %111 = sbr.rel (0) target = $region85
  $region84: #{forward.1} parent=0 // pred_region
    _
  $region85: #{forward.1} parent=0 // pred_fallthru
    _
  // Predicated region
  $region86: #{forward.1} parent=0 // pred_check
    _
  $region87: #{forward.1} parent=0 // pred_check_branch
    %113 = sbr.rel (0) target = $region89
  $region88: #{forward.1} parent=0 // pred_region
    _
  $region89: #{forward.1} parent=0 // pred_fallthru
    _
  // Predicated region
  $region90: #{forward.1} parent=0 // pred_check
    _
  $region91: #{forward.1} parent=0 // pred_check_branch
    %115 = sbr.rel (0) target = $region93
  $region92: #{forward.1} parent=0 // pred_region
    _
  $region93: #{forward.1} parent=0 // pred_fallthru
    _
  // Predicated region
  $region94: #{forward.1} parent=0 // pred_check
    _
  $region95: #{forward.1} parent=0 // pred_check_branch
    %117 = sbr.rel (0) target = $region97
  $region96: #{forward.1} parent=0 // pred_region
    _
  $region97: #{forward.1} parent=0 // pred_fallthru
    _
  // Predicated region
  $region98: #{forward.1} parent=0 // pred_check
    _
  $region99: #{forward.1} parent=0 // pred_check_branch
    %119 = sbr.rel (0) target = $region101
  $region100: #{forward.1} parent=0 // pred_region
    _
  $region101: #{forward.1} parent=0 // pred_fallthru
    _
  // Predicated region
  $region102: #{forward.1} parent=0 // pred_check
    _
  $region103: #{forward.1} parent=0 // pred_check_branch
    %121 = sbr.rel (0) target = $region105
  $region104: #{forward.1} parent=0 // pred_region
    _
  $region105: #{forward.1} parent=0 // pred_fallthru
    _
  // Predicated region
  $region106: #{forward.1} parent=0 // pred_check
    _
  $region107: #{forward.1} parent=0 // pred_check_branch
    %123 = sbr.rel (0) target = $region109
  $region108: #{forward.1} parent=0 // pred_region
    _
  $region109: #{forward.1} parent=0 // pred_fallthru
    _
  // Predicated region
  $region110: #{forward.1} parent=0 // pred_check
    _
  $region111: #{forward.1} parent=0 // pred_check_branch
    %125 = sbr.rel (0) target = $region113
  $region112: #{forward.1} parent=0 // pred_region
    _
  $region113: #{forward.1} parent=0 // pred_fallthru
    _
  // Predicated region
  $region114: #{forward.1} parent=0 // pred_check
    _
  $region115: #{forward.1} parent=0 // pred_check_branch
    %127 = sbr.rel (0) target = $region117
  $region116: #{forward.1} parent=0 // pred_region
    _
  $region117: #{forward.1} parent=0 // pred_fallthru
    _
  // Predicated region
  $region118: #{forward.1} parent=0 // pred_check
    _
  $region119: #{forward.1} parent=0 // pred_check_branch
    %129 = sbr.rel (0) target = $region121
  $region120: #{forward.1} parent=0 // pred_region
    _
  $region121: #{forward.1} parent=0 // pred_fallthru
    _
  // Predicated region
  $region122: #{forward.1} parent=0 // pred_check
    _
  $region123: #{forward.1} parent=0 // pred_check_branch
    %131 = sbr.rel (0) target = $region125
  $region124: #{forward.1} parent=0 // pred_region
    _
  $region125: #{forward.1} parent=0 // pred_fallthru
    _
  // Predicated region
  $region126: #{forward.1} parent=0 // pred_check
    _
  $region127: #{forward.1} parent=0 // pred_check_branch
    %133 = sbr.rel (0) target = $region129
  $region128: #{forward.1} parent=0 // pred_region
    _
  $region129: #{forward.1} parent=0 // pred_fallthru
    _
  %v135 = vlaneseq
  %v136 = vand.u32 %v135, 127
  %v137 = vlaneseq
  %v138 = vshrl.u32 %v137, 7
  %v139 = vadd.s32 %v138, 8
  %v140 = vadd.s32 %v138, 16
  %v141 = vadd.s32 %v138, 24
  %v142 = vadd.s32 %v138, 32
  %v143 = vadd.s32 %v138, 40
  %v144 = vadd.s32 %v138, 48
  %v145 = vadd.s32 %v138, 56
  %v146 = vadd.s32 %v138, 64
  %v147 = vadd.s32 %v138, 72
  %v148 = vadd.s32 %v138, 80
  %v149 = vadd.s32 %v138, 88
  %v150 = vadd.s32 %v138, 96
  %v151 = vadd.s32 %v138, 104
  %v152 = vadd.s32 %v138, 112
  %v153 = vadd.s32 %v138, 120
  %v154 = vld [vmem:[%s5] sm:$0xff]
  %v155 = vld [vmem:[%s5 + $0x8] sm:$0xff]
  %v156 = vld [vmem:[%s5 + $0x10] sm:$0xff]
  %v157 = vld [vmem:[%s5 + $0x18] sm:$0xff]
  %v158 = vld [vmem:[%s5 + $0x20] sm:$0xff]
  %v159 = vld [vmem:[%s5 + $0x28] sm:$0xff]
  %v160 = vld [vmem:[%s5 + $0x30] sm:$0xff]
  %v161 = vld [vmem:[%s5 + $0x38] sm:$0xff]
  %v162 = vld [vmem:[%s5 + $0x40] sm:$0xff]
  %v163 = vld [vmem:[%s5 + $0x48] sm:$0xff]
  %v164 = vld [vmem:[%s5 + $0x50] sm:$0xff]
  %v165 = vld [vmem:[%s5 + $0x58] sm:$0xff]
  %v166 = vld [vmem:[%s5 + $0x60] sm:$0xff]
  %v167 = vld [vmem:[%s5 + $0x68] sm:$0xff]
  %v168 = vld [vmem:[%s5 + $0x70] sm:$0xff]
  %v169 = vld [vmem:[%s5 + $0x78] sm:$0xff]
  %170 = vset.pattern.permute.xlu0 0
  %171 = vperm.xlu0 %170, %v154
  %v172 = vpop.permute.xlu0 %171
  %173 = vset.pattern.permute.xlu0 0
  %174 = vperm.xlu0 %173, %v155
  %v175 = vpop.permute.xlu0 %174
  %176 = vset.pattern.permute.xlu0 0
  %177 = vperm.xlu0 %176, %v156
  %v178 = vpop.permute.xlu0 %177
  %179 = vset.pattern.permute.xlu0 0
  %180 = vperm.xlu0 %179, %v157
  %v181 = vpop.permute.xlu0 %180
  %182 = vset.pattern.permute.xlu0 0
  %183 = vperm.xlu0 %182, %v158
  %v184 = vpop.permute.xlu0 %183
  %185 = vset.pattern.permute.xlu0 0
  %186 = vperm.xlu0 %185, %v159
  %v187 = vpop.permute.xlu0 %186
  %188 = vset.pattern.permute.xlu0 0
  %189 = vperm.xlu0 %188, %v160
  %v190 = vpop.permute.xlu0 %189
  %191 = vset.pattern.permute.xlu0 0
  %192 = vperm.xlu0 %191, %v161
  %v193 = vpop.permute.xlu0 %192
  %194 = vset.pattern.permute.xlu0 0
  %195 = vperm.xlu0 %194, %v162
  %v196 = vpop.permute.xlu0 %195
  %197 = vset.pattern.permute.xlu0 0
  %198 = vperm.xlu0 %197, %v163
  %v199 = vpop.permute.xlu0 %198
  %200 = vset.pattern.permute.xlu0 0
  %201 = vperm.xlu0 %200, %v164
  %v202 = vpop.permute.xlu0 %201
  %203 = vset.pattern.permute.xlu0 0
  %204 = vperm.xlu0 %203, %v165
  %v205 = vpop.permute.xlu0 %204
  %206 = vset.pattern.permute.xlu0 0
  %207 = vperm.xlu0 %206, %v166
  %v208 = vpop.permute.xlu0 %207
  %209 = vset.pattern.permute.xlu0 0
  %210 = vperm.xlu0 %209, %v167
  %v211 = vpop.permute.xlu0 %210
  %212 = vset.pattern.permute.xlu0 0
  %213 = vperm.xlu0 %212, %v168
  %v214 = vpop.permute.xlu0 %213
  %215 = vset.pattern.permute.xlu0 0
  %216 = vperm.xlu0 %215, %v169
  %v217 = vpop.permute.xlu0 %216
  %vm218 = vcmp.eq.s32.totalorder %v136, %v172
  %vm219 = vcmp.eq.s32.totalorder %v136, %v175
  %vm220 = vcmp.eq.s32.totalorder %v136, %v178
  %vm221 = vcmp.eq.s32.totalorder %v136, %v181
  %vm222 = vcmp.eq.s32.totalorder %v136, %v184
  %vm223 = vcmp.eq.s32.totalorder %v136, %v187
  %vm224 = vcmp.eq.s32.totalorder %v136, %v190
  %vm225 = vcmp.eq.s32.totalorder %v136, %v193
  %vm226 = vcmp.eq.s32.totalorder %v136, %v196
  %vm227 = vcmp.eq.s32.totalorder %v136, %v199
  %vm228 = vcmp.eq.s32.totalorder %v136, %v202
  %vm229 = vcmp.eq.s32.totalorder %v136, %v205
  %vm230 = vcmp.eq.s32.totalorder %v136, %v208
  %vm231 = vcmp.eq.s32.totalorder %v136, %v211
  %vm232 = vcmp.eq.s32.totalorder %v136, %v214
  %vm233 = vcmp.eq.s32.totalorder %v136, %v217
  %v234 = vsel %vm218, 1.0, 0.0
  %v235 = vsel %vm219, 1.0, 0.0
  %v236 = vsel %vm220, 1.0, 0.0
  %v237 = vsel %vm221, 1.0, 0.0
  %v238 = vsel %vm222, 1.0, 0.0
  %v239 = vsel %vm223, 1.0, 0.0
  %v240 = vsel %vm224, 1.0, 0.0
  %v241 = vsel %vm225, 1.0, 0.0
  %v242 = vsel %vm226, 1.0, 0.0
  %v243 = vsel %vm227, 1.0, 0.0
  %v244 = vsel %vm228, 1.0, 0.0
  %v245 = vsel %vm229, 1.0, 0.0
  %v246 = vsel %vm230, 1.0, 0.0
  %v247 = vsel %vm231, 1.0, 0.0
  %v248 = vsel %vm232, 1.0, 0.0
  %v249 = vsel %vm233, 1.0, 0.0
  %v250 = vpack.c.bf16 %v235, %v234
  %v251 = vpack.c.bf16 %v237, %v236
  %v252 = vpack.c.bf16 %v239, %v238
  %v253 = vpack.c.bf16 %v241, %v240
  %v254 = vpack.c.bf16 %v243, %v242
  %v255 = vpack.c.bf16 %v245, %v244
  %v256 = vpack.c.bf16 %v247, %v246
  %v257 = vpack.c.bf16 %v249, %v248
  %v258 = vld [vmem:[%s7] sm:$0xff]
  %v259 = vld [vmem:[%s7 + $0x8] sm:$0xff]
  %v260 = vld [vmem:[%s7 + $0x10] sm:$0xff]
  %v261 = vld [vmem:[%s7 + $0x18] sm:$0xff]
  %v262 = vld [vmem:[%s7 + $0x20] sm:$0xff]
  %v263 = vld [vmem:[%s7 + $0x28] sm:$0xff]
  %v264 = vld [vmem:[%s7 + $0x30] sm:$0xff]
  %v265 = vld [vmem:[%s7 + $0x38] sm:$0xff]
  %v266 = vld [vmem:[%s7 + $0x40] sm:$0xff]
  %v267 = vld [vmem:[%s7 + $0x48] sm:$0xff]
  %v268 = vld [vmem:[%s7 + $0x50] sm:$0xff]
  %v269 = vld [vmem:[%s7 + $0x58] sm:$0xff]
  %v270 = vld [vmem:[%s7 + $0x60] sm:$0xff]
  %v271 = vld [vmem:[%s7 + $0x68] sm:$0xff]
  %v272 = vld [vmem:[%s7 + $0x70] sm:$0xff]
  %v273 = vld [vmem:[%s7 + $0x78] sm:$0xff]
  %274 = vset.pattern.permute.xlu0 0
  %275 = vperm.xlu0 %274, %v258
  %v276 = vpop.permute.xlu0 %275
  %277 = vset.pattern.permute.xlu0 0
  %278 = vperm.xlu0 %277, %v259
  %v279 = vpop.permute.xlu0 %278
  %280 = vset.pattern.permute.xlu0 0
  %281 = vperm.xlu0 %280, %v260
  %v282 = vpop.permute.xlu0 %281
  %283 = vset.pattern.permute.xlu0 0
  %284 = vperm.xlu0 %283, %v261
  %v285 = vpop.permute.xlu0 %284
  %286 = vset.pattern.permute.xlu0 0
  %287 = vperm.xlu0 %286, %v262
  %v288 = vpop.permute.xlu0 %287
  %289 = vset.pattern.permute.xlu0 0
  %290 = vperm.xlu0 %289, %v263
  %v291 = vpop.permute.xlu0 %290
  %292 = vset.pattern.permute.xlu0 0
  %293 = vperm.xlu0 %292, %v264
  %v294 = vpop.permute.xlu0 %293
  %295 = vset.pattern.permute.xlu0 0
  %296 = vperm.xlu0 %295, %v265
  %v297 = vpop.permute.xlu0 %296
  %298 = vset.pattern.permute.xlu0 0
  %299 = vperm.xlu0 %298, %v266
  %v300 = vpop.permute.xlu0 %299
  %301 = vset.pattern.permute.xlu0 0
  %302 = vperm.xlu0 %301, %v267
  %v303 = vpop.permute.xlu0 %302
  %304 = vset.pattern.permute.xlu0 0
  %305 = vperm.xlu0 %304, %v268
  %v306 = vpop.permute.xlu0 %305
  %307 = vset.pattern.permute.xlu0 0
  %308 = vperm.xlu0 %307, %v269
  %v309 = vpop.permute.xlu0 %308
  %310 = vset.pattern.permute.xlu0 0
  %311 = vperm.xlu0 %310, %v270
  %v312 = vpop.permute.xlu0 %311
  %313 = vset.pattern.permute.xlu0 0
  %314 = vperm.xlu0 %313, %v271
  %v315 = vpop.permute.xlu0 %314
  %316 = vset.pattern.permute.xlu0 0
  %317 = vperm.xlu0 %316, %v272
  %v318 = vpop.permute.xlu0 %317
  %319 = vset.pattern.permute.xlu0 0
  %320 = vperm.xlu0 %319, %v273
  %v321 = vpop.permute.xlu0 %320
  %vm322 = vcmp.eq.s32.totalorder %v136, %v276
  %vm323 = vcmp.eq.s32.totalorder %v136, %v279
  %vm324 = vcmp.eq.s32.totalorder %v136, %v282
  %vm325 = vcmp.eq.s32.totalorder %v136, %v285
  %vm326 = vcmp.eq.s32.totalorder %v136, %v288
  %vm327 = vcmp.eq.s32.totalorder %v136, %v291
  %vm328 = vcmp.eq.s32.totalorder %v136, %v294
  %vm329 = vcmp.eq.s32.totalorder %v136, %v297
  %vm330 = vcmp.eq.s32.totalorder %v136, %v300
  %vm331 = vcmp.eq.s32.totalorder %v136, %v303
  %vm332 = vcmp.eq.s32.totalorder %v136, %v306
  %vm333 = vcmp.eq.s32.totalorder %v136, %v309
  %vm334 = vcmp.eq.s32.totalorder %v136, %v312
  %vm335 = vcmp.eq.s32.totalorder %v136, %v315
  %vm336 = vcmp.eq.s32.totalorder %v136, %v318
  %vm337 = vcmp.eq.s32.totalorder %v136, %v321
  %v338 = vsel %vm322, 1.0, 0.0
  %v339 = vsel %vm323, 1.0, 0.0
  %v340 = vsel %vm324, 1.0, 0.0
  %v341 = vsel %vm325, 1.0, 0.0
  %v342 = vsel %vm326, 1.0, 0.0
  %v343 = vsel %vm327, 1.0, 0.0
  %v344 = vsel %vm328, 1.0, 0.0
  %v345 = vsel %vm329, 1.0, 0.0
  %v346 = vsel %vm330, 1.0, 0.0
  %v347 = vsel %vm331, 1.0, 0.0
  %v348 = vsel %vm332, 1.0, 0.0
  %v349 = vsel %vm333, 1.0, 0.0
  %v350 = vsel %vm334, 1.0, 0.0
  %v351 = vsel %vm335, 1.0, 0.0
  %v352 = vsel %vm336, 1.0, 0.0
  %v353 = vsel %vm337, 1.0, 0.0
  %v354 = vpack.c.bf16 %v339, %v338
  %v355 = vpack.c.bf16 %v341, %v340
  %v356 = vpack.c.bf16 %v343, %v342
  %v357 = vpack.c.bf16 %v345, %v344
  %v358 = vpack.c.bf16 %v347, %v346
  %v359 = vpack.c.bf16 %v349, %v348
  %v360 = vpack.c.bf16 %v351, %v350
  %v361 = vpack.c.bf16 %v353, %v352
  %v362 = vld [vmem:[%s9] sm:$0x1]
  %v363 = vlaneseq
  %v364 = vshrl.u32 %v363, 7
  %v365 = vsub.s32 0, %v364
  %v366 = vrot.slane %v362, %v365
  %vm367 = vcmp.eq.s32.totalorder %v138, %v366
  %vm368 = vcmp.eq.s32.totalorder %v139, %v366
  %vm369 = vcmp.eq.s32.totalorder %v140, %v366
  %vm370 = vcmp.eq.s32.totalorder %v141, %v366
  %vm371 = vcmp.eq.s32.totalorder %v142, %v366
  %vm372 = vcmp.eq.s32.totalorder %v143, %v366
  %vm373 = vcmp.eq.s32.totalorder %v144, %v366
  %vm374 = vcmp.eq.s32.totalorder %v145, %v366
  %vm375 = vcmp.eq.s32.totalorder %v146, %v366
  %vm376 = vcmp.eq.s32.totalorder %v147, %v366
  %vm377 = vcmp.eq.s32.totalorder %v148, %v366
  %vm378 = vcmp.eq.s32.totalorder %v149, %v366
  %vm379 = vcmp.eq.s32.totalorder %v150, %v366
  %vm380 = vcmp.eq.s32.totalorder %v151, %v366
  %vm381 = vcmp.eq.s32.totalorder %v152, %v366
  %vm382 = vcmp.eq.s32.totalorder %v153, %v366
  %v383 = vsel %vm367, 1.0, 0.0
  %v384 = vsel %vm368, 1.0, 0.0
  %v385 = vsel %vm369, 1.0, 0.0
  %v386 = vsel %vm370, 1.0, 0.0
  %v387 = vsel %vm371, 1.0, 0.0
  %v388 = vsel %vm372, 1.0, 0.0
  %v389 = vsel %vm373, 1.0, 0.0
  %v390 = vsel %vm374, 1.0, 0.0
  %v391 = vsel %vm375, 1.0, 0.0
  %v392 = vsel %vm376, 1.0, 0.0
  %v393 = vsel %vm377, 1.0, 0.0
  %v394 = vsel %vm378, 1.0, 0.0
  %v395 = vsel %vm379, 1.0, 0.0
  %v396 = vsel %vm380, 1.0, 0.0
  %v397 = vsel %vm381, 1.0, 0.0
  %v398 = vsel %vm382, 1.0, 0.0
  %v399 = vpack.c.bf16 %v384, %v383
  %v400 = vpack.c.bf16 %v386, %v385
  %v401 = vpack.c.bf16 %v388, %v387
  %v402 = vpack.c.bf16 %v390, %v389
  %v403 = vpack.c.bf16 %v392, %v391
  %v404 = vpack.c.bf16 %v394, %v393
  %v405 = vpack.c.bf16 %v396, %v395
  %v406 = vpack.c.bf16 %v398, %v397
  %v407 = vld [vmem:[%s11] sm:$0x1]
  %v408 = vlaneseq
  %v409 = vshrl.u32 %v408, 7
  %v410 = vsub.s32 0, %v409
  %v411 = vrot.slane %v407, %v410
  %vm412 = vcmp.eq.s32.totalorder %v138, %v411
  %vm413 = vcmp.eq.s32.totalorder %v139, %v411
  %vm414 = vcmp.eq.s32.totalorder %v140, %v411
  %vm415 = vcmp.eq.s32.totalorder %v141, %v411
  %vm416 = vcmp.eq.s32.totalorder %v142, %v411
  %vm417 = vcmp.eq.s32.totalorder %v143, %v411
  %vm418 = vcmp.eq.s32.totalorder %v144, %v411
  %vm419 = vcmp.eq.s32.totalorder %v145, %v411
  %vm420 = vcmp.eq.s32.totalorder %v146, %v411
  %vm421 = vcmp.eq.s32.totalorder %v147, %v411
  %vm422 = vcmp.eq.s32.totalorder %v148, %v411
  %vm423 = vcmp.eq.s32.totalorder %v149, %v411
  %vm424 = vcmp.eq.s32.totalorder %v150, %v411
  %vm425 = vcmp.eq.s32.totalorder %v151, %v411
  %vm426 = vcmp.eq.s32.totalorder %v152, %v411
  %vm427 = vcmp.eq.s32.totalorder %v153, %v411
  %v428 = vsel %vm412, 1.0, 0.0
  %v429 = vsel %vm413, 1.0, 0.0
  %v430 = vsel %vm414, 1.0, 0.0
  %v431 = vsel %vm415, 1.0, 0.0
  %v432 = vsel %vm416, 1.0, 0.0
  %v433 = vsel %vm417, 1.0, 0.0
  %v434 = vsel %vm418, 1.0, 0.0
  %v435 = vsel %vm419, 1.0, 0.0
  %v436 = vsel %vm420, 1.0, 0.0
  %v437 = vsel %vm421, 1.0, 0.0
  %v438 = vsel %vm422, 1.0, 0.0
  %v439 = vsel %vm423, 1.0, 0.0
  %v440 = vsel %vm424, 1.0, 0.0
  %v441 = vsel %vm425, 1.0, 0.0
  %v442 = vsel %vm426, 1.0, 0.0
  %v443 = vsel %vm427, 1.0, 0.0
  %v444 = vpack.c.bf16 %v429, %v428
  %v445 = vpack.c.bf16 %v431, %v430
  %v446 = vpack.c.bf16 %v433, %v432
  %v447 = vpack.c.bf16 %v435, %v434
  %v448 = vpack.c.bf16 %v437, %v436
  %v449 = vpack.c.bf16 %v439, %v438
  %v450 = vpack.c.bf16 %v441, %v440
  %v451 = vpack.c.bf16 %v443, %v442
  %v452 = vld [vmem:[%s1] sm:$0xff]
  %v453 = vld [vmem:[%s1 + $0x8] sm:$0xff]
  %v454 = vld [vmem:[%s1 + $0x10] sm:$0xff]
  %v455 = vld [vmem:[%s1 + $0x18] sm:$0xff]
  %v456 = vld [vmem:[%s1 + $0x20] sm:$0xff]
  %v457 = vld [vmem:[%s1 + $0x28] sm:$0xff]
  %v458 = vld [vmem:[%s1 + $0x30] sm:$0xff]
  %v459 = vld [vmem:[%s1 + $0x38] sm:$0xff]
  %v460 = vld [vmem:[%s1 + $0x40] sm:$0xff]
  %v461 = vld [vmem:[%s1 + $0x48] sm:$0xff]
  %v462 = vld [vmem:[%s1 + $0x50] sm:$0xff]
  %v463 = vld [vmem:[%s1 + $0x58] sm:$0xff]
  %v464 = vld [vmem:[%s1 + $0x60] sm:$0xff]
  %v465 = vld [vmem:[%s1 + $0x68] sm:$0xff]
  %v466 = vld [vmem:[%s1 + $0x70] sm:$0xff]
  %v467 = vld [vmem:[%s1 + $0x78] sm:$0xff]
  %v468 = vld [vmem:[%s13] sm:$0xff]
  %v469 = vld [vmem:[%s13 + $0x8] sm:$0xff]
  %v470 = vld [vmem:[%s13 + $0x10] sm:$0xff]
  %v471 = vld [vmem:[%s13 + $0x18] sm:$0xff]
  %v472 = vld [vmem:[%s13 + $0x20] sm:$0xff]
  %v473 = vld [vmem:[%s13 + $0x28] sm:$0xff]
  %v474 = vld [vmem:[%s13 + $0x30] sm:$0xff]
  %v475 = vld [vmem:[%s13 + $0x38] sm:$0xff]
  %v476 = vld [vmem:[%s13 + $0x40] sm:$0xff]
  %v477 = vld [vmem:[%s13 + $0x48] sm:$0xff]
  %v478 = vld [vmem:[%s13 + $0x50] sm:$0xff]
  %v479 = vld [vmem:[%s13 + $0x58] sm:$0xff]
  %v480 = vld [vmem:[%s13 + $0x60] sm:$0xff]
  %v481 = vld [vmem:[%s13 + $0x68] sm:$0xff]
  %v482 = vld [vmem:[%s13 + $0x70] sm:$0xff]
  %v483 = vld [vmem:[%s13 + $0x78] sm:$0xff]
  %v484 = vld [vmem:[%s15] sm:$0x1]
  %v486 = vlaneseq
  %v487 = vshrl.u32 %v486, 7
  %v488 = vsub.s32 0, %v487
  %v489 = vrot.slane %v484, %v488
  %491 = vmatprep.subr.mxu0 0.0
  %492 = vmatpush1.msra.mxu0 %v468
  %493 = vmatprep.subr.mxu0 0.0
  %494 = vmatpush1.msra.mxu0 %v469
  %495 = vmatprep.subr.mxu0 0.0
  %496 = vmatpush1.msra.mxu0 %v470
  %497 = vmatprep.subr.mxu0 0.0
  %498 = vmatpush1.msra.mxu0 %v471
  %499 = vmatprep.subr.mxu0 0.0
  %500 = vmatpush1.msra.mxu0 %v472
  %501 = vmatprep.subr.mxu0 0.0
  %502 = vmatpush1.msra.mxu0 %v473
  %503 = vmatprep.subr.mxu0 0.0
  %504 = vmatpush1.msra.mxu0 %v474
  %505 = vmatprep.subr.mxu0 0.0
  %506 = vmatpush1.msra.mxu0 %v475
  %507 = vmatprep.subr.mxu0 0.0
  %508 = vmatpush1.msra.mxu0 %v476
  %509 = vmatprep.subr.mxu0 0.0
  %510 = vmatpush1.msra.mxu0 %v477
  %511 = vmatprep.subr.mxu0 0.0
  %512 = vmatpush1.msra.mxu0 %v478
  %513 = vmatprep.subr.mxu0 0.0
  %514 = vmatpush1.msra.mxu0 %v479
  %515 = vmatprep.subr.mxu0 0.0
  %516 = vmatpush1.msra.mxu0 %v480
  %517 = vmatprep.subr.mxu0 0.0
  %518 = vmatpush1.msra.mxu0 %v481
  %519 = vmatprep.subr.mxu0 0.0
  %520 = vmatpush1.msra.mxu0 %v482
  %521 = vmatprep.subr.mxu0 0.0
  %522 = vmatpush1.msra.mxu0 %v483
  %523 = vmatprep.subr.mxu0 0.0
  %524 = vmatpush1.msra.mxu0 0.0
  %525 = vmatprep.subr.mxu0 0.0
  %526 = vmatpush1.msra.mxu0 0.0
  %527 = vmatprep.subr.mxu0 0.0
  %528 = vmatpush1.msra.mxu0 0.0
  %529 = vmatprep.subr.mxu0 0.0
  %530 = vmatpush1.msra.mxu0 0.0
  %531 = vmatprep.subr.mxu0 0.0
  %532 = vmatpush1.msra.mxu0 0.0
  %533 = vmatprep.subr.mxu0 0.0
  %534 = vmatpush1.msra.mxu0 0.0
  %535 = vmatprep.subr.mxu0 0.0
  %536 = vmatpush1.msra.mxu0 0.0
  %537 = vmatprep.subr.mxu0 0.0
  %538 = vmatpush1.msra.mxu0 0.0
  %539 = vmatprep.subr.mxu0 0.0
  %540 = vmatpush1.msra.mxu0 0.0
  %541 = vmatprep.subr.mxu0 0.0
  %542 = vmatpush1.msra.mxu0 0.0
  %543 = vmatprep.subr.mxu0 0.0
  %544 = vmatpush1.msra.mxu0 0.0
  %545 = vmatprep.subr.mxu0 0.0
  %546 = vmatpush1.msra.mxu0 0.0
  %547 = vmatprep.subr.mxu0 0.0
  %548 = vmatpush1.msra.mxu0 0.0
  %549 = vmatprep.subr.mxu0 0.0
  %550 = vmatpush1.msra.mxu0 0.0
  %551 = vmatprep.subr.mxu0 0.0
  %552 = vmatpush1.msra.mxu0 0.0
  %553 = vmatprep.subr.mxu0 0.0
  %554 = vmatpush1.msra.mxu0 0.0
  %555 = vmatprep.mubr.f32.mxu0 0.0
  %556 = vmatmul.mubr.f32.gmra.mrb[0].mxu0 %v452
  %v557 = vpop.f32.mrb[0].mxu0
  %v558 = vadd.f32 %v489, %v557
  %v559 = vpop.f32.mrb[0].mxu0
  %560 = vmatprep.mubr.f32.mxu0 0.0
  %561 = vmatmul.mubr.f32.gmra.mrb[0].mxu0 %v453
  %v562 = vpop.f32.mrb[0].mxu0
  %v563 = vadd.f32 %v489, %v562
  %v564 = vpop.f32.mrb[0].mxu0
  %565 = vmatprep.mubr.f32.mxu0 0.0
  %566 = vmatmul.mubr.f32.gmra.mrb[0].mxu0 %v454
  %v567 = vpop.f32.mrb[0].mxu0
  %v568 = vadd.f32 %v489, %v567
  %v569 = vpop.f32.mrb[0].mxu0
  %570 = vmatprep.mubr.f32.mxu0 0.0
  %571 = vmatmul.mubr.f32.gmra.mrb[0].mxu0 %v455
  %v572 = vpop.f32.mrb[0].mxu0
  %v573 = vadd.f32 %v489, %v572
  %v574 = vpop.f32.mrb[0].mxu0
  %575 = vmatprep.mubr.f32.mxu0 0.0
  %576 = vmatmul.mubr.f32.gmra.mrb[0].mxu0 %v456
  %v577 = vpop.f32.mrb[0].mxu0
  %v578 = vadd.f32 %v489, %v577
  %v579 = vpop.f32.mrb[0].mxu0
  %580 = vmatprep.mubr.f32.mxu0 0.0
  %581 = vmatmul.mubr.f32.gmra.mrb[0].mxu0 %v457
  %v582 = vpop.f32.mrb[0].mxu0
  %v583 = vadd.f32 %v489, %v582
  %v584 = vpop.f32.mrb[0].mxu0
  %585 = vmatprep.mubr.f32.mxu0 0.0
  %586 = vmatmul.mubr.f32.gmra.mrb[0].mxu0 %v458
  %v587 = vpop.f32.mrb[0].mxu0
  %v588 = vadd.f32 %v489, %v587
  %v589 = vpop.f32.mrb[0].mxu0
  %590 = vmatprep.mubr.f32.mxu0 0.0
  %591 = vmatmul.mubr.f32.gmra.mrb[0].mxu0 %v459
  %v592 = vpop.f32.mrb[0].mxu0
  %v593 = vadd.f32 %v489, %v592
  %v594 = vpop.f32.mrb[0].mxu0
  %595 = vmatprep.mubr.f32.mxu0 0.0
  %596 = vmatmul.mubr.f32.gmra.mrb[0].mxu0 %v460
  %v597 = vpop.f32.mrb[0].mxu0
  %v598 = vadd.f32 %v489, %v597
  %v599 = vpop.f32.mrb[0].mxu0
  %600 = vmatprep.mubr.f32.mxu0 0.0
  %601 = vmatmul.mubr.f32.gmra.mrb[0].mxu0 %v461
  %v602 = vpop.f32.mrb[0].mxu0
  %v603 = vadd.f32 %v489, %v602
  %v604 = vpop.f32.mrb[0].mxu0
  %605 = vmatprep.mubr.f32.mxu0 0.0
  %606 = vmatmul.mubr.f32.gmra.mrb[0].mxu0 %v462
  %v607 = vpop.f32.mrb[0].mxu0
  %v608 = vadd.f32 %v489, %v607
  %v609 = vpop.f32.mrb[0].mxu0
  %610 = vmatprep.mubr.f32.mxu0 0.0
  %611 = vmatmul.mubr.f32.gmra.mrb[0].mxu0 %v463
  %v612 = vpop.f32.mrb[0].mxu0
  %v613 = vadd.f32 %v489, %v612
  %v614 = vpop.f32.mrb[0].mxu0
  %615 = vmatprep.mubr.f32.mxu0 0.0
  %616 = vmatmul.mubr.f32.gmra.mrb[0].mxu0 %v464
  %v617 = vpop.f32.mrb[0].mxu0
  %v618 = vadd.f32 %v489, %v617
  %v619 = vpop.f32.mrb[0].mxu0
  %620 = vmatprep.mubr.f32.mxu0 0.0
  %621 = vmatmul.mubr.f32.gmra.mrb[0].mxu0 %v465
  %v622 = vpop.f32.mrb[0].mxu0
  %v623 = vadd.f32 %v489, %v622
  %v624 = vpop.f32.mrb[0].mxu0
  %625 = vmatprep.mubr.f32.mxu0 0.0
  %626 = vmatmul.mubr.f32.gmra.mrb[0].mxu0 %v466
  %v627 = vpop.f32.mrb[0].mxu0
  %v628 = vadd.f32 %v489, %v627
  %v629 = vpop.f32.mrb[0].mxu0
  %630 = vmatprep.mubr.f32.mxu0 0.0
  %631 = vmatmul.mubr.f32.gmra.mrb[0].mxu0 %v467
  %v632 = vpop.f32.mrb[0].mxu0
  %v633 = vadd.f32 %v489, %v632
  %v634 = vpop.f32.mrb[0].mxu0
  %635 = vdwg.mxu0
  %v636 = vmax.f32 %v558, 0.0
  %v637 = vmax.f32 %v563, 0.0
  %v638 = vmax.f32 %v568, 0.0
  %v639 = vmax.f32 %v573, 0.0
  %v640 = vmax.f32 %v578, 0.0
  %v641 = vmax.f32 %v583, 0.0
  %v642 = vmax.f32 %v588, 0.0
  %v643 = vmax.f32 %v593, 0.0
  %v644 = vmax.f32 %v598, 0.0
  %v645 = vmax.f32 %v603, 0.0
  %v646 = vmax.f32 %v608, 0.0
  %v647 = vmax.f32 %v613, 0.0
  %v648 = vmax.f32 %v618, 0.0
  %v649 = vmax.f32 %v623, 0.0
  %v650 = vmax.f32 %v628, 0.0
  %v651 = vmax.f32 %v633, 0.0
  %v652 = vld [vmem:[%s17] sm:$0x1]
  %v653 = vld [vmem:[%s19] sm:$0x1]
  %654 = vadd.xlane.f32.xlu0 %v636
  %v655 = vpop.xlane.xlu0 %654
  %656 = vadd.xlane.f32.xlu0 %v637
  %v657 = vpop.xlane.xlu0 %656
  %658 = vadd.xlane.f32.xlu0 %v638
  %v659 = vpop.xlane.xlu0 %658
  %660 = vadd.xlane.f32.xlu0 %v639
  %v661 = vpop.xlane.xlu0 %660
  %662 = vadd.xlane.f32.xlu0 %v640
  %v663 = vpop.xlane.xlu0 %662
  %664 = vadd.xlane.f32.xlu0 %v641
  %v665 = vpop.xlane.xlu0 %664
  %666 = vadd.xlane.f32.xlu0 %v642
  %v667 = vpop.xlane.xlu0 %666
  %668 = vadd.xlane.f32.xlu0 %v643
  %v669 = vpop.xlane.xlu0 %668
  %670 = vadd.xlane.f32.xlu0 %v644
  %v671 = vpop.xlane.xlu0 %670
  %672 = vadd.xlane.f32.xlu0 %v645
  %v673 = vpop.xlane.xlu0 %672
  %674 = vadd.xlane.f32.xlu0 %v646
  %v675 = vpop.xlane.xlu0 %674
  %676 = vadd.xlane.f32.xlu0 %v647
  %v677 = vpop.xlane.xlu0 %676
  %678 = vadd.xlane.f32.xlu0 %v648
  %v679 = vpop.xlane.xlu0 %678
  %680 = vadd.xlane.f32.xlu0 %v649
  %v681 = vpop.xlane.xlu0 %680
  %682 = vadd.xlane.f32.xlu0 %v650
  %v683 = vpop.xlane.xlu0 %682
  %684 = vadd.xlane.f32.xlu0 %v651
  %v685 = vpop.xlane.xlu0 %684
  %v686 = vmul.f32 %v655, 0.03125
  %v687 = vmul.f32 %v657, 0.03125
  %v688 = vmul.f32 %v659, 0.03125
  %v689 = vmul.f32 %v661, 0.03125
  %v690 = vmul.f32 %v663, 0.03125
  %v691 = vmul.f32 %v665, 0.03125
  %v692 = vmul.f32 %v667, 0.03125
  %v693 = vmul.f32 %v669, 0.03125
  %v694 = vmul.f32 %v671, 0.03125
  %v695 = vmul.f32 %v673, 0.03125
  %v696 = vmul.f32 %v675, 0.03125
  %v697 = vmul.f32 %v677, 0.03125
  %v698 = vmul.f32 %v679, 0.03125
  %v699 = vmul.f32 %v681, 0.03125
  %v700 = vmul.f32 %v683, 0.03125
  %v701 = vmul.f32 %v685, 0.03125
  %v702 = vmul.f32 %v636, %v636
  %v703 = vmul.f32 %v637, %v637
  %v704 = vmul.f32 %v638, %v638
  %v705 = vmul.f32 %v639, %v639
  %v706 = vmul.f32 %v640, %v640
  %v707 = vmul.f32 %v641, %v641
  %v708 = vmul.f32 %v642, %v642
  %v709 = vmul.f32 %v643, %v643
  %v710 = vmul.f32 %v644, %v644
  %v711 = vmul.f32 %v645, %v645
  %v712 = vmul.f32 %v646, %v646
  %v713 = vmul.f32 %v647, %v647
  %v714 = vmul.f32 %v648, %v648
  %v715 = vmul.f32 %v649, %v649
  %v716 = vmul.f32 %v650, %v650
  %v717 = vmul.f32 %v651, %v651
  %718 = vadd.xlane.f32.xlu0 %v702
  %v719 = vpop.xlane.xlu0 %718
  %720 = vadd.xlane.f32.xlu0 %v703
  %v721 = vpop.xlane.xlu0 %720
  %722 = vadd.xlane.f32.xlu0 %v704
  %v723 = vpop.xlane.xlu0 %722
  %724 = vadd.xlane.f32.xlu0 %v705
  %v725 = vpop.xlane.xlu0 %724
  %726 = vadd.xlane.f32.xlu0 %v706
  %v727 = vpop.xlane.xlu0 %726
  %728 = vadd.xlane.f32.xlu0 %v707
  %v729 = vpop.xlane.xlu0 %728
  %730 = vadd.xlane.f32.xlu0 %v708
  %v731 = vpop.xlane.xlu0 %730
  %732 = vadd.xlane.f32.xlu0 %v709
  %v733 = vpop.xlane.xlu0 %732
  %734 = vadd.xlane.f32.xlu0 %v710
  %v735 = vpop.xlane.xlu0 %734
  %736 = vadd.xlane.f32.xlu0 %v711
  %v737 = vpop.xlane.xlu0 %736
  %738 = vadd.xlane.f32.xlu0 %v712
  %v739 = vpop.xlane.xlu0 %738
  %740 = vadd.xlane.f32.xlu0 %v713
  %v741 = vpop.xlane.xlu0 %740
  %742 = vadd.xlane.f32.xlu0 %v714
  %v743 = vpop.xlane.xlu0 %742
  %744 = vadd.xlane.f32.xlu0 %v715
  %v745 = vpop.xlane.xlu0 %744
  %746 = vadd.xlane.f32.xlu0 %v716
  %v747 = vpop.xlane.xlu0 %746
  %748 = vadd.xlane.f32.xlu0 %v717
  %v749 = vpop.xlane.xlu0 %748
  %v750 = vmul.f32 %v719, 0.03125
  %v751 = vmul.f32 %v721, 0.03125
  %v752 = vmul.f32 %v723, 0.03125
  %v753 = vmul.f32 %v725, 0.03125
  %v754 = vmul.f32 %v727, 0.03125
  %v755 = vmul.f32 %v729, 0.03125
  %v756 = vmul.f32 %v731, 0.03125
  %v757 = vmul.f32 %v733, 0.03125
  %v758 = vmul.f32 %v735, 0.03125
  %v759 = vmul.f32 %v737, 0.03125
  %v760 = vmul.f32 %v739, 0.03125
  %v761 = vmul.f32 %v741, 0.03125
  %v762 = vmul.f32 %v743, 0.03125
  %v763 = vmul.f32 %v745, 0.03125
  %v764 = vmul.f32 %v747, 0.03125
  %v765 = vmul.f32 %v749, 0.03125
  %v766 = vmul.f32 %v686, %v686
  %v767 = vmul.f32 %v687, %v687
  %v768 = vmul.f32 %v688, %v688
  %v769 = vmul.f32 %v689, %v689
  %v770 = vmul.f32 %v690, %v690
  %v771 = vmul.f32 %v691, %v691
  %v772 = vmul.f32 %v692, %v692
  %v773 = vmul.f32 %v693, %v693
  %v774 = vmul.f32 %v694, %v694
  %v775 = vmul.f32 %v695, %v695
  %v776 = vmul.f32 %v696, %v696
  %v777 = vmul.f32 %v697, %v697
  %v778 = vmul.f32 %v698, %v698
  %v779 = vmul.f32 %v699, %v699
  %v780 = vmul.f32 %v700, %v700
  %v781 = vmul.f32 %v701, %v701
  %v782 = vsub.f32 %v750, %v766
  %v783 = vsub.f32 %v751, %v767
  %v784 = vsub.f32 %v752, %v768
  %v785 = vsub.f32 %v753, %v769
  %v786 = vsub.f32 %v754, %v770
  %v787 = vsub.f32 %v755, %v771
  %v788 = vsub.f32 %v756, %v772
  %v789 = vsub.f32 %v757, %v773
  %v790 = vsub.f32 %v758, %v774
  %v791 = vsub.f32 %v759, %v775
  %v792 = vsub.f32 %v760, %v776
  %v793 = vsub.f32 %v761, %v777
  %v794 = vsub.f32 %v762, %v778
  %v795 = vsub.f32 %v763, %v779
  %v796 = vsub.f32 %v764, %v780
  %v797 = vsub.f32 %v765, %v781
  %v798 = vmax.f32 %v782, 0.0
  %v799 = vmax.f32 %v783, 0.0
  %v800 = vmax.f32 %v784, 0.0
  %v801 = vmax.f32 %v785, 0.0
  %v802 = vmax.f32 %v786, 0.0
  %v803 = vmax.f32 %v787, 0.0
  %v804 = vmax.f32 %v788, 0.0
  %v805 = vmax.f32 %v789, 0.0
  %v806 = vmax.f32 %v790, 0.0
  %v807 = vmax.f32 %v791, 0.0
  %v808 = vmax.f32 %v792, 0.0
  %v809 = vmax.f32 %v793, 0.0
  %v810 = vmax.f32 %v794, 0.0
  %v811 = vmax.f32 %v795, 0.0
  %v812 = vmax.f32 %v796, 0.0
  %v813 = vmax.f32 %v797, 0.0
  %v814 = vsub.f32 %v636, %v686
  %v815 = vsub.f32 %v637, %v687
  %v816 = vsub.f32 %v638, %v688
  %v817 = vsub.f32 %v639, %v689
  %v818 = vsub.f32 %v640, %v690
  %v819 = vsub.f32 %v641, %v691
  %v820 = vsub.f32 %v642, %v692
  %v821 = vsub.f32 %v643, %v693
  %v822 = vsub.f32 %v644, %v694
  %v823 = vsub.f32 %v645, %v695
  %v824 = vsub.f32 %v646, %v696
  %v825 = vsub.f32 %v647, %v697
  %v826 = vsub.f32 %v648, %v698
  %v827 = vsub.f32 %v649, %v699
  %v828 = vsub.f32 %v650, %v700
  %v829 = vsub.f32 %v651, %v701
  %v830 = vadd.f32 %v798, 1e-05
  %v831 = vadd.f32 %v799, 1e-05
  %v832 = vadd.f32 %v800, 1e-05
  %v833 = vadd.f32 %v801, 1e-05
  %v834 = vadd.f32 %v802, 1e-05
  %v835 = vadd.f32 %v803, 1e-05
  %v836 = vadd.f32 %v804, 1e-05
  %v837 = vadd.f32 %v805, 1e-05
  %v838 = vadd.f32 %v806, 1e-05
  %v839 = vadd.f32 %v807, 1e-05
  %v840 = vadd.f32 %v808, 1e-05
  %v841 = vadd.f32 %v809, 1e-05
  %v842 = vadd.f32 %v810, 1e-05
  %v843 = vadd.f32 %v811, 1e-05
  %v844 = vadd.f32 %v812, 1e-05
  %v845 = vadd.f32 %v813, 1e-05
  %v846 = vrsqrt.pop %v830
  %v847 = vrsqrt.pop %v831
  %v848 = vrsqrt.pop %v832
  %v849 = vrsqrt.pop %v833
  %v850 = vrsqrt.pop %v834
  %v851 = vrsqrt.pop %v835
  %v852 = vrsqrt.pop %v836
  %v853 = vrsqrt.pop %v837
  %v854 = vrsqrt.pop %v838
  %v855 = vrsqrt.pop %v839
  %v856 = vrsqrt.pop %v840
  %v857 = vrsqrt.pop %v841
  %v858 = vrsqrt.pop %v842
  %v859 = vrsqrt.pop %v843
  %v860 = vrsqrt.pop %v844
  %v861 = vrsqrt.pop %v845
  %v862 = vmul.f32 %v814, %v846
  %v863 = vmul.f32 %v815, %v847
  %v864 = vmul.f32 %v816, %v848
  %v865 = vmul.f32 %v817, %v849
  %v866 = vmul.f32 %v818, %v850
  %v867 = vmul.f32 %v819, %v851
  %v868 = vmul.f32 %v820, %v852
  %v869 = vmul.f32 %v821, %v853
  %v870 = vmul.f32 %v822, %v854
  %v871 = vmul.f32 %v823, %v855
  %v872 = vmul.f32 %v824, %v856
  %v873 = vmul.f32 %v825, %v857
  %v874 = vmul.f32 %v826, %v858
  %v875 = vmul.f32 %v827, %v859
  %v876 = vmul.f32 %v828, %v860
  %v877 = vmul.f32 %v829, %v861
  %v879 = vlaneseq
  %v880 = vshrl.u32 %v879, 7
  %v881 = vsub.s32 0, %v880
  %v882 = vrot.slane %v652, %v881
  %v884 = vmul.f32 %v862, %v882
  %v885 = vmul.f32 %v863, %v882
  %v886 = vmul.f32 %v864, %v882
  %v887 = vmul.f32 %v865, %v882
  %v888 = vmul.f32 %v866, %v882
  %v889 = vmul.f32 %v867, %v882
  %v890 = vmul.f32 %v868, %v882
  %v891 = vmul.f32 %v869, %v882
  %v892 = vmul.f32 %v870, %v882
  %v893 = vmul.f32 %v871, %v882
  %v894 = vmul.f32 %v872, %v882
  %v895 = vmul.f32 %v873, %v882
  %v896 = vmul.f32 %v874, %v882
  %v897 = vmul.f32 %v875, %v882
  %v898 = vmul.f32 %v876, %v882
  %v899 = vmul.f32 %v877, %v882
  %v901 = vlaneseq
  %v902 = vshrl.u32 %v901, 7
  %v903 = vsub.s32 0, %v902
  %v904 = vrot.slane %v653, %v903
  %v906 = vadd.f32 %v884, %v904
  %v907 = vadd.f32 %v885, %v904
  %v908 = vadd.f32 %v886, %v904
  %v909 = vadd.f32 %v887, %v904
  %v910 = vadd.f32 %v888, %v904
  %v911 = vadd.f32 %v889, %v904
  %v912 = vadd.f32 %v890, %v904
  %v913 = vadd.f32 %v891, %v904
  %v914 = vadd.f32 %v892, %v904
  %v915 = vadd.f32 %v893, %v904
  %v916 = vadd.f32 %v894, %v904
  %v917 = vadd.f32 %v895, %v904
  %v918 = vadd.f32 %v896, %v904
  %v919 = vadd.f32 %v897, %v904
  %v920 = vadd.f32 %v898, %v904
  %v921 = vadd.f32 %v899, %v904
  %v922 = vld [vmem:[%s21] sm:$0xff]
  %v923 = vld [vmem:[%s21 + $0x8] sm:$0xff]
  %v924 = vld [vmem:[%s21 + $0x10] sm:$0xff]
  %v925 = vld [vmem:[%s21 + $0x18] sm:$0xff]
  %v926 = vld [vmem:[%s21 + $0x20] sm:$0xff]
  %v927 = vld [vmem:[%s21 + $0x28] sm:$0xff]
  %v928 = vld [vmem:[%s21 + $0x30] sm:$0xff]
  %v929 = vld [vmem:[%s21 + $0x38] sm:$0xff]
  %v930 = vld [vmem:[%s21 + $0x40] sm:$0xff]
  %v931 = vld [vmem:[%s21 + $0x48] sm:$0xff]
  %v932 = vld [vmem:[%s21 + $0x50] sm:$0xff]
  %v933 = vld [vmem:[%s21 + $0x58] sm:$0xff]
  %v934 = vld [vmem:[%s21 + $0x60] sm:$0xff]
  %v935 = vld [vmem:[%s21 + $0x68] sm:$0xff]
  %v936 = vld [vmem:[%s21 + $0x70] sm:$0xff]
  %v937 = vld [vmem:[%s21 + $0x78] sm:$0xff]
  %v938 = vld [vmem:[%s23] sm:$0x1]
  %v940 = vlaneseq
  %v941 = vshrl.u32 %v940, 7
  %v942 = vsub.s32 0, %v941
  %v943 = vrot.slane %v938, %v942
  %945 = vmatprep.subr.mxu0 0.0
  %946 = vmatpush1.msra.mxu0 %v922
  %947 = vmatprep.subr.mxu0 0.0
  %948 = vmatpush1.msra.mxu0 %v923
  %949 = vmatprep.subr.mxu0 0.0
  %950 = vmatpush1.msra.mxu0 %v924
  %951 = vmatprep.subr.mxu0 0.0
  %952 = vmatpush1.msra.mxu0 %v925
  %953 = vmatprep.subr.mxu0 0.0
  %954 = vmatpush1.msra.mxu0 %v926
  %955 = vmatprep.subr.mxu0 0.0
  %956 = vmatpush1.msra.mxu0 %v927
  %957 = vmatprep.subr.mxu0 0.0
  %958 = vmatpush1.msra.mxu0 %v928
  %959 = vmatprep.subr.mxu0 0.0
  %960 = vmatpush1.msra.mxu0 %v929
  %961 = vmatprep.subr.mxu0 0.0
  %962 = vmatpush1.msra.mxu0 %v930
  %963 = vmatprep.subr.mxu0 0.0
  %964 = vmatpush1.msra.mxu0 %v931
  %965 = vmatprep.subr.mxu0 0.0
  %966 = vmatpush1.msra.mxu0 %v932
  %967 = vmatprep.subr.mxu0 0.0
  %968 = vmatpush1.msra.mxu0 %v933
  %969 = vmatprep.subr.mxu0 0.0
  %970 = vmatpush1.msra.mxu0 %v934
  %971 = vmatprep.subr.mxu0 0.0
  %972 = vmatpush1.msra.mxu0 %v935
  %973 = vmatprep.subr.mxu0 0.0
  %974 = vmatpush1.msra.mxu0 %v936
  %975 = vmatprep.subr.mxu0 0.0
  %976 = vmatpush1.msra.mxu0 %v937
  %977 = vmatprep.subr.mxu0 0.0
  %978 = vmatpush1.msra.mxu0 0.0
  %979 = vmatprep.subr.mxu0 0.0
  %980 = vmatpush1.msra.mxu0 0.0
  %981 = vmatprep.subr.mxu0 0.0
  %982 = vmatpush1.msra.mxu0 0.0
  %983 = vmatprep.subr.mxu0 0.0
  %984 = vmatpush1.msra.mxu0 0.0
  %985 = vmatprep.subr.mxu0 0.0
  %986 = vmatpush1.msra.mxu0 0.0
  %987 = vmatprep.subr.mxu0 0.0
  %988 = vmatpush1.msra.mxu0 0.0
  %989 = vmatprep.subr.mxu0 0.0
  %990 = vmatpush1.msra.mxu0 0.0
  %991 = vmatprep.subr.mxu0 0.0
  %992 = vmatpush1.msra.mxu0 0.0
  %993 = vmatprep.subr.mxu0 0.0
  %994 = vmatpush1.msra.mxu0 0.0
  %995 = vmatprep.subr.mxu0 0.0
  %996 = vmatpush1.msra.mxu0 0.0
  %997 = vmatprep.subr.mxu0 0.0
  %998 = vmatpush1.msra.mxu0 0.0
  %999 = vmatprep.subr.mxu0 0.0
  %1000 = vmatpush1.msra.mxu0 0.0
  %1001 = vmatprep.subr.mxu0 0.0
  %1002 = vmatpush1.msra.mxu0 0.0
  %1003 = vmatprep.subr.mxu0 0.0
  %1004 = vmatpush1.msra.mxu0 0.0
  %1005 = vmatprep.subr.mxu0 0.0
  %1006 = vmatpush1.msra.mxu0 0.0
  %1007 = vmatprep.subr.mxu0 0.0
  %1008 = vmatpush1.msra.mxu0 0.0
  %1009 = vmatprep.mubr.f32.mxu0 0.0
  %1010 = vmatmul.mubr.f32.gmra.mrb[0].mxu0 %v906
  %v1011 = vpop.f32.mrb[0].mxu0
  %v1012 = vadd.f32 %v943, %v1011
  %v1013 = vpop.f32.mrb[0].mxu0
  %1014 = vmatprep.mubr.f32.mxu0 0.0
  %1015 = vmatmul.mubr.f32.gmra.mrb[0].mxu0 %v907
  %v1016 = vpop.f32.mrb[0].mxu0
  %v1017 = vadd.f32 %v943, %v1016
  %v1018 = vpop.f32.mrb[0].mxu0
  %1019 = vmatprep.mubr.f32.mxu0 0.0
  %1020 = vmatmul.mubr.f32.gmra.mrb[0].mxu0 %v908
  %v1021 = vpop.f32.mrb[0].mxu0
  %v1022 = vadd.f32 %v943, %v1021
  %v1023 = vpop.f32.mrb[0].mxu0
  %1024 = vmatprep.mubr.f32.mxu0 0.0
  %1025 = vmatmul.mubr.f32.gmra.mrb[0].mxu0 %v909
  %v1026 = vpop.f32.mrb[0].mxu0
  %v1027 = vadd.f32 %v943, %v1026
  %v1028 = vpop.f32.mrb[0].mxu0
  %1029 = vmatprep.mubr.f32.mxu0 0.0
  %1030 = vmatmul.mubr.f32.gmra.mrb[0].mxu0 %v910
  %v1031 = vpop.f32.mrb[0].mxu0
  %v1032 = vadd.f32 %v943, %v1031
  %v1033 = vpop.f32.mrb[0].mxu0
  %1034 = vmatprep.mubr.f32.mxu0 0.0
  %1035 = vmatmul.mubr.f32.gmra.mrb[0].mxu0 %v911
  %v1036 = vpop.f32.mrb[0].mxu0
  %v1037 = vadd.f32 %v943, %v1036
  %v1038 = vpop.f32.mrb[0].mxu0
  %1039 = vmatprep.mubr.f32.mxu0 0.0
  %1040 = vmatmul.mubr.f32.gmra.mrb[0].mxu0 %v912
  %v1041 = vpop.f32.mrb[0].mxu0
  %v1042 = vadd.f32 %v943, %v1041
  %v1043 = vpop.f32.mrb[0].mxu0
  %1044 = vmatprep.mubr.f32.mxu0 0.0
  %1045 = vmatmul.mubr.f32.gmra.mrb[0].mxu0 %v913
  %v1046 = vpop.f32.mrb[0].mxu0
  %v1047 = vadd.f32 %v943, %v1046
  %v1048 = vpop.f32.mrb[0].mxu0
  %1049 = vmatprep.mubr.f32.mxu0 0.0
  %1050 = vmatmul.mubr.f32.gmra.mrb[0].mxu0 %v914
  %v1051 = vpop.f32.mrb[0].mxu0
  %v1052 = vadd.f32 %v943, %v1051
  %v1053 = vpop.f32.mrb[0].mxu0
  %1054 = vmatprep.mubr.f32.mxu0 0.0
  %1055 = vmatmul.mubr.f32.gmra.mrb[0].mxu0 %v915
  %v1056 = vpop.f32.mrb[0].mxu0
  %v1057 = vadd.f32 %v943, %v1056
  %v1058 = vpop.f32.mrb[0].mxu0
  %1059 = vmatprep.mubr.f32.mxu0 0.0
  %1060 = vmatmul.mubr.f32.gmra.mrb[0].mxu0 %v916
  %v1061 = vpop.f32.mrb[0].mxu0
  %v1062 = vadd.f32 %v943, %v1061
  %v1063 = vpop.f32.mrb[0].mxu0
  %1064 = vmatprep.mubr.f32.mxu0 0.0
  %1065 = vmatmul.mubr.f32.gmra.mrb[0].mxu0 %v917
  %v1066 = vpop.f32.mrb[0].mxu0
  %v1067 = vadd.f32 %v943, %v1066
  %v1068 = vpop.f32.mrb[0].mxu0
  %1069 = vmatprep.mubr.f32.mxu0 0.0
  %1070 = vmatmul.mubr.f32.gmra.mrb[0].mxu0 %v918
  %v1071 = vpop.f32.mrb[0].mxu0
  %v1072 = vadd.f32 %v943, %v1071
  %v1073 = vpop.f32.mrb[0].mxu0
  %1074 = vmatprep.mubr.f32.mxu0 0.0
  %1075 = vmatmul.mubr.f32.gmra.mrb[0].mxu0 %v919
  %v1076 = vpop.f32.mrb[0].mxu0
  %v1077 = vadd.f32 %v943, %v1076
  %v1078 = vpop.f32.mrb[0].mxu0
  %1079 = vmatprep.mubr.f32.mxu0 0.0
  %1080 = vmatmul.mubr.f32.gmra.mrb[0].mxu0 %v920
  %v1081 = vpop.f32.mrb[0].mxu0
  %v1082 = vadd.f32 %v943, %v1081
  %v1083 = vpop.f32.mrb[0].mxu0
  %1084 = vmatprep.mubr.f32.mxu0 0.0
  %1085 = vmatmul.mubr.f32.gmra.mrb[0].mxu0 %v921
  %v1086 = vpop.f32.mrb[0].mxu0
  %v1087 = vadd.f32 %v943, %v1086
  %v1088 = vpop.f32.mrb[0].mxu0
  %1089 = vdwg.mxu0
  %v1090 = vld [vmem:[%s3] sm:$0xff]
  %v1091 = vld [vmem:[%s3 + $0x8] sm:$0xff]
  %v1092 = vld [vmem:[%s3 + $0x10] sm:$0xff]
  %v1093 = vld [vmem:[%s3 + $0x18] sm:$0xff]
  %v1094 = vld [vmem:[%s3 + $0x20] sm:$0xff]
  %v1095 = vld [vmem:[%s3 + $0x28] sm:$0xff]
  %v1096 = vld [vmem:[%s3 + $0x30] sm:$0xff]
  %v1097 = vld [vmem:[%s3 + $0x38] sm:$0xff]
  %v1098 = vld [vmem:[%s3 + $0x40] sm:$0xff]
  %v1099 = vld [vmem:[%s3 + $0x48] sm:$0xff]
  %v1100 = vld [vmem:[%s3 + $0x50] sm:$0xff]
  %v1101 = vld [vmem:[%s3 + $0x58] sm:$0xff]
  %v1102 = vld [vmem:[%s3 + $0x60] sm:$0xff]
  %v1103 = vld [vmem:[%s3 + $0x68] sm:$0xff]
  %v1104 = vld [vmem:[%s3 + $0x70] sm:$0xff]
  %v1105 = vld [vmem:[%s3 + $0x78] sm:$0xff]
  %v1106 = vld [vmem:[%s25] sm:$0xff]
  %v1107 = vld [vmem:[%s25 + $0x8] sm:$0xff]
  %v1108 = vld [vmem:[%s25 + $0x10] sm:$0xff]
  %v1109 = vld [vmem:[%s25 + $0x18] sm:$0xff]
  %v1110 = vld [vmem:[%s25 + $0x20] sm:$0xff]
  %v1111 = vld [vmem:[%s25 + $0x28] sm:$0xff]
  %v1112 = vld [vmem:[%s25 + $0x30] sm:$0xff]
  %v1113 = vld [vmem:[%s25 + $0x38] sm:$0xff]
  %v1114 = vld [vmem:[%s25 + $0x40] sm:$0xff]
  %v1115 = vld [vmem:[%s25 + $0x48] sm:$0xff]
  %v1116 = vld [vmem:[%s25 + $0x50] sm:$0xff]
  %v1117 = vld [vmem:[%s25 + $0x58] sm:$0xff]
  %v1118 = vld [vmem:[%s25 + $0x60] sm:$0xff]
  %v1119 = vld [vmem:[%s25 + $0x68] sm:$0xff]
  %v1120 = vld [vmem:[%s25 + $0x70] sm:$0xff]
  %v1121 = vld [vmem:[%s25 + $0x78] sm:$0xff]
  %v1122 = vld [vmem:[%s27] sm:$0x1]
  %v1124 = vlaneseq
  %v1125 = vshrl.u32 %v1124, 7
  %v1126 = vsub.s32 0, %v1125
  %v1127 = vrot.slane %v1122, %v1126
  %1129 = vmatprep.subr.mxu0 0.0
  %1130 = vmatpush1.msra.mxu0 %v1106
  %1131 = vmatprep.subr.mxu0 0.0
  %1132 = vmatpush1.msra.mxu0 %v1107
  %1133 = vmatprep.subr.mxu0 0.0
  %1134 = vmatpush1.msra.mxu0 %v1108
  %1135 = vmatprep.subr.mxu0 0.0
  %1136 = vmatpush1.msra.mxu0 %v1109
  %1137 = vmatprep.subr.mxu0 0.0
  %1138 = vmatpush1.msra.mxu0 %v1110
  %1139 = vmatprep.subr.mxu0 0.0
  %1140 = vmatpush1.msra.mxu0 %v1111
  %1141 = vmatprep.subr.mxu0 0.0
  %1142 = vmatpush1.msra.mxu0 %v1112
  %1143 = vmatprep.subr.mxu0 0.0
  %1144 = vmatpush1.msra.mxu0 %v1113
  %1145 = vmatprep.subr.mxu0 0.0
  %1146 = vmatpush1.msra.mxu0 %v1114
  %1147 = vmatprep.subr.mxu0 0.0
  %1148 = vmatpush1.msra.mxu0 %v1115
  %1149 = vmatprep.subr.mxu0 0.0
  %1150 = vmatpush1.msra.mxu0 %v1116
  %1151 = vmatprep.subr.mxu0 0.0
  %1152 = vmatpush1.msra.mxu0 %v1117
  %1153 = vmatprep.subr.mxu0 0.0
  %1154 = vmatpush1.msra.mxu0 %v1118
  %1155 = vmatprep.subr.mxu0 0.0
  %1156 = vmatpush1.msra.mxu0 %v1119
  %1157 = vmatprep.subr.mxu0 0.0
  %1158 = vmatpush1.msra.mxu0 %v1120
  %1159 = vmatprep.subr.mxu0 0.0
  %1160 = vmatpush1.msra.mxu0 %v1121
  %1161 = vmatprep.subr.mxu0 0.0
  %1162 = vmatpush1.msra.mxu0 0.0
  %1163 = vmatprep.subr.mxu0 0.0
  %1164 = vmatpush1.msra.mxu0 0.0
  %1165 = vmatprep.subr.mxu0 0.0
  %1166 = vmatpush1.msra.mxu0 0.0
  %1167 = vmatprep.subr.mxu0 0.0
  %1168 = vmatpush1.msra.mxu0 0.0
  %1169 = vmatprep.subr.mxu0 0.0
  %1170 = vmatpush1.msra.mxu0 0.0
  %1171 = vmatprep.subr.mxu0 0.0
  %1172 = vmatpush1.msra.mxu0 0.0
  %1173 = vmatprep.subr.mxu0 0.0
  %1174 = vmatpush1.msra.mxu0 0.0
  %1175 = vmatprep.subr.mxu0 0.0
  %1176 = vmatpush1.msra.mxu0 0.0
  %1177 = vmatprep.subr.mxu0 0.0
  %1178 = vmatpush1.msra.mxu0 0.0
  %1179 = vmatprep.subr.mxu0 0.0
  %1180 = vmatpush1.msra.mxu0 0.0
  %1181 = vmatprep.subr.mxu0 0.0
  %1182 = vmatpush1.msra.mxu0 0.0
  %1183 = vmatprep.subr.mxu0 0.0
  %1184 = vmatpush1.msra.mxu0 0.0
  %1185 = vmatprep.subr.mxu0 0.0
  %1186 = vmatpush1.msra.mxu0 0.0
  %1187 = vmatprep.subr.mxu0 0.0
  %1188 = vmatpush1.msra.mxu0 0.0
  %1189 = vmatprep.subr.mxu0 0.0
  %1190 = vmatpush1.msra.mxu0 0.0
  %1191 = vmatprep.subr.mxu0 0.0
  %1192 = vmatpush1.msra.mxu0 0.0
  %1193 = vmatprep.mubr.f32.mxu0 0.0
  %1194 = vmatmul.mubr.f32.gmra.mrb[0].mxu0 %v1090
  %v1195 = vpop.f32.mrb[0].mxu0
  %v1196 = vadd.f32 %v1127, %v1195
  %v1197 = vpop.f32.mrb[0].mxu0
  %1198 = vmatprep.mubr.f32.mxu0 0.0
  %1199 = vmatmul.mubr.f32.gmra.mrb[0].mxu0 %v1091
  %v1200 = vpop.f32.mrb[0].mxu0
  %v1201 = vadd.f32 %v1127, %v1200
  %v1202 = vpop.f32.mrb[0].mxu0
  %1203 = vmatprep.mubr.f32.mxu0 0.0
  %1204 = vmatmul.mubr.f32.gmra.mrb[0].mxu0 %v1092
  %v1205 = vpop.f32.mrb[0].mxu0
  %v1206 = vadd.f32 %v1127, %v1205
  %v1207 = vpop.f32.mrb[0].mxu0
  %1208 = vmatprep.mubr.f32.mxu0 0.0
  %1209 = vmatmul.mubr.f32.gmra.mrb[0].mxu0 %v1093
  %v1210 = vpop.f32.mrb[0].mxu0
  %v1211 = vadd.f32 %v1127, %v1210
  %v1212 = vpop.f32.mrb[0].mxu0
  %1213 = vmatprep.mubr.f32.mxu0 0.0
  %1214 = vmatmul.mubr.f32.gmra.mrb[0].mxu0 %v1094
  %v1215 = vpop.f32.mrb[0].mxu0
  %v1216 = vadd.f32 %v1127, %v1215
  %v1217 = vpop.f32.mrb[0].mxu0
  %1218 = vmatprep.mubr.f32.mxu0 0.0
  %1219 = vmatmul.mubr.f32.gmra.mrb[0].mxu0 %v1095
  %v1220 = vpop.f32.mrb[0].mxu0
  %v1221 = vadd.f32 %v1127, %v1220
  %v1222 = vpop.f32.mrb[0].mxu0
  %1223 = vmatprep.mubr.f32.mxu0 0.0
  %1224 = vmatmul.mubr.f32.gmra.mrb[0].mxu0 %v1096
  %v1225 = vpop.f32.mrb[0].mxu0
  %v1226 = vadd.f32 %v1127, %v1225
  %v1227 = vpop.f32.mrb[0].mxu0
  %1228 = vmatprep.mubr.f32.mxu0 0.0
  %1229 = vmatmul.mubr.f32.gmra.mrb[0].mxu0 %v1097
  %v1230 = vpop.f32.mrb[0].mxu0
  %v1231 = vadd.f32 %v1127, %v1230
  %v1232 = vpop.f32.mrb[0].mxu0
  %1233 = vmatprep.mubr.f32.mxu0 0.0
  %1234 = vmatmul.mubr.f32.gmra.mrb[0].mxu0 %v1098
  %v1235 = vpop.f32.mrb[0].mxu0
  %v1236 = vadd.f32 %v1127, %v1235
  %v1237 = vpop.f32.mrb[0].mxu0
  %1238 = vmatprep.mubr.f32.mxu0 0.0
  %1239 = vmatmul.mubr.f32.gmra.mrb[0].mxu0 %v1099
  %v1240 = vpop.f32.mrb[0].mxu0
  %v1241 = vadd.f32 %v1127, %v1240
  %v1242 = vpop.f32.mrb[0].mxu0
  %1243 = vmatprep.mubr.f32.mxu0 0.0
  %1244 = vmatmul.mubr.f32.gmra.mrb[0].mxu0 %v1100
  %v1245 = vpop.f32.mrb[0].mxu0
  %v1246 = vadd.f32 %v1127, %v1245
  %v1247 = vpop.f32.mrb[0].mxu0
  %1248 = vmatprep.mubr.f32.mxu0 0.0
  %1249 = vmatmul.mubr.f32.gmra.mrb[0].mxu0 %v1101
  %v1250 = vpop.f32.mrb[0].mxu0
  %v1251 = vadd.f32 %v1127, %v1250
  %v1252 = vpop.f32.mrb[0].mxu0
  %1253 = vmatprep.mubr.f32.mxu0 0.0
  %1254 = vmatmul.mubr.f32.gmra.mrb[0].mxu0 %v1102
  %v1255 = vpop.f32.mrb[0].mxu0
  %v1256 = vadd.f32 %v1127, %v1255
  %v1257 = vpop.f32.mrb[0].mxu0
  %1258 = vmatprep.mubr.f32.mxu0 0.0
  %1259 = vmatmul.mubr.f32.gmra.mrb[0].mxu0 %v1103
  %v1260 = vpop.f32.mrb[0].mxu0
  %v1261 = vadd.f32 %v1127, %v1260
  %v1262 = vpop.f32.mrb[0].mxu0
  %1263 = vmatprep.mubr.f32.mxu0 0.0
  %1264 = vmatmul.mubr.f32.gmra.mrb[0].mxu0 %v1104
  %v1265 = vpop.f32.mrb[0].mxu0
  %v1266 = vadd.f32 %v1127, %v1265
  %v1267 = vpop.f32.mrb[0].mxu0
  %1268 = vmatprep.mubr.f32.mxu0 0.0
  %1269 = vmatmul.mubr.f32.gmra.mrb[0].mxu0 %v1105
  %v1270 = vpop.f32.mrb[0].mxu0
  %v1271 = vadd.f32 %v1127, %v1270
  %v1272 = vpop.f32.mrb[0].mxu0
  %1273 = vdwg.mxu0
  %v1274 = vmax.f32 %v1196, 0.0
  %v1275 = vmax.f32 %v1201, 0.0
  %v1276 = vmax.f32 %v1206, 0.0
  %v1277 = vmax.f32 %v1211, 0.0
  %v1278 = vmax.f32 %v1216, 0.0
  %v1279 = vmax.f32 %v1221, 0.0
  %v1280 = vmax.f32 %v1226, 0.0
  %v1281 = vmax.f32 %v1231, 0.0
  %v1282 = vmax.f32 %v1236, 0.0
  %v1283 = vmax.f32 %v1241, 0.0
  %v1284 = vmax.f32 %v1246, 0.0
  %v1285 = vmax.f32 %v1251, 0.0
  %v1286 = vmax.f32 %v1256, 0.0
  %v1287 = vmax.f32 %v1261, 0.0
  %v1288 = vmax.f32 %v1266, 0.0
  %v1289 = vmax.f32 %v1271, 0.0
  %v1290 = vld [vmem:[%s29] sm:$0x1]
  %v1291 = vld [vmem:[%s31] sm:$0x1]
  %1292 = vadd.xlane.f32.xlu0 %v1274
  %v1293 = vpop.xlane.xlu0 %1292
  %1294 = vadd.xlane.f32.xlu0 %v1275
  %v1295 = vpop.xlane.xlu0 %1294
  %1296 = vadd.xlane.f32.xlu0 %v1276
  %v1297 = vpop.xlane.xlu0 %1296
  %1298 = vadd.xlane.f32.xlu0 %v1277
  %v1299 = vpop.xlane.xlu0 %1298
  %1300 = vadd.xlane.f32.xlu0 %v1278
  %v1301 = vpop.xlane.xlu0 %1300
  %1302 = vadd.xlane.f32.xlu0 %v1279
  %v1303 = vpop.xlane.xlu0 %1302
  %1304 = vadd.xlane.f32.xlu0 %v1280
  %v1305 = vpop.xlane.xlu0 %1304
  %1306 = vadd.xlane.f32.xlu0 %v1281
  %v1307 = vpop.xlane.xlu0 %1306
  %1308 = vadd.xlane.f32.xlu0 %v1282
  %v1309 = vpop.xlane.xlu0 %1308
  %1310 = vadd.xlane.f32.xlu0 %v1283
  %v1311 = vpop.xlane.xlu0 %1310
  %1312 = vadd.xlane.f32.xlu0 %v1284
  %v1313 = vpop.xlane.xlu0 %1312
  %1314 = vadd.xlane.f32.xlu0 %v1285
  %v1315 = vpop.xlane.xlu0 %1314
  %1316 = vadd.xlane.f32.xlu0 %v1286
  %v1317 = vpop.xlane.xlu0 %1316
  %1318 = vadd.xlane.f32.xlu0 %v1287
  %v1319 = vpop.xlane.xlu0 %1318
  %1320 = vadd.xlane.f32.xlu0 %v1288
  %v1321 = vpop.xlane.xlu0 %1320
  %1322 = vadd.xlane.f32.xlu0 %v1289
  %v1323 = vpop.xlane.xlu0 %1322
  %v1324 = vmul.f32 %v1293, 0.03125
  %v1325 = vmul.f32 %v1295, 0.03125
  %v1326 = vmul.f32 %v1297, 0.03125
  %v1327 = vmul.f32 %v1299, 0.03125
  %v1328 = vmul.f32 %v1301, 0.03125
  %v1329 = vmul.f32 %v1303, 0.03125
  %v1330 = vmul.f32 %v1305, 0.03125
  %v1331 = vmul.f32 %v1307, 0.03125
  %v1332 = vmul.f32 %v1309, 0.03125
  %v1333 = vmul.f32 %v1311, 0.03125
  %v1334 = vmul.f32 %v1313, 0.03125
  %v1335 = vmul.f32 %v1315, 0.03125
  %v1336 = vmul.f32 %v1317, 0.03125
  %v1337 = vmul.f32 %v1319, 0.03125
  %v1338 = vmul.f32 %v1321, 0.03125
  %v1339 = vmul.f32 %v1323, 0.03125
  %v1340 = vmul.f32 %v1274, %v1274
  %v1341 = vmul.f32 %v1275, %v1275
  %v1342 = vmul.f32 %v1276, %v1276
  %v1343 = vmul.f32 %v1277, %v1277
  %v1344 = vmul.f32 %v1278, %v1278
  %v1345 = vmul.f32 %v1279, %v1279
  %v1346 = vmul.f32 %v1280, %v1280
  %v1347 = vmul.f32 %v1281, %v1281
  %v1348 = vmul.f32 %v1282, %v1282
  %v1349 = vmul.f32 %v1283, %v1283
  %v1350 = vmul.f32 %v1284, %v1284
  %v1351 = vmul.f32 %v1285, %v1285
  %v1352 = vmul.f32 %v1286, %v1286
  %v1353 = vmul.f32 %v1287, %v1287
  %v1354 = vmul.f32 %v1288, %v1288
  %v1355 = vmul.f32 %v1289, %v1289
  %1356 = vadd.xlane.f32.xlu0 %v1340
  %v1357 = vpop.xlane.xlu0 %1356
  %1358 = vadd.xlane.f32.xlu0 %v1341
  %v1359 = vpop.xlane.xlu0 %1358
  %1360 = vadd.xlane.f32.xlu0 %v1342
  %v1361 = vpop.xlane.xlu0 %1360
  %1362 = vadd.xlane.f32.xlu0 %v1343
  %v1363 = vpop.xlane.xlu0 %1362
  %1364 = vadd.xlane.f32.xlu0 %v1344
  %v1365 = vpop.xlane.xlu0 %1364
  %1366 = vadd.xlane.f32.xlu0 %v1345
  %v1367 = vpop.xlane.xlu0 %1366
  %1368 = vadd.xlane.f32.xlu0 %v1346
  %v1369 = vpop.xlane.xlu0 %1368
  %1370 = vadd.xlane.f32.xlu0 %v1347
  %v1371 = vpop.xlane.xlu0 %1370
  %1372 = vadd.xlane.f32.xlu0 %v1348
  %v1373 = vpop.xlane.xlu0 %1372
  %1374 = vadd.xlane.f32.xlu0 %v1349
  %v1375 = vpop.xlane.xlu0 %1374
  %1376 = vadd.xlane.f32.xlu0 %v1350
  %v1377 = vpop.xlane.xlu0 %1376
  %1378 = vadd.xlane.f32.xlu0 %v1351
  %v1379 = vpop.xlane.xlu0 %1378
  %1380 = vadd.xlane.f32.xlu0 %v1352
  %v1381 = vpop.xlane.xlu0 %1380
  %1382 = vadd.xlane.f32.xlu0 %v1353
  %v1383 = vpop.xlane.xlu0 %1382
  %1384 = vadd.xlane.f32.xlu0 %v1354
  %v1385 = vpop.xlane.xlu0 %1384
  %1386 = vadd.xlane.f32.xlu0 %v1355
  %v1387 = vpop.xlane.xlu0 %1386
  %v1388 = vmul.f32 %v1357, 0.03125
  %v1389 = vmul.f32 %v1359, 0.03125
  %v1390 = vmul.f32 %v1361, 0.03125
  %v1391 = vmul.f32 %v1363, 0.03125
  %v1392 = vmul.f32 %v1365, 0.03125
  %v1393 = vmul.f32 %v1367, 0.03125
  %v1394 = vmul.f32 %v1369, 0.03125
  %v1395 = vmul.f32 %v1371, 0.03125
  %v1396 = vmul.f32 %v1373, 0.03125
  %v1397 = vmul.f32 %v1375, 0.03125
  %v1398 = vmul.f32 %v1377, 0.03125
  %v1399 = vmul.f32 %v1379, 0.03125
  %v1400 = vmul.f32 %v1381, 0.03125
  %v1401 = vmul.f32 %v1383, 0.03125
  %v1402 = vmul.f32 %v1385, 0.03125
  %v1403 = vmul.f32 %v1387, 0.03125
  %v1404 = vmul.f32 %v1324, %v1324
  %v1405 = vmul.f32 %v1325, %v1325
  %v1406 = vmul.f32 %v1326, %v1326
  %v1407 = vmul.f32 %v1327, %v1327
  %v1408 = vmul.f32 %v1328, %v1328
  %v1409 = vmul.f32 %v1329, %v1329
  %v1410 = vmul.f32 %v1330, %v1330
  %v1411 = vmul.f32 %v1331, %v1331
  %v1412 = vmul.f32 %v1332, %v1332
  %v1413 = vmul.f32 %v1333, %v1333
  %v1414 = vmul.f32 %v1334, %v1334
  %v1415 = vmul.f32 %v1335, %v1335
  %v1416 = vmul.f32 %v1336, %v1336
  %v1417 = vmul.f32 %v1337, %v1337
  %v1418 = vmul.f32 %v1338, %v1338
  %v1419 = vmul.f32 %v1339, %v1339
  %v1420 = vsub.f32 %v1388, %v1404
  %v1421 = vsub.f32 %v1389, %v1405
  %v1422 = vsub.f32 %v1390, %v1406
  %v1423 = vsub.f32 %v1391, %v1407
  %v1424 = vsub.f32 %v1392, %v1408
  %v1425 = vsub.f32 %v1393, %v1409
  %v1426 = vsub.f32 %v1394, %v1410
  %v1427 = vsub.f32 %v1395, %v1411
  %v1428 = vsub.f32 %v1396, %v1412
  %v1429 = vsub.f32 %v1397, %v1413
  %v1430 = vsub.f32 %v1398, %v1414
  %v1431 = vsub.f32 %v1399, %v1415
  %v1432 = vsub.f32 %v1400, %v1416
  %v1433 = vsub.f32 %v1401, %v1417
  %v1434 = vsub.f32 %v1402, %v1418
  %v1435 = vsub.f32 %v1403, %v1419
  %v1436 = vmax.f32 %v1420, 0.0
  %v1437 = vmax.f32 %v1421, 0.0
  %v1438 = vmax.f32 %v1422, 0.0
  %v1439 = vmax.f32 %v1423, 0.0
  %v1440 = vmax.f32 %v1424, 0.0
  %v1441 = vmax.f32 %v1425, 0.0
  %v1442 = vmax.f32 %v1426, 0.0
  %v1443 = vmax.f32 %v1427, 0.0
  %v1444 = vmax.f32 %v1428, 0.0
  %v1445 = vmax.f32 %v1429, 0.0
  %v1446 = vmax.f32 %v1430, 0.0
  %v1447 = vmax.f32 %v1431, 0.0
  %v1448 = vmax.f32 %v1432, 0.0
  %v1449 = vmax.f32 %v1433, 0.0
  %v1450 = vmax.f32 %v1434, 0.0
  %v1451 = vmax.f32 %v1435, 0.0
  %v1452 = vsub.f32 %v1274, %v1324
  %v1453 = vsub.f32 %v1275, %v1325
  %v1454 = vsub.f32 %v1276, %v1326
  %v1455 = vsub.f32 %v1277, %v1327
  %v1456 = vsub.f32 %v1278, %v1328
  %v1457 = vsub.f32 %v1279, %v1329
  %v1458 = vsub.f32 %v1280, %v1330
  %v1459 = vsub.f32 %v1281, %v1331
  %v1460 = vsub.f32 %v1282, %v1332
  %v1461 = vsub.f32 %v1283, %v1333
  %v1462 = vsub.f32 %v1284, %v1334
  %v1463 = vsub.f32 %v1285, %v1335
  %v1464 = vsub.f32 %v1286, %v1336
  %v1465 = vsub.f32 %v1287, %v1337
  %v1466 = vsub.f32 %v1288, %v1338
  %v1467 = vsub.f32 %v1289, %v1339
  %v1468 = vadd.f32 %v1436, 1e-05
  %v1469 = vadd.f32 %v1437, 1e-05
  %v1470 = vadd.f32 %v1438, 1e-05
  %v1471 = vadd.f32 %v1439, 1e-05
  %v1472 = vadd.f32 %v1440, 1e-05
  %v1473 = vadd.f32 %v1441, 1e-05
  %v1474 = vadd.f32 %v1442, 1e-05
  %v1475 = vadd.f32 %v1443, 1e-05
  %v1476 = vadd.f32 %v1444, 1e-05
  %v1477 = vadd.f32 %v1445, 1e-05
  %v1478 = vadd.f32 %v1446, 1e-05
  %v1479 = vadd.f32 %v1447, 1e-05
  %v1480 = vadd.f32 %v1448, 1e-05
  %v1481 = vadd.f32 %v1449, 1e-05
  %v1482 = vadd.f32 %v1450, 1e-05
  %v1483 = vadd.f32 %v1451, 1e-05
  %v1484 = vrsqrt.pop %v1468
  %v1485 = vrsqrt.pop %v1469
  %v1486 = vrsqrt.pop %v1470
  %v1487 = vrsqrt.pop %v1471
  %v1488 = vrsqrt.pop %v1472
  %v1489 = vrsqrt.pop %v1473
  %v1490 = vrsqrt.pop %v1474
  %v1491 = vrsqrt.pop %v1475
  %v1492 = vrsqrt.pop %v1476
  %v1493 = vrsqrt.pop %v1477
  %v1494 = vrsqrt.pop %v1478
  %v1495 = vrsqrt.pop %v1479
  %v1496 = vrsqrt.pop %v1480
  %v1497 = vrsqrt.pop %v1481
  %v1498 = vrsqrt.pop %v1482
  %v1499 = vrsqrt.pop %v1483
  %v1500 = vmul.f32 %v1452, %v1484
  %v1501 = vmul.f32 %v1453, %v1485
  %v1502 = vmul.f32 %v1454, %v1486
  %v1503 = vmul.f32 %v1455, %v1487
  %v1504 = vmul.f32 %v1456, %v1488
  %v1505 = vmul.f32 %v1457, %v1489
  %v1506 = vmul.f32 %v1458, %v1490
  %v1507 = vmul.f32 %v1459, %v1491
  %v1508 = vmul.f32 %v1460, %v1492
  %v1509 = vmul.f32 %v1461, %v1493
  %v1510 = vmul.f32 %v1462, %v1494
  %v1511 = vmul.f32 %v1463, %v1495
  %v1512 = vmul.f32 %v1464, %v1496
  %v1513 = vmul.f32 %v1465, %v1497
  %v1514 = vmul.f32 %v1466, %v1498
  %v1515 = vmul.f32 %v1467, %v1499
  %v1517 = vlaneseq
  %v1518 = vshrl.u32 %v1517, 7
  %v1519 = vsub.s32 0, %v1518
  %v1520 = vrot.slane %v1290, %v1519
  %v1522 = vmul.f32 %v1500, %v1520
  %v1523 = vmul.f32 %v1501, %v1520
  %v1524 = vmul.f32 %v1502, %v1520
  %v1525 = vmul.f32 %v1503, %v1520
  %v1526 = vmul.f32 %v1504, %v1520
  %v1527 = vmul.f32 %v1505, %v1520
  %v1528 = vmul.f32 %v1506, %v1520
  %v1529 = vmul.f32 %v1507, %v1520
  %v1530 = vmul.f32 %v1508, %v1520
  %v1531 = vmul.f32 %v1509, %v1520
  %v1532 = vmul.f32 %v1510, %v1520
  %v1533 = vmul.f32 %v1511, %v1520
  %v1534 = vmul.f32 %v1512, %v1520
  %v1535 = vmul.f32 %v1513, %v1520
  %v1536 = vmul.f32 %v1514, %v1520
  %v1537 = vmul.f32 %v1515, %v1520
  %v1539 = vlaneseq
  %v1540 = vshrl.u32 %v1539, 7
  %v1541 = vsub.s32 0, %v1540
  %v1542 = vrot.slane %v1291, %v1541
  %v1544 = vadd.f32 %v1522, %v1542
  %v1545 = vadd.f32 %v1523, %v1542
  %v1546 = vadd.f32 %v1524, %v1542
  %v1547 = vadd.f32 %v1525, %v1542
  %v1548 = vadd.f32 %v1526, %v1542
  %v1549 = vadd.f32 %v1527, %v1542
  %v1550 = vadd.f32 %v1528, %v1542
  %v1551 = vadd.f32 %v1529, %v1542
  %v1552 = vadd.f32 %v1530, %v1542
  %v1553 = vadd.f32 %v1531, %v1542
  %v1554 = vadd.f32 %v1532, %v1542
  %v1555 = vadd.f32 %v1533, %v1542
  %v1556 = vadd.f32 %v1534, %v1542
  %v1557 = vadd.f32 %v1535, %v1542
  %v1558 = vadd.f32 %v1536, %v1542
  %v1559 = vadd.f32 %v1537, %v1542
  %v1560 = vld [vmem:[%s33] sm:$0xff]
  %v1561 = vld [vmem:[%s33 + $0x8] sm:$0xff]
  %v1562 = vld [vmem:[%s33 + $0x10] sm:$0xff]
  %v1563 = vld [vmem:[%s33 + $0x18] sm:$0xff]
  %v1564 = vld [vmem:[%s33 + $0x20] sm:$0xff]
  %v1565 = vld [vmem:[%s33 + $0x28] sm:$0xff]
  %v1566 = vld [vmem:[%s33 + $0x30] sm:$0xff]
  %v1567 = vld [vmem:[%s33 + $0x38] sm:$0xff]
  %v1568 = vld [vmem:[%s33 + $0x40] sm:$0xff]
  %v1569 = vld [vmem:[%s33 + $0x48] sm:$0xff]
  %v1570 = vld [vmem:[%s33 + $0x50] sm:$0xff]
  %v1571 = vld [vmem:[%s33 + $0x58] sm:$0xff]
  %v1572 = vld [vmem:[%s33 + $0x60] sm:$0xff]
  %v1573 = vld [vmem:[%s33 + $0x68] sm:$0xff]
  %v1574 = vld [vmem:[%s33 + $0x70] sm:$0xff]
  %v1575 = vld [vmem:[%s33 + $0x78] sm:$0xff]
  %v1576 = vld [vmem:[%s35] sm:$0x1]
  %v1578 = vlaneseq
  %v1579 = vshrl.u32 %v1578, 7
  %v1580 = vsub.s32 0, %v1579
  %v1581 = vrot.slane %v1576, %v1580
  %1583 = vmatprep.subr.mxu0 0.0
  %1584 = vmatpush1.msra.mxu0 %v1560
  %1585 = vmatprep.subr.mxu0 0.0
  %1586 = vmatpush1.msra.mxu0 %v1561
  %1587 = vmatprep.subr.mxu0 0.0
  %1588 = vmatpush1.msra.mxu0 %v1562
  %1589 = vmatprep.subr.mxu0 0.0
  %1590 = vmatpush1.msra.mxu0 %v1563
  %1591 = vmatprep.subr.mxu0 0.0
  %1592 = vmatpush1.msra.mxu0 %v1564
  %1593 = vmatprep.subr.mxu0 0.0
  %1594 = vmatpush1.msra.mxu0 %v1565
  %1595 = vmatprep.subr.mxu0 0.0
  %1596 = vmatpush1.msra.mxu0 %v1566
  %1597 = vmatprep.subr.mxu0 0.0
  %1598 = vmatpush1.msra.mxu0 %v1567
  %1599 = vmatprep.subr.mxu0 0.0
  %1600 = vmatpush1.msra.mxu0 %v1568
  %1601 = vmatprep.subr.mxu0 0.0
  %1602 = vmatpush1.msra.mxu0 %v1569
  %1603 = vmatprep.subr.mxu0 0.0
  %1604 = vmatpush1.msra.mxu0 %v1570
  %1605 = vmatprep.subr.mxu0 0.0
  %1606 = vmatpush1.msra.mxu0 %v1571
  %1607 = vmatprep.subr.mxu0 0.0
  %1608 = vmatpush1.msra.mxu0 %v1572
  %1609 = vmatprep.subr.mxu0 0.0
  %1610 = vmatpush1.msra.mxu0 %v1573
  %1611 = vmatprep.subr.mxu0 0.0
  %1612 = vmatpush1.msra.mxu0 %v1574
  %1613 = vmatprep.subr.mxu0 0.0
  %1614 = vmatpush1.msra.mxu0 %v1575
  %1615 = vmatprep.subr.mxu0 0.0
  %1616 = vmatpush1.msra.mxu0 0.0
  %1617 = vmatprep.subr.mxu0 0.0
  %1618 = vmatpush1.msra.mxu0 0.0
  %1619 = vmatprep.subr.mxu0 0.0
  %1620 = vmatpush1.msra.mxu0 0.0
  %1621 = vmatprep.subr.mxu0 0.0
  %1622 = vmatpush1.msra.mxu0 0.0
  %1623 = vmatprep.subr.mxu0 0.0
  %1624 = vmatpush1.msra.mxu0 0.0
  %1625 = vmatprep.subr.mxu0 0.0
  %1626 = vmatpush1.msra.mxu0 0.0
  %1627 = vmatprep.subr.mxu0 0.0
  %1628 = vmatpush1.msra.mxu0 0.0
  %1629 = vmatprep.subr.mxu0 0.0
  %1630 = vmatpush1.msra.mxu0 0.0
  %1631 = vmatprep.subr.mxu0 0.0
  %1632 = vmatpush1.msra.mxu0 0.0
  %1633 = vmatprep.subr.mxu0 0.0
  %1634 = vmatpush1.msra.mxu0 0.0
  %1635 = vmatprep.subr.mxu0 0.0
  %1636 = vmatpush1.msra.mxu0 0.0
  %1637 = vmatprep.subr.mxu0 0.0
  %1638 = vmatpush1.msra.mxu0 0.0
  %1639 = vmatprep.subr.mxu0 0.0
  %1640 = vmatpush1.msra.mxu0 0.0
  %1641 = vmatprep.subr.mxu0 0.0
  %1642 = vmatpush1.msra.mxu0 0.0
  %1643 = vmatprep.subr.mxu0 0.0
  %1644 = vmatpush1.msra.mxu0 0.0
  %1645 = vmatprep.subr.mxu0 0.0
  %1646 = vmatpush1.msra.mxu0 0.0
  %1647 = vmatprep.mubr.f32.mxu0 0.0
  %1648 = vmatmul.mubr.f32.gmra.mrb[0].mxu0 %v1544
  %v1649 = vpop.f32.mrb[0].mxu0
  %v1650 = vadd.f32 %v1581, %v1649
  %v1651 = vpop.f32.mrb[0].mxu0
  %1652 = vmatprep.mubr.f32.mxu0 0.0
  %1653 = vmatmul.mubr.f32.gmra.mrb[0].mxu0 %v1545
  %v1654 = vpop.f32.mrb[0].mxu0
  %v1655 = vadd.f32 %v1581, %v1654
  %v1656 = vpop.f32.mrb[0].mxu0
  %1657 = vmatprep.mubr.f32.mxu0 0.0
  %1658 = vmatmul.mubr.f32.gmra.mrb[0].mxu0 %v1546
  %v1659 = vpop.f32.mrb[0].mxu0
  %v1660 = vadd.f32 %v1581, %v1659
  %v1661 = vpop.f32.mrb[0].mxu0
  %1662 = vmatprep.mubr.f32.mxu0 0.0
  %1663 = vmatmul.mubr.f32.gmra.mrb[0].mxu0 %v1547
  %v1664 = vpop.f32.mrb[0].mxu0
  %v1665 = vadd.f32 %v1581, %v1664
  %v1666 = vpop.f32.mrb[0].mxu0
  %1667 = vmatprep.mubr.f32.mxu0 0.0
  %1668 = vmatmul.mubr.f32.gmra.mrb[0].mxu0 %v1548
  %v1669 = vpop.f32.mrb[0].mxu0
  %v1670 = vadd.f32 %v1581, %v1669
  %v1671 = vpop.f32.mrb[0].mxu0
  %1672 = vmatprep.mubr.f32.mxu0 0.0
  %1673 = vmatmul.mubr.f32.gmra.mrb[0].mxu0 %v1549
  %v1674 = vpop.f32.mrb[0].mxu0
  %v1675 = vadd.f32 %v1581, %v1674
  %v1676 = vpop.f32.mrb[0].mxu0
  %1677 = vmatprep.mubr.f32.mxu0 0.0
  %1678 = vmatmul.mubr.f32.gmra.mrb[0].mxu0 %v1550
  %v1679 = vpop.f32.mrb[0].mxu0
  %v1680 = vadd.f32 %v1581, %v1679
  %v1681 = vpop.f32.mrb[0].mxu0
  %1682 = vmatprep.mubr.f32.mxu0 0.0
  %1683 = vmatmul.mubr.f32.gmra.mrb[0].mxu0 %v1551
  %v1684 = vpop.f32.mrb[0].mxu0
  %v1685 = vadd.f32 %v1581, %v1684
  %v1686 = vpop.f32.mrb[0].mxu0
  %1687 = vmatprep.mubr.f32.mxu0 0.0
  %1688 = vmatmul.mubr.f32.gmra.mrb[0].mxu0 %v1552
  %v1689 = vpop.f32.mrb[0].mxu0
  %v1690 = vadd.f32 %v1581, %v1689
  %v1691 = vpop.f32.mrb[0].mxu0
  %1692 = vmatprep.mubr.f32.mxu0 0.0
  %1693 = vmatmul.mubr.f32.gmra.mrb[0].mxu0 %v1553
  %v1694 = vpop.f32.mrb[0].mxu0
  %v1695 = vadd.f32 %v1581, %v1694
  %v1696 = vpop.f32.mrb[0].mxu0
  %1697 = vmatprep.mubr.f32.mxu0 0.0
  %1698 = vmatmul.mubr.f32.gmra.mrb[0].mxu0 %v1554
  %v1699 = vpop.f32.mrb[0].mxu0
  %v1700 = vadd.f32 %v1581, %v1699
  %v1701 = vpop.f32.mrb[0].mxu0
  %1702 = vmatprep.mubr.f32.mxu0 0.0
  %1703 = vmatmul.mubr.f32.gmra.mrb[0].mxu0 %v1555
  %v1704 = vpop.f32.mrb[0].mxu0
  %v1705 = vadd.f32 %v1581, %v1704
  %v1706 = vpop.f32.mrb[0].mxu0
  %1707 = vmatprep.mubr.f32.mxu0 0.0
  %1708 = vmatmul.mubr.f32.gmra.mrb[0].mxu0 %v1556
  %v1709 = vpop.f32.mrb[0].mxu0
  %v1710 = vadd.f32 %v1581, %v1709
  %v1711 = vpop.f32.mrb[0].mxu0
  %1712 = vmatprep.mubr.f32.mxu0 0.0
  %1713 = vmatmul.mubr.f32.gmra.mrb[0].mxu0 %v1557
  %v1714 = vpop.f32.mrb[0].mxu0
  %v1715 = vadd.f32 %v1581, %v1714
  %v1716 = vpop.f32.mrb[0].mxu0
  %1717 = vmatprep.mubr.f32.mxu0 0.0
  %1718 = vmatmul.mubr.f32.gmra.mrb[0].mxu0 %v1558
  %v1719 = vpop.f32.mrb[0].mxu0
  %v1720 = vadd.f32 %v1581, %v1719
  %v1721 = vpop.f32.mrb[0].mxu0
  %1722 = vmatprep.mubr.f32.mxu0 0.0
  %1723 = vmatmul.mubr.f32.gmra.mrb[0].mxu0 %v1559
  %v1724 = vpop.f32.mrb[0].mxu0
  %v1725 = vadd.f32 %v1581, %v1724
  %v1726 = vpop.f32.mrb[0].mxu0
  %1727 = vdwg.mxu0
  loop: start=0, step=1, limit=2
  $region130: #{forward.1} parent=0 // loop_pre_header
    _
  $region131: #{forward.1} parent=0 // loop_header
    %s1729 = sphi 0, %s1733
    %p1730 = scmp.ge.s32.totalorder %s1729, 2
    %v1734 = vphi %v1012, %v4570
    %v1735 = vphi %v1017, %v4571
    %v1736 = vphi %v1022, %v4572
    %v1737 = vphi %v1027, %v4573
    %v1738 = vphi %v1032, %v4574
    %v1739 = vphi %v1037, %v4575
    %v1740 = vphi %v1042, %v4576
    %v1741 = vphi %v1047, %v4577
    %v1742 = vphi %v1052, %v4578
    %v1743 = vphi %v1057, %v4579
    %v1744 = vphi %v1062, %v4580
    %v1745 = vphi %v1067, %v4581
    %v1746 = vphi %v1072, %v4582
    %v1747 = vphi %v1077, %v4583
    %v1748 = vphi %v1082, %v4584
    %v1749 = vphi %v1087, %v4585
    %v1750 = vphi %v1650, %v3288
    %v1751 = vphi %v1655, %v3289
    %v1752 = vphi %v1660, %v3290
    %v1753 = vphi %v1665, %v3291
    %v1754 = vphi %v1670, %v3292
    %v1755 = vphi %v1675, %v3293
    %v1756 = vphi %v1680, %v3294
    %v1757 = vphi %v1685, %v3295
    %v1758 = vphi %v1690, %v3296
    %v1759 = vphi %v1695, %v3297
    %v1760 = vphi %v1700, %v3298
    %v1761 = vphi %v1705, %v3299
    %v1762 = vphi %v1710, %v3300
    %v1763 = vphi %v1715, %v3301
    %v1764 = vphi %v1720, %v3302
    %v1765 = vphi %v1725, %v3303
  $region132: #{forward.1} parent=0 // loop_header_branch
    %1732 = sbr.rel (%p1730) target = $region136
  $region133: #{forward.1} parent=0 // loop_body
    %s1766 = smul.u32 %s1729, 80
    %s1767 = smul.addr %s1766, 8
    %s1768 = scalar_lea.vmem %s37, %s1767
    %v1769 = vld [vmem:[%s1768] sm:$0xff]
    %v1770 = vld [vmem:[%s1768 + $0x8] sm:$0xff]
    %v1771 = vld [vmem:[%s1768 + $0x10] sm:$0xff]
    %v1772 = vld [vmem:[%s1768 + $0x18] sm:$0xff]
    %v1773 = vld [vmem:[%s1768 + $0x20] sm:$0xff]
    %v1774 = vld [vmem:[%s1768 + $0x28] sm:$0xff]
    %v1775 = vld [vmem:[%s1768 + $0x30] sm:$0xff]
    %v1776 = vld [vmem:[%s1768 + $0x38] sm:$0xff]
    %v1777 = vld [vmem:[%s1768 + $0x40] sm:$0xff]
    %v1778 = vld [vmem:[%s1768 + $0x48] sm:$0xff]
    %v1779 = vld [vmem:[%s1768 + $0x50] sm:$0xff]
    %v1780 = vld [vmem:[%s1768 + $0x58] sm:$0xff]
    %v1781 = vld [vmem:[%s1768 + $0x60] sm:$0xff]
    %v1782 = vld [vmem:[%s1768 + $0x68] sm:$0xff]
    %v1783 = vld [vmem:[%s1768 + $0x70] sm:$0xff]
    %v1784 = vld [vmem:[%s1768 + $0x78] sm:$0xff]
    %v1785 = vld [vmem:[%s1768 + $0x80] sm:$0xff]
    %v1786 = vld [vmem:[%s1768 + $0x88] sm:$0xff]
    %v1787 = vld [vmem:[%s1768 + $0x90] sm:$0xff]
    %v1788 = vld [vmem:[%s1768 + $0x98] sm:$0xff]
    %v1789 = vld [vmem:[%s1768 + $0xa0] sm:$0xff]
    %v1790 = vld [vmem:[%s1768 + $0xa8] sm:$0xff]
    %v1791 = vld [vmem:[%s1768 + $0xb0] sm:$0xff]
    %v1792 = vld [vmem:[%s1768 + $0xb8] sm:$0xff]
    %v1793 = vld [vmem:[%s1768 + $0xc0] sm:$0xff]
    %v1794 = vld [vmem:[%s1768 + $0xc8] sm:$0xff]
    %v1795 = vld [vmem:[%s1768 + $0xd0] sm:$0xff]
    %v1796 = vld [vmem:[%s1768 + $0xd8] sm:$0xff]
    %v1797 = vld [vmem:[%s1768 + $0xe0] sm:$0xff]
    %v1798 = vld [vmem:[%s1768 + $0xe8] sm:$0xff]
    %v1799 = vld [vmem:[%s1768 + $0xf0] sm:$0xff]
    %v1800 = vld [vmem:[%s1768 + $0xf8] sm:$0xff]
    %v1801 = vld [vmem:[%s1768 + $0x100] sm:$0xff]
    %v1802 = vld [vmem:[%s1768 + $0x108] sm:$0xff]
    %v1803 = vld [vmem:[%s1768 + $0x110] sm:$0xff]
    %v1804 = vld [vmem:[%s1768 + $0x118] sm:$0xff]
    %v1805 = vld [vmem:[%s1768 + $0x120] sm:$0xff]
    %v1806 = vld [vmem:[%s1768 + $0x128] sm:$0xff]
    %v1807 = vld [vmem:[%s1768 + $0x130] sm:$0xff]
    %v1808 = vld [vmem:[%s1768 + $0x138] sm:$0xff]
    %v1809 = vld [vmem:[%s1768 + $0x140] sm:$0xff]
    %v1810 = vld [vmem:[%s1768 + $0x148] sm:$0xff]
    %v1811 = vld [vmem:[%s1768 + $0x150] sm:$0xff]
    %v1812 = vld [vmem:[%s1768 + $0x158] sm:$0xff]
    %v1813 = vld [vmem:[%s1768 + $0x160] sm:$0xff]
    %v1814 = vld [vmem:[%s1768 + $0x168] sm:$0xff]
    %v1815 = vld [vmem:[%s1768 + $0x170] sm:$0xff]
    %v1816 = vld [vmem:[%s1768 + $0x178] sm:$0xff]
    %v1817 = vld [vmem:[%s1768 + $0x180] sm:$0xff]
    %v1818 = vld [vmem:[%s1768 + $0x188] sm:$0xff]
    %v1819 = vld [vmem:[%s1768 + $0x190] sm:$0xff]
    %v1820 = vld [vmem:[%s1768 + $0x198] sm:$0xff]
    %v1821 = vld [vmem:[%s1768 + $0x1a0] sm:$0xff]
    %v1822 = vld [vmem:[%s1768 + $0x1a8] sm:$0xff]
    %v1823 = vld [vmem:[%s1768 + $0x1b0] sm:$0xff]
    %v1824 = vld [vmem:[%s1768 + $0x1b8] sm:$0xff]
    %v1825 = vld [vmem:[%s1768 + $0x1c0] sm:$0xff]
    %v1826 = vld [vmem:[%s1768 + $0x1c8] sm:$0xff]
    %v1827 = vld [vmem:[%s1768 + $0x1d0] sm:$0xff]
    %v1828 = vld [vmem:[%s1768 + $0x1d8] sm:$0xff]
    %v1829 = vld [vmem:[%s1768 + $0x1e0] sm:$0xff]
    %v1830 = vld [vmem:[%s1768 + $0x1e8] sm:$0xff]
    %v1831 = vld [vmem:[%s1768 + $0x1f0] sm:$0xff]
    %v1832 = vld [vmem:[%s1768 + $0x1f8] sm:$0xff]
    %v1833 = vld [vmem:[%s1768 + $0x200] sm:$0xff]
    %v1834 = vld [vmem:[%s1768 + $0x208] sm:$0xff]
    %v1835 = vld [vmem:[%s1768 + $0x210] sm:$0xff]
    %v1836 = vld [vmem:[%s1768 + $0x218] sm:$0xff]
    %v1837 = vld [vmem:[%s1768 + $0x220] sm:$0xff]
    %v1838 = vld [vmem:[%s1768 + $0x228] sm:$0xff]
    %v1839 = vld [vmem:[%s1768 + $0x230] sm:$0xff]
    %v1840 = vld [vmem:[%s1768 + $0x238] sm:$0xff]
    %v1841 = vld [vmem:[%s1768 + $0x240] sm:$0xff]
    %v1842 = vld [vmem:[%s1768 + $0x248] sm:$0xff]
    %v1843 = vld [vmem:[%s1768 + $0x250] sm:$0xff]
    %v1844 = vld [vmem:[%s1768 + $0x258] sm:$0xff]
    %v1845 = vld [vmem:[%s1768 + $0x260] sm:$0xff]
    %v1846 = vld [vmem:[%s1768 + $0x268] sm:$0xff]
    %v1847 = vld [vmem:[%s1768 + $0x270] sm:$0xff]
    %v1848 = vld [vmem:[%s1768 + $0x278] sm:$0xff]
    %s1849 = smul.u32 %s1729, 5
    %s1850 = scalar_lea.vmem %s39, %s1849
    %v1851 = vld [vmem:[%s1850] sm:$0x1f]
    %v1853 = vlaneseq
    %v1854 = vshrl.u32 %v1853, 7
    %v1855 = vsub.s32 0, %v1854
    %v1856 = vrot.slane %v1851, %v1855
    %v1857 = vlaneseq
    %v1858 = vshrl.u32 %v1857, 7
    %v1859 = vsub.s32 1, %v1858
    %v1860 = vrot.slane %v1851, %v1859
    %v1861 = vlaneseq
    %v1862 = vshrl.u32 %v1861, 7
    %v1863 = vsub.s32 2, %v1862
    %v1864 = vrot.slane %v1851, %v1863
    %v1865 = vlaneseq
    %v1866 = vshrl.u32 %v1865, 7
    %v1867 = vsub.s32 3, %v1866
    %v1868 = vrot.slane %v1851, %v1867
    %v1869 = vlaneseq
    %v1870 = vshrl.u32 %v1869, 7
    %v1871 = vsub.s32 4, %v1870
    %v1872 = vrot.slane %v1851, %v1871
    %1878 = vmatprep.subr.mxu0 %v1770
    %1879 = vmatpush1.msra.mxu0 %v1769
    %1880 = vmatprep.subr.mxu0 %v1775
    %1881 = vmatpush1.msra.mxu0 %v1774
    %1882 = vmatprep.subr.mxu0 %v1780
    %1883 = vmatpush1.msra.mxu0 %v1779
    %1884 = vmatprep.subr.mxu0 %v1785
    %1885 = vmatpush1.msra.mxu0 %v1784
    %1886 = vmatprep.subr.mxu0 %v1790
    %1887 = vmatpush1.msra.mxu0 %v1789
    %1888 = vmatprep.subr.mxu0 %v1795
    %1889 = vmatpush1.msra.mxu0 %v1794
    %1890 = vmatprep.subr.mxu0 %v1800
    %1891 = vmatpush1.msra.mxu0 %v1799
    %1892 = vmatprep.subr.mxu0 %v1805
    %1893 = vmatpush1.msra.mxu0 %v1804
    %1894 = vmatprep.subr.mxu0 %v1810
    %1895 = vmatpush1.msra.mxu0 %v1809
    %1896 = vmatprep.subr.mxu0 %v1815
    %1897 = vmatpush1.msra.mxu0 %v1814
    %1898 = vmatprep.subr.mxu0 %v1820
    %1899 = vmatpush1.msra.mxu0 %v1819
    %1900 = vmatprep.subr.mxu0 %v1825
    %1901 = vmatpush1.msra.mxu0 %v1824
    %1902 = vmatprep.subr.mxu0 %v1830
    %1903 = vmatpush1.msra.mxu0 %v1829
    %1904 = vmatprep.subr.mxu0 %v1835
    %1905 = vmatpush1.msra.mxu0 %v1834
    %1906 = vmatprep.subr.mxu0 %v1840
    %1907 = vmatpush1.msra.mxu0 %v1839
    %1908 = vmatprep.subr.mxu0 %v1845
    %1909 = vmatpush1.msra.mxu0 %v1844
    %1910 = vmatprep.subr.mxu0 0.0
    %1911 = vmatpush1.msra.mxu0 0.0
    %1912 = vmatprep.subr.mxu0 0.0
    %1913 = vmatpush1.msra.mxu0 0.0
    %1914 = vmatprep.subr.mxu0 0.0
    %1915 = vmatpush1.msra.mxu0 0.0
    %1916 = vmatprep.subr.mxu0 0.0
    %1917 = vmatpush1.msra.mxu0 0.0
    %1918 = vmatprep.subr.mxu0 0.0
    %1919 = vmatpush1.msra.mxu0 0.0
    %1920 = vmatprep.subr.mxu0 0.0
    %1921 = vmatpush1.msra.mxu0 0.0
    %1922 = vmatprep.subr.mxu0 0.0
    %1923 = vmatpush1.msra.mxu0 0.0
    %1924 = vmatprep.subr.mxu0 0.0
    %1925 = vmatpush1.msra.mxu0 0.0
    %1926 = vmatprep.subr.mxu0 0.0
    %1927 = vmatpush1.msra.mxu0 0.0
    %1928 = vmatprep.subr.mxu0 0.0
    %1929 = vmatpush1.msra.mxu0 0.0
    %1930 = vmatprep.subr.mxu0 0.0
    %1931 = vmatpush1.msra.mxu0 0.0
    %1932 = vmatprep.subr.mxu0 0.0
    %1933 = vmatpush1.msra.mxu0 0.0
    %1934 = vmatprep.subr.mxu0 0.0
    %1935 = vmatpush1.msra.mxu0 0.0
    %1936 = vmatprep.subr.mxu0 0.0
    %1937 = vmatpush1.msra.mxu0 0.0
    %1938 = vmatprep.subr.mxu0 0.0
    %1939 = vmatpush1.msra.mxu0 0.0
    %1940 = vmatprep.subr.mxu0 0.0
    %1941 = vmatpush1.msra.mxu0 0.0
    %1942 = vmatprep.mubr.f32.mxu0 0.0
    %1943 = vmatmul.mubr.f32.gmra.mrb[0].mxu0 %v1734
    %v1944 = vpop.f32.mrb[0].mxu0
    %v1945 = vadd.f32 %v1856, %v1944
    %v1946 = vpop.f32.mrb[0].mxu0
    %v1947 = vadd.f32 %v1860, %v1946
    %1948 = vmatprep.mubr.f32.mxu0 0.0
    %1949 = vmatmul.mubr.f32.gmra.mrb[0].mxu0 %v1735
    %v1950 = vpop.f32.mrb[0].mxu0
    %v1951 = vadd.f32 %v1856, %v1950
    %v1952 = vpop.f32.mrb[0].mxu0
    %v1953 = vadd.f32 %v1860, %v1952
    %1954 = vmatprep.mubr.f32.mxu0 0.0
    %1955 = vmatmul.mubr.f32.gmra.mrb[0].mxu0 %v1736
    %v1956 = vpop.f32.mrb[0].mxu0
    %v1957 = vadd.f32 %v1856, %v1956
    %v1958 = vpop.f32.mrb[0].mxu0
    %v1959 = vadd.f32 %v1860, %v1958
    %1960 = vmatprep.mubr.f32.mxu0 0.0
    %1961 = vmatmul.mubr.f32.gmra.mrb[0].mxu0 %v1737
    %v1962 = vpop.f32.mrb[0].mxu0
    %v1963 = vadd.f32 %v1856, %v1962
    %v1964 = vpop.f32.mrb[0].mxu0
    %v1965 = vadd.f32 %v1860, %v1964
    %1966 = vmatprep.mubr.f32.mxu0 0.0
    %1967 = vmatmul.mubr.f32.gmra.mrb[0].mxu0 %v1738
    %v1968 = vpop.f32.mrb[0].mxu0
    %v1969 = vadd.f32 %v1856, %v1968
    %v1970 = vpop.f32.mrb[0].mxu0
    %v1971 = vadd.f32 %v1860, %v1970
    %1972 = vmatprep.mubr.f32.mxu0 0.0
    %1973 = vmatmul.mubr.f32.gmra.mrb[0].mxu0 %v1739
    %v1974 = vpop.f32.mrb[0].mxu0
    %v1975 = vadd.f32 %v1856, %v1974
    %v1976 = vpop.f32.mrb[0].mxu0
    %v1977 = vadd.f32 %v1860, %v1976
    %1978 = vmatprep.mubr.f32.mxu0 0.0
    %1979 = vmatmul.mubr.f32.gmra.mrb[0].mxu0 %v1740
    %v1980 = vpop.f32.mrb[0].mxu0
    %v1981 = vadd.f32 %v1856, %v1980
    %v1982 = vpop.f32.mrb[0].mxu0
    %v1983 = vadd.f32 %v1860, %v1982
    %1984 = vmatprep.mubr.f32.mxu0 0.0
    %1985 = vmatmul.mubr.f32.gmra.mrb[0].mxu0 %v1741
    %v1986 = vpop.f32.mrb[0].mxu0
    %v1987 = vadd.f32 %v1856, %v1986
    %v1988 = vpop.f32.mrb[0].mxu0
    %v1989 = vadd.f32 %v1860, %v1988
    %1990 = vmatprep.mubr.f32.mxu0 0.0
    %1991 = vmatmul.mubr.f32.gmra.mrb[0].mxu0 %v1742
    %v1992 = vpop.f32.mrb[0].mxu0
    %v1993 = vadd.f32 %v1856, %v1992
    %v1994 = vpop.f32.mrb[0].mxu0
    %v1995 = vadd.f32 %v1860, %v1994
    %1996 = vmatprep.mubr.f32.mxu0 0.0
    %1997 = vmatmul.mubr.f32.gmra.mrb[0].mxu0 %v1743
    %v1998 = vpop.f32.mrb[0].mxu0
    %v1999 = vadd.f32 %v1856, %v1998
    %v2000 = vpop.f32.mrb[0].mxu0
    %v2001 = vadd.f32 %v1860, %v2000
    %2002 = vmatprep.mubr.f32.mxu0 0.0
    %2003 = vmatmul.mubr.f32.gmra.mrb[0].mxu0 %v1744
    %v2004 = vpop.f32.mrb[0].mxu0
    %v2005 = vadd.f32 %v1856, %v2004
    %v2006 = vpop.f32.mrb[0].mxu0
    %v2007 = vadd.f32 %v1860, %v2006
    %2008 = vmatprep.mubr.f32.mxu0 0.0
    %2009 = vmatmul.mubr.f32.gmra.mrb[0].mxu0 %v1745
    %v2010 = vpop.f32.mrb[0].mxu0
    %v2011 = vadd.f32 %v1856, %v2010
    %v2012 = vpop.f32.mrb[0].mxu0
    %v2013 = vadd.f32 %v1860, %v2012
    %2014 = vmatprep.mubr.f32.mxu0 0.0
    %2015 = vmatmul.mubr.f32.gmra.mrb[0].mxu0 %v1746
    %v2016 = vpop.f32.mrb[0].mxu0
    %v2017 = vadd.f32 %v1856, %v2016
    %v2018 = vpop.f32.mrb[0].mxu0
    %v2019 = vadd.f32 %v1860, %v2018
    %2020 = vmatprep.mubr.f32.mxu0 0.0
    %2021 = vmatmul.mubr.f32.gmra.mrb[0].mxu0 %v1747
    %v2022 = vpop.f32.mrb[0].mxu0
    %v2023 = vadd.f32 %v1856, %v2022
    %v2024 = vpop.f32.mrb[0].mxu0
    %v2025 = vadd.f32 %v1860, %v2024
    %2026 = vmatprep.mubr.f32.mxu0 0.0
    %2027 = vmatmul.mubr.f32.gmra.mrb[0].mxu0 %v1748
    %v2028 = vpop.f32.mrb[0].mxu0
    %v2029 = vadd.f32 %v1856, %v2028
    %v2030 = vpop.f32.mrb[0].mxu0
    %v2031 = vadd.f32 %v1860, %v2030
    %2032 = vmatprep.mubr.f32.mxu0 0.0
    %2033 = vmatmul.mubr.f32.gmra.mrb[0].mxu0 %v1749
    %v2034 = vpop.f32.mrb[0].mxu0
    %v2035 = vadd.f32 %v1856, %v2034
    %v2036 = vpop.f32.mrb[0].mxu0
    %v2037 = vadd.f32 %v1860, %v2036
    %2038 = vdwg.mxu0
    %2039 = vmatprep.subr.mxu0 %v1772
    %2040 = vmatpush1.msra.mxu0 %v1771
    %2041 = vmatprep.subr.mxu0 %v1777
    %2042 = vmatpush1.msra.mxu0 %v1776
    %2043 = vmatprep.subr.mxu0 %v1782
    %2044 = vmatpush1.msra.mxu0 %v1781
    %2045 = vmatprep.subr.mxu0 %v1787
    %2046 = vmatpush1.msra.mxu0 %v1786
    %2047 = vmatprep.subr.mxu0 %v1792
    %2048 = vmatpush1.msra.mxu0 %v1791
    %2049 = vmatprep.subr.mxu0 %v1797
    %2050 = vmatpush1.msra.mxu0 %v1796
    %2051 = vmatprep.subr.mxu0 %v1802
    %2052 = vmatpush1.msra.mxu0 %v1801
    %2053 = vmatprep.subr.mxu0 %v1807
    %2054 = vmatpush1.msra.mxu0 %v1806
    %2055 = vmatprep.subr.mxu0 %v1812
    %2056 = vmatpush1.msra.mxu0 %v1811
    %2057 = vmatprep.subr.mxu0 %v1817
    %2058 = vmatpush1.msra.mxu0 %v1816
    %2059 = vmatprep.subr.mxu0 %v1822
    %2060 = vmatpush1.msra.mxu0 %v1821
    %2061 = vmatprep.subr.mxu0 %v1827
    %2062 = vmatpush1.msra.mxu0 %v1826
    %2063 = vmatprep.subr.mxu0 %v1832
    %2064 = vmatpush1.msra.mxu0 %v1831
    %2065 = vmatprep.subr.mxu0 %v1837
    %2066 = vmatpush1.msra.mxu0 %v1836
    %2067 = vmatprep.subr.mxu0 %v1842
    %2068 = vmatpush1.msra.mxu0 %v1841
    %2069 = vmatprep.subr.mxu0 %v1847
    %2070 = vmatpush1.msra.mxu0 %v1846
    %2071 = vmatprep.subr.mxu0 0.0
    %2072 = vmatpush1.msra.mxu0 0.0
    %2073 = vmatprep.subr.mxu0 0.0
    %2074 = vmatpush1.msra.mxu0 0.0
    %2075 = vmatprep.subr.mxu0 0.0
    %2076 = vmatpush1.msra.mxu0 0.0
    %2077 = vmatprep.subr.mxu0 0.0
    %2078 = vmatpush1.msra.mxu0 0.0
    %2079 = vmatprep.subr.mxu0 0.0
    %2080 = vmatpush1.msra.mxu0 0.0
    %2081 = vmatprep.subr.mxu0 0.0
    %2082 = vmatpush1.msra.mxu0 0.0
    %2083 = vmatprep.subr.mxu0 0.0
    %2084 = vmatpush1.msra.mxu0 0.0
    %2085 = vmatprep.subr.mxu0 0.0
    %2086 = vmatpush1.msra.mxu0 0.0
    %2087 = vmatprep.subr.mxu0 0.0
    %2088 = vmatpush1.msra.mxu0 0.0
    %2089 = vmatprep.subr.mxu0 0.0
    %2090 = vmatpush1.msra.mxu0 0.0
    %2091 = vmatprep.subr.mxu0 0.0
    %2092 = vmatpush1.msra.mxu0 0.0
    %2093 = vmatprep.subr.mxu0 0.0
    %2094 = vmatpush1.msra.mxu0 0.0
    %2095 = vmatprep.subr.mxu0 0.0
    %2096 = vmatpush1.msra.mxu0 0.0
    %2097 = vmatprep.subr.mxu0 0.0
    %2098 = vmatpush1.msra.mxu0 0.0
    %2099 = vmatprep.subr.mxu0 0.0
    %2100 = vmatpush1.msra.mxu0 0.0
    %2101 = vmatprep.subr.mxu0 0.0
    %2102 = vmatpush1.msra.mxu0 0.0
    %2103 = vmatprep.mubr.f32.mxu0 0.0
    %2104 = vmatmul.mubr.f32.gmra.mrb[0].mxu0 %v1734
    %v2105 = vpop.f32.mrb[0].mxu0
    %v2106 = vadd.f32 %v1864, %v2105
    %v2107 = vpop.f32.mrb[0].mxu0
    %v2108 = vadd.f32 %v1868, %v2107
    %2109 = vmatprep.mubr.f32.mxu0 0.0
    %2110 = vmatmul.mubr.f32.gmra.mrb[0].mxu0 %v1735
    %v2111 = vpop.f32.mrb[0].mxu0
    %v2112 = vadd.f32 %v1864, %v2111
    %v2113 = vpop.f32.mrb[0].mxu0
    %v2114 = vadd.f32 %v1868, %v2113
    %2115 = vmatprep.mubr.f32.mxu0 0.0
    %2116 = vmatmul.mubr.f32.gmra.mrb[0].mxu0 %v1736
    %v2117 = vpop.f32.mrb[0].mxu0
    %v2118 = vadd.f32 %v1864, %v2117
    %v2119 = vpop.f32.mrb[0].mxu0
    %v2120 = vadd.f32 %v1868, %v2119
    %2121 = vmatprep.mubr.f32.mxu0 0.0
    %2122 = vmatmul.mubr.f32.gmra.mrb[0].mxu0 %v1737
    %v2123 = vpop.f32.mrb[0].mxu0
    %v2124 = vadd.f32 %v1864, %v2123
    %v2125 = vpop.f32.mrb[0].mxu0
    %v2126 = vadd.f32 %v1868, %v2125
    %2127 = vmatprep.mubr.f32.mxu0 0.0
    %2128 = vmatmul.mubr.f32.gmra.mrb[0].mxu0 %v1738
    %v2129 = vpop.f32.mrb[0].mxu0
    %v2130 = vadd.f32 %v1864, %v2129
    %v2131 = vpop.f32.mrb[0].mxu0
    %v2132 = vadd.f32 %v1868, %v2131
    %2133 = vmatprep.mubr.f32.mxu0 0.0
    %2134 = vmatmul.mubr.f32.gmra.mrb[0].mxu0 %v1739
    %v2135 = vpop.f32.mrb[0].mxu0
    %v2136 = vadd.f32 %v1864, %v2135
    %v2137 = vpop.f32.mrb[0].mxu0
    %v2138 = vadd.f32 %v1868, %v2137
    %2139 = vmatprep.mubr.f32.mxu0 0.0
    %2140 = vmatmul.mubr.f32.gmra.mrb[0].mxu0 %v1740
    %v2141 = vpop.f32.mrb[0].mxu0
    %v2142 = vadd.f32 %v1864, %v2141
    %v2143 = vpop.f32.mrb[0].mxu0
    %v2144 = vadd.f32 %v1868, %v2143
    %2145 = vmatprep.mubr.f32.mxu0 0.0
    %2146 = vmatmul.mubr.f32.gmra.mrb[0].mxu0 %v1741
    %v2147 = vpop.f32.mrb[0].mxu0
    %v2148 = vadd.f32 %v1864, %v2147
    %v2149 = vpop.f32.mrb[0].mxu0
    %v2150 = vadd.f32 %v1868, %v2149
    %2151 = vmatprep.mubr.f32.mxu0 0.0
    %2152 = vmatmul.mubr.f32.gmra.mrb[0].mxu0 %v1742
    %v2153 = vpop.f32.mrb[0].mxu0
    %v2154 = vadd.f32 %v1864, %v2153
    %v2155 = vpop.f32.mrb[0].mxu0
    %v2156 = vadd.f32 %v1868, %v2155
    %2157 = vmatprep.mubr.f32.mxu0 0.0
    %2158 = vmatmul.mubr.f32.gmra.mrb[0].mxu0 %v1743
    %v2159 = vpop.f32.mrb[0].mxu0
    %v2160 = vadd.f32 %v1864, %v2159
    %v2161 = vpop.f32.mrb[0].mxu0
    %v2162 = vadd.f32 %v1868, %v2161
    %2163 = vmatprep.mubr.f32.mxu0 0.0
    %2164 = vmatmul.mubr.f32.gmra.mrb[0].mxu0 %v1744
    %v2165 = vpop.f32.mrb[0].mxu0
    %v2166 = vadd.f32 %v1864, %v2165
    %v2167 = vpop.f32.mrb[0].mxu0
    %v2168 = vadd.f32 %v1868, %v2167
    %2169 = vmatprep.mubr.f32.mxu0 0.0
    %2170 = vmatmul.mubr.f32.gmra.mrb[0].mxu0 %v1745
    %v2171 = vpop.f32.mrb[0].mxu0
    %v2172 = vadd.f32 %v1864, %v2171
    %v2173 = vpop.f32.mrb[0].mxu0
    %v2174 = vadd.f32 %v1868, %v2173
    %2175 = vmatprep.mubr.f32.mxu0 0.0
    %2176 = vmatmul.mubr.f32.gmra.mrb[0].mxu0 %v1746
    %v2177 = vpop.f32.mrb[0].mxu0
    %v2178 = vadd.f32 %v1864, %v2177
    %v2179 = vpop.f32.mrb[0].mxu0
    %v2180 = vadd.f32 %v1868, %v2179
    %2181 = vmatprep.mubr.f32.mxu0 0.0
    %2182 = vmatmul.mubr.f32.gmra.mrb[0].mxu0 %v1747
    %v2183 = vpop.f32.mrb[0].mxu0
    %v2184 = vadd.f32 %v1864, %v2183
    %v2185 = vpop.f32.mrb[0].mxu0
    %v2186 = vadd.f32 %v1868, %v2185
    %2187 = vmatprep.mubr.f32.mxu0 0.0
    %2188 = vmatmul.mubr.f32.gmra.mrb[0].mxu0 %v1748
    %v2189 = vpop.f32.mrb[0].mxu0
    %v2190 = vadd.f32 %v1864, %v2189
    %v2191 = vpop.f32.mrb[0].mxu0
    %v2192 = vadd.f32 %v1868, %v2191
    %2193 = vmatprep.mubr.f32.mxu0 0.0
    %2194 = vmatmul.mubr.f32.gmra.mrb[0].mxu0 %v1749
    %v2195 = vpop.f32.mrb[0].mxu0
    %v2196 = vadd.f32 %v1864, %v2195
    %v2197 = vpop.f32.mrb[0].mxu0
    %v2198 = vadd.f32 %v1868, %v2197
    %2199 = vdwg.mxu0
    %2200 = vmatprep.subr.mxu0 0.0
    %2201 = vmatpush1.msra.mxu0 %v1773
    %2202 = vmatprep.subr.mxu0 0.0
    %2203 = vmatpush1.msra.mxu0 %v1778
    %2204 = vmatprep.subr.mxu0 0.0
    %2205 = vmatpush1.msra.mxu0 %v1783
    %2206 = vmatprep.subr.mxu0 0.0
    %2207 = vmatpush1.msra.mxu0 %v1788
    %2208 = vmatprep.subr.mxu0 0.0
    %2209 = vmatpush1.msra.mxu0 %v1793
    %2210 = vmatprep.subr.mxu0 0.0
    %2211 = vmatpush1.msra.mxu0 %v1798
    %2212 = vmatprep.subr.mxu0 0.0
    %2213 = vmatpush1.msra.mxu0 %v1803
    %2214 = vmatprep.subr.mxu0 0.0
    %2215 = vmatpush1.msra.mxu0 %v1808
    %2216 = vmatprep.subr.mxu0 0.0
    %2217 = vmatpush1.msra.mxu0 %v1813
    %2218 = vmatprep.subr.mxu0 0.0
    %2219 = vmatpush1.msra.mxu0 %v1818
    %2220 = vmatprep.subr.mxu0 0.0
    %2221 = vmatpush1.msra.mxu0 %v1823
    %2222 = vmatprep.subr.mxu0 0.0
    %2223 = vmatpush1.msra.mxu0 %v1828
    %2224 = vmatprep.subr.mxu0 0.0
    %2225 = vmatpush1.msra.mxu0 %v1833
    %2226 = vmatprep.subr.mxu0 0.0
    %2227 = vmatpush1.msra.mxu0 %v1838
    %2228 = vmatprep.subr.mxu0 0.0
    %2229 = vmatpush1.msra.mxu0 %v1843
    %2230 = vmatprep.subr.mxu0 0.0
    %2231 = vmatpush1.msra.mxu0 %v1848
    %2232 = vmatprep.subr.mxu0 0.0
    %2233 = vmatpush1.msra.mxu0 0.0
    %2234 = vmatprep.subr.mxu0 0.0
    %2235 = vmatpush1.msra.mxu0 0.0
    %2236 = vmatprep.subr.mxu0 0.0
    %2237 = vmatpush1.msra.mxu0 0.0
    %2238 = vmatprep.subr.mxu0 0.0
    %2239 = vmatpush1.msra.mxu0 0.0
    %2240 = vmatprep.subr.mxu0 0.0
    %2241 = vmatpush1.msra.mxu0 0.0
    %2242 = vmatprep.subr.mxu0 0.0
    %2243 = vmatpush1.msra.mxu0 0.0
    %2244 = vmatprep.subr.mxu0 0.0
    %2245 = vmatpush1.msra.mxu0 0.0
    %2246 = vmatprep.subr.mxu0 0.0
    %2247 = vmatpush1.msra.mxu0 0.0
    %2248 = vmatprep.subr.mxu0 0.0
    %2249 = vmatpush1.msra.mxu0 0.0
    %2250 = vmatprep.subr.mxu0 0.0
    %2251 = vmatpush1.msra.mxu0 0.0
    %2252 = vmatprep.subr.mxu0 0.0
    %2253 = vmatpush1.msra.mxu0 0.0
    %2254 = vmatprep.subr.mxu0 0.0
    %2255 = vmatpush1.msra.mxu0 0.0
    %2256 = vmatprep.subr.mxu0 0.0
    %2257 = vmatpush1.msra.mxu0 0.0
    %2258 = vmatprep.subr.mxu0 0.0
    %2259 = vmatpush1.msra.mxu0 0.0
    %2260 = vmatprep.subr.mxu0 0.0
    %2261 = vmatpush1.msra.mxu0 0.0
    %2262 = vmatprep.subr.mxu0 0.0
    %2263 = vmatpush1.msra.mxu0 0.0
    %2264 = vmatprep.mubr.f32.mxu0 0.0
    %2265 = vmatmul.mubr.f32.gmra.mrb[0].mxu0 %v1734
    %v2266 = vpop.f32.mrb[0].mxu0
    %v2267 = vadd.f32 %v1872, %v2266
    %v2268 = vpop.f32.mrb[0].mxu0
    %2269 = vmatprep.mubr.f32.mxu0 0.0
    %2270 = vmatmul.mubr.f32.gmra.mrb[0].mxu0 %v1735
    %v2271 = vpop.f32.mrb[0].mxu0
    %v2272 = vadd.f32 %v1872, %v2271
    %v2273 = vpop.f32.mrb[0].mxu0
    %2274 = vmatprep.mubr.f32.mxu0 0.0
    %2275 = vmatmul.mubr.f32.gmra.mrb[0].mxu0 %v1736
    %v2276 = vpop.f32.mrb[0].mxu0
    %v2277 = vadd.f32 %v1872, %v2276
    %v2278 = vpop.f32.mrb[0].mxu0
    %2279 = vmatprep.mubr.f32.mxu0 0.0
    %2280 = vmatmul.mubr.f32.gmra.mrb[0].mxu0 %v1737
    %v2281 = vpop.f32.mrb[0].mxu0
    %v2282 = vadd.f32 %v1872, %v2281
    %v2283 = vpop.f32.mrb[0].mxu0
    %2284 = vmatprep.mubr.f32.mxu0 0.0
    %2285 = vmatmul.mubr.f32.gmra.mrb[0].mxu0 %v1738
    %v2286 = vpop.f32.mrb[0].mxu0
    %v2287 = vadd.f32 %v1872, %v2286
    %v2288 = vpop.f32.mrb[0].mxu0
    %2289 = vmatprep.mubr.f32.mxu0 0.0
    %2290 = vmatmul.mubr.f32.gmra.mrb[0].mxu0 %v1739
    %v2291 = vpop.f32.mrb[0].mxu0
    %v2292 = vadd.f32 %v1872, %v2291
    %v2293 = vpop.f32.mrb[0].mxu0
    %2294 = vmatprep.mubr.f32.mxu0 0.0
    %2295 = vmatmul.mubr.f32.gmra.mrb[0].mxu0 %v1740
    %v2296 = vpop.f32.mrb[0].mxu0
    %v2297 = vadd.f32 %v1872, %v2296
    %v2298 = vpop.f32.mrb[0].mxu0
    %2299 = vmatprep.mubr.f32.mxu0 0.0
    %2300 = vmatmul.mubr.f32.gmra.mrb[0].mxu0 %v1741
    %v2301 = vpop.f32.mrb[0].mxu0
    %v2302 = vadd.f32 %v1872, %v2301
    %v2303 = vpop.f32.mrb[0].mxu0
    %2304 = vmatprep.mubr.f32.mxu0 0.0
    %2305 = vmatmul.mubr.f32.gmra.mrb[0].mxu0 %v1742
    %v2306 = vpop.f32.mrb[0].mxu0
    %v2307 = vadd.f32 %v1872, %v2306
    %v2308 = vpop.f32.mrb[0].mxu0
    %2309 = vmatprep.mubr.f32.mxu0 0.0
    %2310 = vmatmul.mubr.f32.gmra.mrb[0].mxu0 %v1743
    %v2311 = vpop.f32.mrb[0].mxu0
    %v2312 = vadd.f32 %v1872, %v2311
    %v2313 = vpop.f32.mrb[0].mxu0
    %2314 = vmatprep.mubr.f32.mxu0 0.0
    %2315 = vmatmul.mubr.f32.gmra.mrb[0].mxu0 %v1744
    %v2316 = vpop.f32.mrb[0].mxu0
    %v2317 = vadd.f32 %v1872, %v2316
    %v2318 = vpop.f32.mrb[0].mxu0
    %2319 = vmatprep.mubr.f32.mxu0 0.0
    %2320 = vmatmul.mubr.f32.gmra.mrb[0].mxu0 %v1745
    %v2321 = vpop.f32.mrb[0].mxu0
    %v2322 = vadd.f32 %v1872, %v2321
    %v2323 = vpop.f32.mrb[0].mxu0
    %2324 = vmatprep.mubr.f32.mxu0 0.0
    %2325 = vmatmul.mubr.f32.gmra.mrb[0].mxu0 %v1746
    %v2326 = vpop.f32.mrb[0].mxu0
    %v2327 = vadd.f32 %v1872, %v2326
    %v2328 = vpop.f32.mrb[0].mxu0
    %2329 = vmatprep.mubr.f32.mxu0 0.0
    %2330 = vmatmul.mubr.f32.gmra.mrb[0].mxu0 %v1747
    %v2331 = vpop.f32.mrb[0].mxu0
    %v2332 = vadd.f32 %v1872, %v2331
    %v2333 = vpop.f32.mrb[0].mxu0
    %2334 = vmatprep.mubr.f32.mxu0 0.0
    %2335 = vmatmul.mubr.f32.gmra.mrb[0].mxu0 %v1748
    %v2336 = vpop.f32.mrb[0].mxu0
    %v2337 = vadd.f32 %v1872, %v2336
    %v2338 = vpop.f32.mrb[0].mxu0
    %2339 = vmatprep.mubr.f32.mxu0 0.0
    %2340 = vmatmul.mubr.f32.gmra.mrb[0].mxu0 %v1749
    %v2341 = vpop.f32.mrb[0].mxu0
    %v2342 = vadd.f32 %v1872, %v2341
    %v2343 = vpop.f32.mrb[0].mxu0
    %2344 = vdwg.mxu0
    %s2345 = smul.u32 %s1729, 128
    %s2346 = scalar_lea.vmem %s41, %s2345
    %v2347 = vld [vmem:[%s2346] sm:$0xff]
    %v2348 = vld [vmem:[%s2346 + $0x8] sm:$0xff]
    %v2349 = vld [vmem:[%s2346 + $0x10] sm:$0xff]
    %v2350 = vld [vmem:[%s2346 + $0x18] sm:$0xff]
    %v2351 = vld [vmem:[%s2346 + $0x20] sm:$0xff]
    %v2352 = vld [vmem:[%s2346 + $0x28] sm:$0xff]
    %v2353 = vld [vmem:[%s2346 + $0x30] sm:$0xff]
    %v2354 = vld [vmem:[%s2346 + $0x38] sm:$0xff]
    %v2355 = vld [vmem:[%s2346 + $0x40] sm:$0xff]
    %v2356 = vld [vmem:[%s2346 + $0x48] sm:$0xff]
    %v2357 = vld [vmem:[%s2346 + $0x50] sm:$0xff]
    %v2358 = vld [vmem:[%s2346 + $0x58] sm:$0xff]
    %v2359 = vld [vmem:[%s2346 + $0x60] sm:$0xff]
    %v2360 = vld [vmem:[%s2346 + $0x68] sm:$0xff]
    %v2361 = vld [vmem:[%s2346 + $0x70] sm:$0xff]
    %v2362 = vld [vmem:[%s2346 + $0x78] sm:$0xff]
    %s2363 = scalar_lea.vmem %s43, %s1729
    %v2364 = vld [vmem:[%s2363] sm:$0x1]
    %v2366 = vlaneseq
    %v2367 = vshrl.u32 %v2366, 7
    %v2368 = vsub.s32 0, %v2367
    %v2369 = vrot.slane %v2364, %v2368
    %2371 = vmatprep.subr.mxu0 0.0
    %2372 = vmatpush1.msra.mxu0 %v2347
    %2373 = vmatprep.subr.mxu0 0.0
    %2374 = vmatpush1.msra.mxu0 %v2348
    %2375 = vmatprep.subr.mxu0 0.0
    %2376 = vmatpush1.msra.mxu0 %v2349
    %2377 = vmatprep.subr.mxu0 0.0
    %2378 = vmatpush1.msra.mxu0 %v2350
    %2379 = vmatprep.subr.mxu0 0.0
    %2380 = vmatpush1.msra.mxu0 %v2351
    %2381 = vmatprep.subr.mxu0 0.0
    %2382 = vmatpush1.msra.mxu0 %v2352
    %2383 = vmatprep.subr.mxu0 0.0
    %2384 = vmatpush1.msra.mxu0 %v2353
    %2385 = vmatprep.subr.mxu0 0.0
    %2386 = vmatpush1.msra.mxu0 %v2354
    %2387 = vmatprep.subr.mxu0 0.0
    %2388 = vmatpush1.msra.mxu0 %v2355
    %2389 = vmatprep.subr.mxu0 0.0
    %2390 = vmatpush1.msra.mxu0 %v2356
    %2391 = vmatprep.subr.mxu0 0.0
    %2392 = vmatpush1.msra.mxu0 %v2357
    %2393 = vmatprep.subr.mxu0 0.0
    %2394 = vmatpush1.msra.mxu0 %v2358
    %2395 = vmatprep.subr.mxu0 0.0
    %2396 = vmatpush1.msra.mxu0 %v2359
    %2397 = vmatprep.subr.mxu0 0.0
    %2398 = vmatpush1.msra.mxu0 %v2360
    %2399 = vmatprep.subr.mxu0 0.0
    %2400 = vmatpush1.msra.mxu0 %v2361
    %2401 = vmatprep.subr.mxu0 0.0
    %2402 = vmatpush1.msra.mxu0 %v2362
    %2403 = vmatprep.subr.mxu0 0.0
    %2404 = vmatpush1.msra.mxu0 0.0
    %2405 = vmatprep.subr.mxu0 0.0
    %2406 = vmatpush1.msra.mxu0 0.0
    %2407 = vmatprep.subr.mxu0 0.0
    %2408 = vmatpush1.msra.mxu0 0.0
    %2409 = vmatprep.subr.mxu0 0.0
    %2410 = vmatpush1.msra.mxu0 0.0
    %2411 = vmatprep.subr.mxu0 0.0
    %2412 = vmatpush1.msra.mxu0 0.0
    %2413 = vmatprep.subr.mxu0 0.0
    %2414 = vmatpush1.msra.mxu0 0.0
    %2415 = vmatprep.subr.mxu0 0.0
    %2416 = vmatpush1.msra.mxu0 0.0
    %2417 = vmatprep.subr.mxu0 0.0
    %2418 = vmatpush1.msra.mxu0 0.0
    %2419 = vmatprep.subr.mxu0 0.0
    %2420 = vmatpush1.msra.mxu0 0.0
    %2421 = vmatprep.subr.mxu0 0.0
    %2422 = vmatpush1.msra.mxu0 0.0
    %2423 = vmatprep.subr.mxu0 0.0
    %2424 = vmatpush1.msra.mxu0 0.0
    %2425 = vmatprep.subr.mxu0 0.0
    %2426 = vmatpush1.msra.mxu0 0.0
    %2427 = vmatprep.subr.mxu0 0.0
    %2428 = vmatpush1.msra.mxu0 0.0
    %2429 = vmatprep.subr.mxu0 0.0
    %2430 = vmatpush1.msra.mxu0 0.0
    %2431 = vmatprep.subr.mxu0 0.0
    %2432 = vmatpush1.msra.mxu0 0.0
    %2433 = vmatprep.subr.mxu0 0.0
    %2434 = vmatpush1.msra.mxu0 0.0
    %2435 = vmatprep.mubr.f32.mxu0 0.0
    %2436 = vmatmul.mubr.f32.gmra.mrb[0].mxu0 %v1750
    %v2437 = vpop.f32.mrb[0].mxu0
    %v2438 = vadd.f32 %v2369, %v2437
    %v2439 = vpop.f32.mrb[0].mxu0
    %2440 = vmatprep.mubr.f32.mxu0 0.0
    %2441 = vmatmul.mubr.f32.gmra.mrb[0].mxu0 %v1751
    %v2442 = vpop.f32.mrb[0].mxu0
    %v2443 = vadd.f32 %v2369, %v2442
    %v2444 = vpop.f32.mrb[0].mxu0
    %2445 = vmatprep.mubr.f32.mxu0 0.0
    %2446 = vmatmul.mubr.f32.gmra.mrb[0].mxu0 %v1752
    %v2447 = vpop.f32.mrb[0].mxu0
    %v2448 = vadd.f32 %v2369, %v2447
    %v2449 = vpop.f32.mrb[0].mxu0
    %2450 = vmatprep.mubr.f32.mxu0 0.0
    %2451 = vmatmul.mubr.f32.gmra.mrb[0].mxu0 %v1753
    %v2452 = vpop.f32.mrb[0].mxu0
    %v2453 = vadd.f32 %v2369, %v2452
    %v2454 = vpop.f32.mrb[0].mxu0
    %2455 = vmatprep.mubr.f32.mxu0 0.0
    %2456 = vmatmul.mubr.f32.gmra.mrb[0].mxu0 %v1754
    %v2457 = vpop.f32.mrb[0].mxu0
    %v2458 = vadd.f32 %v2369, %v2457
    %v2459 = vpop.f32.mrb[0].mxu0
    %2460 = vmatprep.mubr.f32.mxu0 0.0
    %2461 = vmatmul.mubr.f32.gmra.mrb[0].mxu0 %v1755
    %v2462 = vpop.f32.mrb[0].mxu0
    %v2463 = vadd.f32 %v2369, %v2462
    %v2464 = vpop.f32.mrb[0].mxu0
    %2465 = vmatprep.mubr.f32.mxu0 0.0
    %2466 = vmatmul.mubr.f32.gmra.mrb[0].mxu0 %v1756
    %v2467 = vpop.f32.mrb[0].mxu0
    %v2468 = vadd.f32 %v2369, %v2467
    %v2469 = vpop.f32.mrb[0].mxu0
    %2470 = vmatprep.mubr.f32.mxu0 0.0
    %2471 = vmatmul.mubr.f32.gmra.mrb[0].mxu0 %v1757
    %v2472 = vpop.f32.mrb[0].mxu0
    %v2473 = vadd.f32 %v2369, %v2472
    %v2474 = vpop.f32.mrb[0].mxu0
    %2475 = vmatprep.mubr.f32.mxu0 0.0
    %2476 = vmatmul.mubr.f32.gmra.mrb[0].mxu0 %v1758
    %v2477 = vpop.f32.mrb[0].mxu0
    %v2478 = vadd.f32 %v2369, %v2477
    %v2479 = vpop.f32.mrb[0].mxu0
    %2480 = vmatprep.mubr.f32.mxu0 0.0
    %2481 = vmatmul.mubr.f32.gmra.mrb[0].mxu0 %v1759
    %v2482 = vpop.f32.mrb[0].mxu0
    %v2483 = vadd.f32 %v2369, %v2482
    %v2484 = vpop.f32.mrb[0].mxu0
    %2485 = vmatprep.mubr.f32.mxu0 0.0
    %2486 = vmatmul.mubr.f32.gmra.mrb[0].mxu0 %v1760
    %v2487 = vpop.f32.mrb[0].mxu0
    %v2488 = vadd.f32 %v2369, %v2487
    %v2489 = vpop.f32.mrb[0].mxu0
    %2490 = vmatprep.mubr.f32.mxu0 0.0
    %2491 = vmatmul.mubr.f32.gmra.mrb[0].mxu0 %v1761
    %v2492 = vpop.f32.mrb[0].mxu0
    %v2493 = vadd.f32 %v2369, %v2492
    %v2494 = vpop.f32.mrb[0].mxu0
    %2495 = vmatprep.mubr.f32.mxu0 0.0
    %2496 = vmatmul.mubr.f32.gmra.mrb[0].mxu0 %v1762
    %v2497 = vpop.f32.mrb[0].mxu0
    %v2498 = vadd.f32 %v2369, %v2497
    %v2499 = vpop.f32.mrb[0].mxu0
    %2500 = vmatprep.mubr.f32.mxu0 0.0
    %2501 = vmatmul.mubr.f32.gmra.mrb[0].mxu0 %v1763
    %v2502 = vpop.f32.mrb[0].mxu0
    %v2503 = vadd.f32 %v2369, %v2502
    %v2504 = vpop.f32.mrb[0].mxu0
    %2505 = vmatprep.mubr.f32.mxu0 0.0
    %2506 = vmatmul.mubr.f32.gmra.mrb[0].mxu0 %v1764
    %v2507 = vpop.f32.mrb[0].mxu0
    %v2508 = vadd.f32 %v2369, %v2507
    %v2509 = vpop.f32.mrb[0].mxu0
    %2510 = vmatprep.mubr.f32.mxu0 0.0
    %2511 = vmatmul.mubr.f32.gmra.mrb[0].mxu0 %v1765
    %v2512 = vpop.f32.mrb[0].mxu0
    %v2513 = vadd.f32 %v2369, %v2512
    %v2514 = vpop.f32.mrb[0].mxu0
    %2515 = vdwg.mxu0
    %v2516 = vpack.c.bf16 %v1953, %v1947
    %v2517 = vpack.c.bf16 %v2112, %v2106
    %v2518 = vpack.c.bf16 %v2114, %v2108
    %v2519 = vpack.c.bf16 %v1965, %v1959
    %v2520 = vpack.c.bf16 %v2124, %v2118
    %v2521 = vpack.c.bf16 %v2126, %v2120
    %v2522 = vpack.c.bf16 %v1977, %v1971
    %v2523 = vpack.c.bf16 %v2136, %v2130
    %v2524 = vpack.c.bf16 %v2138, %v2132
    %v2525 = vpack.c.bf16 %v1989, %v1983
    %v2526 = vpack.c.bf16 %v2148, %v2142
    %v2527 = vpack.c.bf16 %v2150, %v2144
    %v2528 = vpack.c.bf16 %v2001, %v1995
    %v2529 = vpack.c.bf16 %v2160, %v2154
    %v2530 = vpack.c.bf16 %v2162, %v2156
    %v2531 = vpack.c.bf16 %v2013, %v2007
    %v2532 = vpack.c.bf16 %v2172, %v2166
    %v2533 = vpack.c.bf16 %v2174, %v2168
    %v2534 = vpack.c.bf16 %v2025, %v2019
    %v2535 = vpack.c.bf16 %v2184, %v2178
    %v2536 = vpack.c.bf16 %v2186, %v2180
    %v2537 = vpack.c.bf16 %v2037, %v2031
    %v2538 = vpack.c.bf16 %v2196, %v2190
    %v2539 = vpack.c.bf16 %v2198, %v2192
    %2540 = vmatprep.subr.bf16.mxu0 %v2517
    %2541 = vmatpush1.bf16.msra.mxu0 %v2516
    %2542 = vmatprep.subr.bf16.mxu0 %v2520
    %2543 = vmatpush1.bf16.msra.mxu0 %v2519
    %2544 = vmatprep.subr.bf16.mxu0 %v2523
    %2545 = vmatpush1.bf16.msra.mxu0 %v2522
    %2546 = vmatprep.subr.bf16.mxu0 %v2526
    %2547 = vmatpush1.bf16.msra.mxu0 %v2525
    %2548 = vmatprep.subr.bf16.mxu0 %v2529
    %2549 = vmatpush1.bf16.msra.mxu0 %v2528
    %2550 = vmatprep.subr.bf16.mxu0 %v2532
    %2551 = vmatpush1.bf16.msra.mxu0 %v2531
    %2552 = vmatprep.subr.bf16.mxu0 %v2535
    %2553 = vmatpush1.bf16.msra.mxu0 %v2534
    %2554 = vmatprep.subr.bf16.mxu0 %v2538
    %2555 = vmatpush1.bf16.msra.mxu0 %v2537
    %2556 = vmatprep.subr.bf16.mxu0 0
    %2557 = vmatpush1.bf16.msra.mxu0 0
    %2558 = vmatprep.subr.bf16.mxu0 0
    %2559 = vmatpush1.bf16.msra.mxu0 0
    %2560 = vmatprep.subr.bf16.mxu0 0
    %2561 = vmatpush1.bf16.msra.mxu0 0
    %2562 = vmatprep.subr.bf16.mxu0 0
    %2563 = vmatpush1.bf16.msra.mxu0 0
    %2564 = vmatprep.subr.bf16.mxu0 0
    %2565 = vmatpush1.bf16.msra.mxu0 0
    %2566 = vmatprep.subr.bf16.mxu0 0
    %2567 = vmatpush1.bf16.msra.mxu0 0
    %2568 = vmatprep.subr.bf16.mxu0 0
    %2569 = vmatpush1.bf16.msra.mxu0 0
    %2570 = vmatprep.subr.bf16.mxu0 0
    %2571 = vmatpush1.bf16.msra.mxu0 0
    %2572 = vmatprep.mubr.bf16.mxu0 0
    %2573 = vmatmul.mubr.bf16.gmra.mrb[0].mxu0 %v250
    %v2574 = vpop.f32.mrb[0].mxu0
    %v2575 = vadd.f32 0.0, %v2574
    %v2576 = vpop.f32.mrb[0].mxu0
    %v2577 = vadd.f32 0.0, %v2576
    %v2578 = vpop.f32.mrb[0].mxu0
    %v2579 = vadd.f32 0.0, %v2578
    %v2580 = vpop.f32.mrb[0].mxu0
    %v2581 = vadd.f32 0.0, %v2580
    %2582 = vmatprep.mubr.bf16.mxu0 0
    %2583 = vmatmul.mubr.bf16.gmra.mrb[0].mxu0 %v251
    %v2584 = vpop.f32.mrb[0].mxu0
    %v2585 = vadd.f32 0.0, %v2584
    %v2586 = vpop.f32.mrb[0].mxu0
    %v2587 = vadd.f32 0.0, %v2586
    %v2588 = vpop.f32.mrb[0].mxu0
    %v2589 = vadd.f32 0.0, %v2588
    %v2590 = vpop.f32.mrb[0].mxu0
    %v2591 = vadd.f32 0.0, %v2590
    %2592 = vmatprep.mubr.bf16.mxu0 0
    %2593 = vmatmul.mubr.bf16.gmra.mrb[0].mxu0 %v252
    %v2594 = vpop.f32.mrb[0].mxu0
    %v2595 = vadd.f32 0.0, %v2594
    %v2596 = vpop.f32.mrb[0].mxu0
    %v2597 = vadd.f32 0.0, %v2596
    %v2598 = vpop.f32.mrb[0].mxu0
    %v2599 = vadd.f32 0.0, %v2598
    %v2600 = vpop.f32.mrb[0].mxu0
    %v2601 = vadd.f32 0.0, %v2600
    %2602 = vmatprep.mubr.bf16.mxu0 0
    %2603 = vmatmul.mubr.bf16.gmra.mrb[0].mxu0 %v253
    %v2604 = vpop.f32.mrb[0].mxu0
    %v2605 = vadd.f32 0.0, %v2604
    %v2606 = vpop.f32.mrb[0].mxu0
    %v2607 = vadd.f32 0.0, %v2606
    %v2608 = vpop.f32.mrb[0].mxu0
    %v2609 = vadd.f32 0.0, %v2608
    %v2610 = vpop.f32.mrb[0].mxu0
    %v2611 = vadd.f32 0.0, %v2610
    %2612 = vmatprep.mubr.bf16.mxu0 0
    %2613 = vmatmul.mubr.bf16.gmra.mrb[0].mxu0 %v254
    %v2614 = vpop.f32.mrb[0].mxu0
    %v2615 = vadd.f32 0.0, %v2614
    %v2616 = vpop.f32.mrb[0].mxu0
    %v2617 = vadd.f32 0.0, %v2616
    %v2618 = vpop.f32.mrb[0].mxu0
    %v2619 = vadd.f32 0.0, %v2618
    %v2620 = vpop.f32.mrb[0].mxu0
    %v2621 = vadd.f32 0.0, %v2620
    %2622 = vmatprep.mubr.bf16.mxu0 0
    %2623 = vmatmul.mubr.bf16.gmra.mrb[0].mxu0 %v255
    %v2624 = vpop.f32.mrb[0].mxu0
    %v2625 = vadd.f32 0.0, %v2624
    %v2626 = vpop.f32.mrb[0].mxu0
    %v2627 = vadd.f32 0.0, %v2626
    %v2628 = vpop.f32.mrb[0].mxu0
    %v2629 = vadd.f32 0.0, %v2628
    %v2630 = vpop.f32.mrb[0].mxu0
    %v2631 = vadd.f32 0.0, %v2630
    %2632 = vmatprep.mubr.bf16.mxu0 0
    %2633 = vmatmul.mubr.bf16.gmra.mrb[0].mxu0 %v256
    %v2634 = vpop.f32.mrb[0].mxu0
    %v2635 = vadd.f32 0.0, %v2634
    %v2636 = vpop.f32.mrb[0].mxu0
    %v2637 = vadd.f32 0.0, %v2636
    %v2638 = vpop.f32.mrb[0].mxu0
    %v2639 = vadd.f32 0.0, %v2638
    %v2640 = vpop.f32.mrb[0].mxu0
    %v2641 = vadd.f32 0.0, %v2640
    %2642 = vmatprep.mubr.bf16.mxu0 0
    %2643 = vmatmul.mubr.bf16.gmra.mrb[0].mxu0 %v257
    %v2644 = vpop.f32.mrb[0].mxu0
    %v2645 = vadd.f32 0.0, %v2644
    %v2646 = vpop.f32.mrb[0].mxu0
    %v2647 = vadd.f32 0.0, %v2646
    %v2648 = vpop.f32.mrb[0].mxu0
    %v2649 = vadd.f32 0.0, %v2648
    %v2650 = vpop.f32.mrb[0].mxu0
    %v2651 = vadd.f32 0.0, %v2650
    %2652 = vdwg.mxu0
    %2653 = vmatprep.subr.bf16.mxu0 0
    %2654 = vmatpush1.bf16.msra.mxu0 %v2518
    %2655 = vmatprep.subr.bf16.mxu0 0
    %2656 = vmatpush1.bf16.msra.mxu0 %v2521
    %2657 = vmatprep.subr.bf16.mxu0 0
    %2658 = vmatpush1.bf16.msra.mxu0 %v2524
    %2659 = vmatprep.subr.bf16.mxu0 0
    %2660 = vmatpush1.bf16.msra.mxu0 %v2527
    %2661 = vmatprep.subr.bf16.mxu0 0
    %2662 = vmatpush1.bf16.msra.mxu0 %v2530
    %2663 = vmatprep.subr.bf16.mxu0 0
    %2664 = vmatpush1.bf16.msra.mxu0 %v2533
    %2665 = vmatprep.subr.bf16.mxu0 0
    %2666 = vmatpush1.bf16.msra.mxu0 %v2536
    %2667 = vmatprep.subr.bf16.mxu0 0
    %2668 = vmatpush1.bf16.msra.mxu0 %v2539
    %2669 = vmatprep.subr.bf16.mxu0 0
    %2670 = vmatpush1.bf16.msra.mxu0 0
    %2671 = vmatprep.subr.bf16.mxu0 0
    %2672 = vmatpush1.bf16.msra.mxu0 0
    %2673 = vmatprep.subr.bf16.mxu0 0
    %2674 = vmatpush1.bf16.msra.mxu0 0
    %2675 = vmatprep.subr.bf16.mxu0 0
    %2676 = vmatpush1.bf16.msra.mxu0 0
    %2677 = vmatprep.subr.bf16.mxu0 0
    %2678 = vmatpush1.bf16.msra.mxu0 0
    %2679 = vmatprep.subr.bf16.mxu0 0
    %2680 = vmatpush1.bf16.msra.mxu0 0
    %2681 = vmatprep.subr.bf16.mxu0 0
    %2682 = vmatpush1.bf16.msra.mxu0 0
    %2683 = vmatprep.subr.bf16.mxu0 0
    %2684 = vmatpush1.bf16.msra.mxu0 0
    %2685 = vmatprep.mubr.bf16.mxu0 0
    %2686 = vmatmul.mubr.bf16.gmra.mrb[0].mxu0 %v250
    %v2687 = vpop.f32.mrb[0].mxu0
    %v2688 = vadd.f32 0.0, %v2687
    %v2689 = vpop.f32.mrb[0].mxu0
    %v2690 = vpop.f32.mrb[0].mxu0
    %v2691 = vadd.f32 0.0, %v2690
    %v2692 = vpop.f32.mrb[0].mxu0
    %2693 = vmatprep.mubr.bf16.mxu0 0
    %2694 = vmatmul.mubr.bf16.gmra.mrb[0].mxu0 %v251
    %v2695 = vpop.f32.mrb[0].mxu0
    %v2696 = vadd.f32 0.0, %v2695
    %v2697 = vpop.f32.mrb[0].mxu0
    %v2698 = vpop.f32.mrb[0].mxu0
    %v2699 = vadd.f32 0.0, %v2698
    %v2700 = vpop.f32.mrb[0].mxu0
    %2701 = vmatprep.mubr.bf16.mxu0 0
    %2702 = vmatmul.mubr.bf16.gmra.mrb[0].mxu0 %v252
    %v2703 = vpop.f32.mrb[0].mxu0
    %v2704 = vadd.f32 0.0, %v2703
    %v2705 = vpop.f32.mrb[0].mxu0
    %v2706 = vpop.f32.mrb[0].mxu0
    %v2707 = vadd.f32 0.0, %v2706
    %v2708 = vpop.f32.mrb[0].mxu0
    %2709 = vmatprep.mubr.bf16.mxu0 0
    %2710 = vmatmul.mubr.bf16.gmra.mrb[0].mxu0 %v253
    %v2711 = vpop.f32.mrb[0].mxu0
    %v2712 = vadd.f32 0.0, %v2711
    %v2713 = vpop.f32.mrb[0].mxu0
    %v2714 = vpop.f32.mrb[0].mxu0
    %v2715 = vadd.f32 0.0, %v2714
    %v2716 = vpop.f32.mrb[0].mxu0
    %2717 = vmatprep.mubr.bf16.mxu0 0
    %2718 = vmatmul.mubr.bf16.gmra.mrb[0].mxu0 %v254
    %v2719 = vpop.f32.mrb[0].mxu0
    %v2720 = vadd.f32 0.0, %v2719
    %v2721 = vpop.f32.mrb[0].mxu0
    %v2722 = vpop.f32.mrb[0].mxu0
    %v2723 = vadd.f32 0.0, %v2722
    %v2724 = vpop.f32.mrb[0].mxu0
    %2725 = vmatprep.mubr.bf16.mxu0 0
    %2726 = vmatmul.mubr.bf16.gmra.mrb[0].mxu0 %v255
    %v2727 = vpop.f32.mrb[0].mxu0
    %v2728 = vadd.f32 0.0, %v2727
    %v2729 = vpop.f32.mrb[0].mxu0
    %v2730 = vpop.f32.mrb[0].mxu0
    %v2731 = vadd.f32 0.0, %v2730
    %v2732 = vpop.f32.mrb[0].mxu0
    %2733 = vmatprep.mubr.bf16.mxu0 0
    %2734 = vmatmul.mubr.bf16.gmra.mrb[0].mxu0 %v256
    %v2735 = vpop.f32.mrb[0].mxu0
    %v2736 = vadd.f32 0.0, %v2735
    %v2737 = vpop.f32.mrb[0].mxu0
    %v2738 = vpop.f32.mrb[0].mxu0
    %v2739 = vadd.f32 0.0, %v2738
    %v2740 = vpop.f32.mrb[0].mxu0
    %2741 = vmatprep.mubr.bf16.mxu0 0
    %2742 = vmatmul.mubr.bf16.gmra.mrb[0].mxu0 %v257
    %v2743 = vpop.f32.mrb[0].mxu0
    %v2744 = vadd.f32 0.0, %v2743
    %v2745 = vpop.f32.mrb[0].mxu0
    %v2746 = vpop.f32.mrb[0].mxu0
    %v2747 = vadd.f32 0.0, %v2746
    %v2748 = vpop.f32.mrb[0].mxu0
    %2749 = vdwg.mxu0
    %v2750 = vpack.c.bf16 %v2272, %v2267
    %v2751 = vpack.c.bf16 %v2282, %v2277
    %v2752 = vpack.c.bf16 %v2292, %v2287
    %v2753 = vpack.c.bf16 %v2302, %v2297
    %v2754 = vpack.c.bf16 %v2312, %v2307
    %v2755 = vpack.c.bf16 %v2322, %v2317
    %v2756 = vpack.c.bf16 %v2332, %v2327
    %v2757 = vpack.c.bf16 %v2342, %v2337
    %2758 = vmatprep.subr.bf16.mxu0 %v2518
    %2759 = vmatpush1.bf16.msra.mxu0 %v2517
    %2760 = vmatprep.subr.bf16.mxu0 %v2521
    %2761 = vmatpush1.bf16.msra.mxu0 %v2520
    %2762 = vmatprep.subr.bf16.mxu0 %v2524
    %2763 = vmatpush1.bf16.msra.mxu0 %v2523
    %2764 = vmatprep.subr.bf16.mxu0 %v2527
    %2765 = vmatpush1.bf16.msra.mxu0 %v2526
    %2766 = vmatprep.subr.bf16.mxu0 %v2530
    %2767 = vmatpush1.bf16.msra.mxu0 %v2529
    %2768 = vmatprep.subr.bf16.mxu0 %v2533
    %2769 = vmatpush1.bf16.msra.mxu0 %v2532
    %2770 = vmatprep.subr.bf16.mxu0 %v2536
    %2771 = vmatpush1.bf16.msra.mxu0 %v2535
    %2772 = vmatprep.subr.bf16.mxu0 %v2539
    %2773 = vmatpush1.bf16.msra.mxu0 %v2538
    %2774 = vmatprep.subr.bf16.mxu0 0
    %2775 = vmatpush1.bf16.msra.mxu0 0
    %2776 = vmatprep.subr.bf16.mxu0 0
    %2777 = vmatpush1.bf16.msra.mxu0 0
    %2778 = vmatprep.subr.bf16.mxu0 0
    %2779 = vmatpush1.bf16.msra.mxu0 0
    %2780 = vmatprep.subr.bf16.mxu0 0
    %2781 = vmatpush1.bf16.msra.mxu0 0
    %2782 = vmatprep.subr.bf16.mxu0 0
    %2783 = vmatpush1.bf16.msra.mxu0 0
    %2784 = vmatprep.subr.bf16.mxu0 0
    %2785 = vmatpush1.bf16.msra.mxu0 0
    %2786 = vmatprep.subr.bf16.mxu0 0
    %2787 = vmatpush1.bf16.msra.mxu0 0
    %2788 = vmatprep.subr.bf16.mxu0 0
    %2789 = vmatpush1.bf16.msra.mxu0 0
    %2790 = vmatprep.mubr.bf16.mxu0 0
    %2791 = vmatmul.mubr.bf16.gmra.mrb[0].mxu0 %v354
    %v2792 = vpop.f32.mrb[0].mxu0
    %v2793 = vadd.f32 0.0, %v2792
    %v2794 = vpop.f32.mrb[0].mxu0
    %v2795 = vadd.f32 0.0, %v2794
    %v2796 = vpop.f32.mrb[0].mxu0
    %v2797 = vadd.f32 0.0, %v2796
    %v2798 = vpop.f32.mrb[0].mxu0
    %v2799 = vadd.f32 0.0, %v2798
    %2800 = vmatprep.mubr.bf16.mxu0 0
    %2801 = vmatmul.mubr.bf16.gmra.mrb[0].mxu0 %v355
    %v2802 = vpop.f32.mrb[0].mxu0
    %v2803 = vadd.f32 0.0, %v2802
    %v2804 = vpop.f32.mrb[0].mxu0
    %v2805 = vadd.f32 0.0, %v2804
    %v2806 = vpop.f32.mrb[0].mxu0
    %v2807 = vadd.f32 0.0, %v2806
    %v2808 = vpop.f32.mrb[0].mxu0
    %v2809 = vadd.f32 0.0, %v2808
    %2810 = vmatprep.mubr.bf16.mxu0 0
    %2811 = vmatmul.mubr.bf16.gmra.mrb[0].mxu0 %v356
    %v2812 = vpop.f32.mrb[0].mxu0
    %v2813 = vadd.f32 0.0, %v2812
    %v2814 = vpop.f32.mrb[0].mxu0
    %v2815 = vadd.f32 0.0, %v2814
    %v2816 = vpop.f32.mrb[0].mxu0
    %v2817 = vadd.f32 0.0, %v2816
    %v2818 = vpop.f32.mrb[0].mxu0
    %v2819 = vadd.f32 0.0, %v2818
    %2820 = vmatprep.mubr.bf16.mxu0 0
    %2821 = vmatmul.mubr.bf16.gmra.mrb[0].mxu0 %v357
    %v2822 = vpop.f32.mrb[0].mxu0
    %v2823 = vadd.f32 0.0, %v2822
    %v2824 = vpop.f32.mrb[0].mxu0
    %v2825 = vadd.f32 0.0, %v2824
    %v2826 = vpop.f32.mrb[0].mxu0
    %v2827 = vadd.f32 0.0, %v2826
    %v2828 = vpop.f32.mrb[0].mxu0
    %v2829 = vadd.f32 0.0, %v2828
    %2830 = vmatprep.mubr.bf16.mxu0 0
    %2831 = vmatmul.mubr.bf16.gmra.mrb[0].mxu0 %v358
    %v2832 = vpop.f32.mrb[0].mxu0
    %v2833 = vadd.f32 0.0, %v2832
    %v2834 = vpop.f32.mrb[0].mxu0
    %v2835 = vadd.f32 0.0, %v2834
    %v2836 = vpop.f32.mrb[0].mxu0
    %v2837 = vadd.f32 0.0, %v2836
    %v2838 = vpop.f32.mrb[0].mxu0
    %v2839 = vadd.f32 0.0, %v2838
    %2840 = vmatprep.mubr.bf16.mxu0 0
    %2841 = vmatmul.mubr.bf16.gmra.mrb[0].mxu0 %v359
    %v2842 = vpop.f32.mrb[0].mxu0
    %v2843 = vadd.f32 0.0, %v2842
    %v2844 = vpop.f32.mrb[0].mxu0
    %v2845 = vadd.f32 0.0, %v2844
    %v2846 = vpop.f32.mrb[0].mxu0
    %v2847 = vadd.f32 0.0, %v2846
    %v2848 = vpop.f32.mrb[0].mxu0
    %v2849 = vadd.f32 0.0, %v2848
    %2850 = vmatprep.mubr.bf16.mxu0 0
    %2851 = vmatmul.mubr.bf16.gmra.mrb[0].mxu0 %v360
    %v2852 = vpop.f32.mrb[0].mxu0
    %v2853 = vadd.f32 0.0, %v2852
    %v2854 = vpop.f32.mrb[0].mxu0
    %v2855 = vadd.f32 0.0, %v2854
    %v2856 = vpop.f32.mrb[0].mxu0
    %v2857 = vadd.f32 0.0, %v2856
    %v2858 = vpop.f32.mrb[0].mxu0
    %v2859 = vadd.f32 0.0, %v2858
    %2860 = vmatprep.mubr.bf16.mxu0 0
    %2861 = vmatmul.mubr.bf16.gmra.mrb[0].mxu0 %v361
    %v2862 = vpop.f32.mrb[0].mxu0
    %v2863 = vadd.f32 0.0, %v2862
    %v2864 = vpop.f32.mrb[0].mxu0
    %v2865 = vadd.f32 0.0, %v2864
    %v2866 = vpop.f32.mrb[0].mxu0
    %v2867 = vadd.f32 0.0, %v2866
    %v2868 = vpop.f32.mrb[0].mxu0
    %v2869 = vadd.f32 0.0, %v2868
    %2870 = vdwg.mxu0
    %2871 = vmatprep.subr.bf16.mxu0 0
    %2872 = vmatpush1.bf16.msra.mxu0 %v2750
    %2873 = vmatprep.subr.bf16.mxu0 0
    %2874 = vmatpush1.bf16.msra.mxu0 %v2751
    %2875 = vmatprep.subr.bf16.mxu0 0
    %2876 = vmatpush1.bf16.msra.mxu0 %v2752
    %2877 = vmatprep.subr.bf16.mxu0 0
    %2878 = vmatpush1.bf16.msra.mxu0 %v2753
    %2879 = vmatprep.subr.bf16.mxu0 0
    %2880 = vmatpush1.bf16.msra.mxu0 %v2754
    %2881 = vmatprep.subr.bf16.mxu0 0
    %2882 = vmatpush1.bf16.msra.mxu0 %v2755
    %2883 = vmatprep.subr.bf16.mxu0 0
    %2884 = vmatpush1.bf16.msra.mxu0 %v2756
    %2885 = vmatprep.subr.bf16.mxu0 0
    %2886 = vmatpush1.bf16.msra.mxu0 %v2757
    %2887 = vmatprep.subr.bf16.mxu0 0
    %2888 = vmatpush1.bf16.msra.mxu0 0
    %2889 = vmatprep.subr.bf16.mxu0 0
    %2890 = vmatpush1.bf16.msra.mxu0 0
    %2891 = vmatprep.subr.bf16.mxu0 0
    %2892 = vmatpush1.bf16.msra.mxu0 0
    %2893 = vmatprep.subr.bf16.mxu0 0
    %2894 = vmatpush1.bf16.msra.mxu0 0
    %2895 = vmatprep.subr.bf16.mxu0 0
    %2896 = vmatpush1.bf16.msra.mxu0 0
    %2897 = vmatprep.subr.bf16.mxu0 0
    %2898 = vmatpush1.bf16.msra.mxu0 0
    %2899 = vmatprep.subr.bf16.mxu0 0
    %2900 = vmatpush1.bf16.msra.mxu0 0
    %2901 = vmatprep.subr.bf16.mxu0 0
    %2902 = vmatpush1.bf16.msra.mxu0 0
    %2903 = vmatprep.mubr.bf16.mxu0 0
    %2904 = vmatmul.mubr.bf16.gmra.mrb[0].mxu0 %v354
    %v2905 = vpop.f32.mrb[0].mxu0
    %v2906 = vadd.f32 0.0, %v2905
    %v2907 = vpop.f32.mrb[0].mxu0
    %v2908 = vpop.f32.mrb[0].mxu0
    %v2909 = vadd.f32 0.0, %v2908
    %v2910 = vpop.f32.mrb[0].mxu0
    %2911 = vmatprep.mubr.bf16.mxu0 0
    %2912 = vmatmul.mubr.bf16.gmra.mrb[0].mxu0 %v355
    %v2913 = vpop.f32.mrb[0].mxu0
    %v2914 = vadd.f32 0.0, %v2913
    %v2915 = vpop.f32.mrb[0].mxu0
    %v2916 = vpop.f32.mrb[0].mxu0
    %v2917 = vadd.f32 0.0, %v2916
    %v2918 = vpop.f32.mrb[0].mxu0
    %2919 = vmatprep.mubr.bf16.mxu0 0
    %2920 = vmatmul.mubr.bf16.gmra.mrb[0].mxu0 %v356
    %v2921 = vpop.f32.mrb[0].mxu0
    %v2922 = vadd.f32 0.0, %v2921
    %v2923 = vpop.f32.mrb[0].mxu0
    %v2924 = vpop.f32.mrb[0].mxu0
    %v2925 = vadd.f32 0.0, %v2924
    %v2926 = vpop.f32.mrb[0].mxu0
    %2927 = vmatprep.mubr.bf16.mxu0 0
    %2928 = vmatmul.mubr.bf16.gmra.mrb[0].mxu0 %v357
    %v2929 = vpop.f32.mrb[0].mxu0
    %v2930 = vadd.f32 0.0, %v2929
    %v2931 = vpop.f32.mrb[0].mxu0
    %v2932 = vpop.f32.mrb[0].mxu0
    %v2933 = vadd.f32 0.0, %v2932
    %v2934 = vpop.f32.mrb[0].mxu0
    %2935 = vmatprep.mubr.bf16.mxu0 0
    %2936 = vmatmul.mubr.bf16.gmra.mrb[0].mxu0 %v358
    %v2937 = vpop.f32.mrb[0].mxu0
    %v2938 = vadd.f32 0.0, %v2937
    %v2939 = vpop.f32.mrb[0].mxu0
    %v2940 = vpop.f32.mrb[0].mxu0
    %v2941 = vadd.f32 0.0, %v2940
    %v2942 = vpop.f32.mrb[0].mxu0
    %2943 = vmatprep.mubr.bf16.mxu0 0
    %2944 = vmatmul.mubr.bf16.gmra.mrb[0].mxu0 %v359
    %v2945 = vpop.f32.mrb[0].mxu0
    %v2946 = vadd.f32 0.0, %v2945
    %v2947 = vpop.f32.mrb[0].mxu0
    %v2948 = vpop.f32.mrb[0].mxu0
    %v2949 = vadd.f32 0.0, %v2948
    %v2950 = vpop.f32.mrb[0].mxu0
    %2951 = vmatprep.mubr.bf16.mxu0 0
    %2952 = vmatmul.mubr.bf16.gmra.mrb[0].mxu0 %v360
    %v2953 = vpop.f32.mrb[0].mxu0
    %v2954 = vadd.f32 0.0, %v2953
    %v2955 = vpop.f32.mrb[0].mxu0
    %v2956 = vpop.f32.mrb[0].mxu0
    %v2957 = vadd.f32 0.0, %v2956
    %v2958 = vpop.f32.mrb[0].mxu0
    %2959 = vmatprep.mubr.bf16.mxu0 0
    %2960 = vmatmul.mubr.bf16.gmra.mrb[0].mxu0 %v361
    %v2961 = vpop.f32.mrb[0].mxu0
    %v2962 = vadd.f32 0.0, %v2961
    %v2963 = vpop.f32.mrb[0].mxu0
    %v2964 = vpop.f32.mrb[0].mxu0
    %v2965 = vadd.f32 0.0, %v2964
    %v2966 = vpop.f32.mrb[0].mxu0
    %2967 = vdwg.mxu0
    %s2968 = scalar_lea.vmem %s49, %s1729
    %v2969 = vld [vmem:[%s2968] sm:$0x1]
    %s2970 = scalar_lea.vmem %s51, %s1729
    %v2971 = vld [vmem:[%s2970] sm:$0x1]
    %v2972 = vadd.f32 %v2438, %v2577
    %v2973 = vadd.f32 %v2443, %v2581
    %v2974 = vadd.f32 %v2448, %v2587
    %v2975 = vadd.f32 %v2453, %v2591
    %v2976 = vadd.f32 %v2458, %v2597
    %v2977 = vadd.f32 %v2463, %v2601
    %v2978 = vadd.f32 %v2468, %v2607
    %v2979 = vadd.f32 %v2473, %v2611
    %v2980 = vadd.f32 %v2478, %v2617
    %v2981 = vadd.f32 %v2483, %v2621
    %v2982 = vadd.f32 %v2488, %v2627
    %v2983 = vadd.f32 %v2493, %v2631
    %v2984 = vadd.f32 %v2498, %v2637
    %v2985 = vadd.f32 %v2503, %v2641
    %v2986 = vadd.f32 %v2508, %v2647
    %v2987 = vadd.f32 %v2513, %v2651
    %v2988 = vadd.f32 %v2972, %v2795
    %v2989 = vadd.f32 %v2973, %v2799
    %v2990 = vadd.f32 %v2974, %v2805
    %v2991 = vadd.f32 %v2975, %v2809
    %v2992 = vadd.f32 %v2976, %v2815
    %v2993 = vadd.f32 %v2977, %v2819
    %v2994 = vadd.f32 %v2978, %v2825
    %v2995 = vadd.f32 %v2979, %v2829
    %v2996 = vadd.f32 %v2980, %v2835
    %v2997 = vadd.f32 %v2981, %v2839
    %v2998 = vadd.f32 %v2982, %v2845
    %v2999 = vadd.f32 %v2983, %v2849
    %v3000 = vadd.f32 %v2984, %v2855
    %v3001 = vadd.f32 %v2985, %v2859
    %v3002 = vadd.f32 %v2986, %v2865
    %v3003 = vadd.f32 %v2987, %v2869
    %v3004 = vmax.f32 %v2988, 0.0
    %v3005 = vmax.f32 %v2989, 0.0
    %v3006 = vmax.f32 %v2990, 0.0
    %v3007 = vmax.f32 %v2991, 0.0
    %v3008 = vmax.f32 %v2992, 0.0
    %v3009 = vmax.f32 %v2993, 0.0
    %v3010 = vmax.f32 %v2994, 0.0
    %v3011 = vmax.f32 %v2995, 0.0
    %v3012 = vmax.f32 %v2996, 0.0
    %v3013 = vmax.f32 %v2997, 0.0
    %v3014 = vmax.f32 %v2998, 0.0
    %v3015 = vmax.f32 %v2999, 0.0
    %v3016 = vmax.f32 %v3000, 0.0
    %v3017 = vmax.f32 %v3001, 0.0
    %v3018 = vmax.f32 %v3002, 0.0
    %v3019 = vmax.f32 %v3003, 0.0
    %3020 = vadd.xlane.f32.xlu0 %v3004
    %v3021 = vpop.xlane.xlu0 %3020
    %3022 = vadd.xlane.f32.xlu0 %v3005
    %v3023 = vpop.xlane.xlu0 %3022
    %3024 = vadd.xlane.f32.xlu0 %v3006
    %v3025 = vpop.xlane.xlu0 %3024
    %3026 = vadd.xlane.f32.xlu0 %v3007
    %v3027 = vpop.xlane.xlu0 %3026
    %3028 = vadd.xlane.f32.xlu0 %v3008
    %v3029 = vpop.xlane.xlu0 %3028
    %3030 = vadd.xlane.f32.xlu0 %v3009
    %v3031 = vpop.xlane.xlu0 %3030
    %3032 = vadd.xlane.f32.xlu0 %v3010
    %v3033 = vpop.xlane.xlu0 %3032
    %3034 = vadd.xlane.f32.xlu0 %v3011
    %v3035 = vpop.xlane.xlu0 %3034
    %3036 = vadd.xlane.f32.xlu0 %v3012
    %v3037 = vpop.xlane.xlu0 %3036
    %3038 = vadd.xlane.f32.xlu0 %v3013
    %v3039 = vpop.xlane.xlu0 %3038
    %3040 = vadd.xlane.f32.xlu0 %v3014
    %v3041 = vpop.xlane.xlu0 %3040
    %3042 = vadd.xlane.f32.xlu0 %v3015
    %v3043 = vpop.xlane.xlu0 %3042
    %3044 = vadd.xlane.f32.xlu0 %v3016
    %v3045 = vpop.xlane.xlu0 %3044
    %3046 = vadd.xlane.f32.xlu0 %v3017
    %v3047 = vpop.xlane.xlu0 %3046
    %3048 = vadd.xlane.f32.xlu0 %v3018
    %v3049 = vpop.xlane.xlu0 %3048
    %3050 = vadd.xlane.f32.xlu0 %v3019
    %v3051 = vpop.xlane.xlu0 %3050
    %v3052 = vmul.f32 %v3021, 0.03125
    %v3053 = vmul.f32 %v3023, 0.03125
    %v3054 = vmul.f32 %v3025, 0.03125
    %v3055 = vmul.f32 %v3027, 0.03125
    %v3056 = vmul.f32 %v3029, 0.03125
    %v3057 = vmul.f32 %v3031, 0.03125
    %v3058 = vmul.f32 %v3033, 0.03125
    %v3059 = vmul.f32 %v3035, 0.03125
    %v3060 = vmul.f32 %v3037, 0.03125
    %v3061 = vmul.f32 %v3039, 0.03125
    %v3062 = vmul.f32 %v3041, 0.03125
    %v3063 = vmul.f32 %v3043, 0.03125
    %v3064 = vmul.f32 %v3045, 0.03125
    %v3065 = vmul.f32 %v3047, 0.03125
    %v3066 = vmul.f32 %v3049, 0.03125
    %v3067 = vmul.f32 %v3051, 0.03125
    %v3068 = vmul.f32 %v3004, %v3004
    %v3069 = vmul.f32 %v3005, %v3005
    %v3070 = vmul.f32 %v3006, %v3006
    %v3071 = vmul.f32 %v3007, %v3007
    %v3072 = vmul.f32 %v3008, %v3008
    %v3073 = vmul.f32 %v3009, %v3009
    %v3074 = vmul.f32 %v3010, %v3010
    %v3075 = vmul.f32 %v3011, %v3011
    %v3076 = vmul.f32 %v3012, %v3012
    %v3077 = vmul.f32 %v3013, %v3013
    %v3078 = vmul.f32 %v3014, %v3014
    %v3079 = vmul.f32 %v3015, %v3015
    %v3080 = vmul.f32 %v3016, %v3016
    %v3081 = vmul.f32 %v3017, %v3017
    %v3082 = vmul.f32 %v3018, %v3018
    %v3083 = vmul.f32 %v3019, %v3019
    %3084 = vadd.xlane.f32.xlu0 %v3068
    %v3085 = vpop.xlane.xlu0 %3084
    %3086 = vadd.xlane.f32.xlu0 %v3069
    %v3087 = vpop.xlane.xlu0 %3086
    %3088 = vadd.xlane.f32.xlu0 %v3070
    %v3089 = vpop.xlane.xlu0 %3088
    %3090 = vadd.xlane.f32.xlu0 %v3071
    %v3091 = vpop.xlane.xlu0 %3090
    %3092 = vadd.xlane.f32.xlu0 %v3072
    %v3093 = vpop.xlane.xlu0 %3092
    %3094 = vadd.xlane.f32.xlu0 %v3073
    %v3095 = vpop.xlane.xlu0 %3094
    %3096 = vadd.xlane.f32.xlu0 %v3074
    %v3097 = vpop.xlane.xlu0 %3096
    %3098 = vadd.xlane.f32.xlu0 %v3075
    %v3099 = vpop.xlane.xlu0 %3098
    %3100 = vadd.xlane.f32.xlu0 %v3076
    %v3101 = vpop.xlane.xlu0 %3100
    %3102 = vadd.xlane.f32.xlu0 %v3077
    %v3103 = vpop.xlane.xlu0 %3102
    %3104 = vadd.xlane.f32.xlu0 %v3078
    %v3105 = vpop.xlane.xlu0 %3104
    %3106 = vadd.xlane.f32.xlu0 %v3079
    %v3107 = vpop.xlane.xlu0 %3106
    %3108 = vadd.xlane.f32.xlu0 %v3080
    %v3109 = vpop.xlane.xlu0 %3108
    %3110 = vadd.xlane.f32.xlu0 %v3081
    %v3111 = vpop.xlane.xlu0 %3110
    %3112 = vadd.xlane.f32.xlu0 %v3082
    %v3113 = vpop.xlane.xlu0 %3112
    %3114 = vadd.xlane.f32.xlu0 %v3083
    %v3115 = vpop.xlane.xlu0 %3114
    %v3116 = vmul.f32 %v3085, 0.03125
    %v3117 = vmul.f32 %v3087, 0.03125
    %v3118 = vmul.f32 %v3089, 0.03125
    %v3119 = vmul.f32 %v3091, 0.03125
    %v3120 = vmul.f32 %v3093, 0.03125
    %v3121 = vmul.f32 %v3095, 0.03125
    %v3122 = vmul.f32 %v3097, 0.03125
    %v3123 = vmul.f32 %v3099, 0.03125
    %v3124 = vmul.f32 %v3101, 0.03125
    %v3125 = vmul.f32 %v3103, 0.03125
    %v3126 = vmul.f32 %v3105, 0.03125
    %v3127 = vmul.f32 %v3107, 0.03125
    %v3128 = vmul.f32 %v3109, 0.03125
    %v3129 = vmul.f32 %v3111, 0.03125
    %v3130 = vmul.f32 %v3113, 0.03125
    %v3131 = vmul.f32 %v3115, 0.03125
    %v3132 = vmul.f32 %v3052, %v3052
    %v3133 = vmul.f32 %v3053, %v3053
    %v3134 = vmul.f32 %v3054, %v3054
    %v3135 = vmul.f32 %v3055, %v3055
    %v3136 = vmul.f32 %v3056, %v3056
    %v3137 = vmul.f32 %v3057, %v3057
    %v3138 = vmul.f32 %v3058, %v3058
    %v3139 = vmul.f32 %v3059, %v3059
    %v3140 = vmul.f32 %v3060, %v3060
    %v3141 = vmul.f32 %v3061, %v3061
    %v3142 = vmul.f32 %v3062, %v3062
    %v3143 = vmul.f32 %v3063, %v3063
    %v3144 = vmul.f32 %v3064, %v3064
    %v3145 = vmul.f32 %v3065, %v3065
    %v3146 = vmul.f32 %v3066, %v3066
    %v3147 = vmul.f32 %v3067, %v3067
    %v3148 = vsub.f32 %v3116, %v3132
    %v3149 = vsub.f32 %v3117, %v3133
    %v3150 = vsub.f32 %v3118, %v3134
    %v3151 = vsub.f32 %v3119, %v3135
    %v3152 = vsub.f32 %v3120, %v3136
    %v3153 = vsub.f32 %v3121, %v3137
    %v3154 = vsub.f32 %v3122, %v3138
    %v3155 = vsub.f32 %v3123, %v3139
    %v3156 = vsub.f32 %v3124, %v3140
    %v3157 = vsub.f32 %v3125, %v3141
    %v3158 = vsub.f32 %v3126, %v3142
    %v3159 = vsub.f32 %v3127, %v3143
    %v3160 = vsub.f32 %v3128, %v3144
    %v3161 = vsub.f32 %v3129, %v3145
    %v3162 = vsub.f32 %v3130, %v3146
    %v3163 = vsub.f32 %v3131, %v3147
    %v3164 = vmax.f32 %v3148, 0.0
    %v3165 = vmax.f32 %v3149, 0.0
    %v3166 = vmax.f32 %v3150, 0.0
    %v3167 = vmax.f32 %v3151, 0.0
    %v3168 = vmax.f32 %v3152, 0.0
    %v3169 = vmax.f32 %v3153, 0.0
    %v3170 = vmax.f32 %v3154, 0.0
    %v3171 = vmax.f32 %v3155, 0.0
    %v3172 = vmax.f32 %v3156, 0.0
    %v3173 = vmax.f32 %v3157, 0.0
    %v3174 = vmax.f32 %v3158, 0.0
    %v3175 = vmax.f32 %v3159, 0.0
    %v3176 = vmax.f32 %v3160, 0.0
    %v3177 = vmax.f32 %v3161, 0.0
    %v3178 = vmax.f32 %v3162, 0.0
    %v3179 = vmax.f32 %v3163, 0.0
    %v3180 = vsub.f32 %v3004, %v3052
    %v3181 = vsub.f32 %v3005, %v3053
    %v3182 = vsub.f32 %v3006, %v3054
    %v3183 = vsub.f32 %v3007, %v3055
    %v3184 = vsub.f32 %v3008, %v3056
    %v3185 = vsub.f32 %v3009, %v3057
    %v3186 = vsub.f32 %v3010, %v3058
    %v3187 = vsub.f32 %v3011, %v3059
    %v3188 = vsub.f32 %v3012, %v3060
    %v3189 = vsub.f32 %v3013, %v3061
    %v3190 = vsub.f32 %v3014, %v3062
    %v3191 = vsub.f32 %v3015, %v3063
    %v3192 = vsub.f32 %v3016, %v3064
    %v3193 = vsub.f32 %v3017, %v3065
    %v3194 = vsub.f32 %v3018, %v3066
    %v3195 = vsub.f32 %v3019, %v3067
    %v3196 = vadd.f32 %v3164, 1e-05
    %v3197 = vadd.f32 %v3165, 1e-05
    %v3198 = vadd.f32 %v3166, 1e-05
    %v3199 = vadd.f32 %v3167, 1e-05
    %v3200 = vadd.f32 %v3168, 1e-05
    %v3201 = vadd.f32 %v3169, 1e-05
    %v3202 = vadd.f32 %v3170, 1e-05
    %v3203 = vadd.f32 %v3171, 1e-05
    %v3204 = vadd.f32 %v3172, 1e-05
    %v3205 = vadd.f32 %v3173, 1e-05
    %v3206 = vadd.f32 %v3174, 1e-05
    %v3207 = vadd.f32 %v3175, 1e-05
    %v3208 = vadd.f32 %v3176, 1e-05
    %v3209 = vadd.f32 %v3177, 1e-05
    %v3210 = vadd.f32 %v3178, 1e-05
    %v3211 = vadd.f32 %v3179, 1e-05
    %v3212 = vrsqrt.pop %v3196
    %v3213 = vrsqrt.pop %v3197
    %v3214 = vrsqrt.pop %v3198
    %v3215 = vrsqrt.pop %v3199
    %v3216 = vrsqrt.pop %v3200
    %v3217 = vrsqrt.pop %v3201
    %v3218 = vrsqrt.pop %v3202
    %v3219 = vrsqrt.pop %v3203
    %v3220 = vrsqrt.pop %v3204
    %v3221 = vrsqrt.pop %v3205
    %v3222 = vrsqrt.pop %v3206
    %v3223 = vrsqrt.pop %v3207
    %v3224 = vrsqrt.pop %v3208
    %v3225 = vrsqrt.pop %v3209
    %v3226 = vrsqrt.pop %v3210
    %v3227 = vrsqrt.pop %v3211
    %v3228 = vmul.f32 %v3180, %v3212
    %v3229 = vmul.f32 %v3181, %v3213
    %v3230 = vmul.f32 %v3182, %v3214
    %v3231 = vmul.f32 %v3183, %v3215
    %v3232 = vmul.f32 %v3184, %v3216
    %v3233 = vmul.f32 %v3185, %v3217
    %v3234 = vmul.f32 %v3186, %v3218
    %v3235 = vmul.f32 %v3187, %v3219
    %v3236 = vmul.f32 %v3188, %v3220
    %v3237 = vmul.f32 %v3189, %v3221
    %v3238 = vmul.f32 %v3190, %v3222
    %v3239 = vmul.f32 %v3191, %v3223
    %v3240 = vmul.f32 %v3192, %v3224
    %v3241 = vmul.f32 %v3193, %v3225
    %v3242 = vmul.f32 %v3194, %v3226
    %v3243 = vmul.f32 %v3195, %v3227
    %v3245 = vlaneseq
    %v3246 = vshrl.u32 %v3245, 7
    %v3247 = vsub.s32 0, %v3246
    %v3248 = vrot.slane %v2969, %v3247
    %v3250 = vmul.f32 %v3228, %v3248
    %v3251 = vmul.f32 %v3229, %v3248
    %v3252 = vmul.f32 %v3230, %v3248
    %v3253 = vmul.f32 %v3231, %v3248
    %v3254 = vmul.f32 %v3232, %v3248
    %v3255 = vmul.f32 %v3233, %v3248
    %v3256 = vmul.f32 %v3234, %v3248
    %v3257 = vmul.f32 %v3235, %v3248
    %v3258 = vmul.f32 %v3236, %v3248
    %v3259 = vmul.f32 %v3237, %v3248
    %v3260 = vmul.f32 %v3238, %v3248
    %v3261 = vmul.f32 %v3239, %v3248
    %v3262 = vmul.f32 %v3240, %v3248
    %v3263 = vmul.f32 %v3241, %v3248
    %v3264 = vmul.f32 %v3242, %v3248
    %v3265 = vmul.f32 %v3243, %v3248
    %v3267 = vlaneseq
    %v3268 = vshrl.u32 %v3267, 7
    %v3269 = vsub.s32 0, %v3268
    %v3270 = vrot.slane %v2971, %v3269
    %v3272 = vadd.f32 %v3250, %v3270
    %v3273 = vadd.f32 %v3251, %v3270
    %v3274 = vadd.f32 %v3252, %v3270
    %v3275 = vadd.f32 %v3253, %v3270
    %v3276 = vadd.f32 %v3254, %v3270
    %v3277 = vadd.f32 %v3255, %v3270
    %v3278 = vadd.f32 %v3256, %v3270
    %v3279 = vadd.f32 %v3257, %v3270
    %v3280 = vadd.f32 %v3258, %v3270
    %v3281 = vadd.f32 %v3259, %v3270
    %v3282 = vadd.f32 %v3260, %v3270
    %v3283 = vadd.f32 %v3261, %v3270
    %v3284 = vadd.f32 %v3262, %v3270
    %v3285 = vadd.f32 %v3263, %v3270
    %v3286 = vadd.f32 %v3264, %v3270
    %v3287 = vadd.f32 %v3265, %v3270
    %v3288 = vadd.f32 %v1750, %v3272
    %v3289 = vadd.f32 %v1751, %v3273
    %v3290 = vadd.f32 %v1752, %v3274
    %v3291 = vadd.f32 %v1753, %v3275
    %v3292 = vadd.f32 %v1754, %v3276
    %v3293 = vadd.f32 %v1755, %v3277
    %v3294 = vadd.f32 %v1756, %v3278
    %v3295 = vadd.f32 %v1757, %v3279
    %v3296 = vadd.f32 %v1758, %v3280
    %v3297 = vadd.f32 %v1759, %v3281
    %v3298 = vadd.f32 %v1760, %v3282
    %v3299 = vadd.f32 %v1761, %v3283
    %v3300 = vadd.f32 %v1762, %v3284
    %v3301 = vadd.f32 %v1763, %v3285
    %v3302 = vadd.f32 %v1764, %v3286
    %v3303 = vadd.f32 %v1765, %v3287
    %v3304 = vadd.f32 %v2438, %v2793
    %v3305 = vadd.f32 %v2443, %v2797
    %v3306 = vadd.f32 %v2448, %v2803
    %v3307 = vadd.f32 %v2453, %v2807
    %v3308 = vadd.f32 %v2458, %v2813
    %v3309 = vadd.f32 %v2463, %v2817
    %v3310 = vadd.f32 %v2468, %v2823
    %v3311 = vadd.f32 %v2473, %v2827
    %v3312 = vadd.f32 %v2478, %v2833
    %v3313 = vadd.f32 %v2483, %v2837
    %v3314 = vadd.f32 %v2488, %v2843
    %v3315 = vadd.f32 %v2493, %v2847
    %v3316 = vadd.f32 %v2498, %v2853
    %v3317 = vadd.f32 %v2503, %v2857
    %v3318 = vadd.f32 %v2508, %v2863
    %v3319 = vadd.f32 %v2513, %v2867
    %v3320 = vadd.f32 %v3304, %v2688
    %v3321 = vadd.f32 %v3305, %v2691
    %v3322 = vadd.f32 %v3306, %v2696
    %v3323 = vadd.f32 %v3307, %v2699
    %v3324 = vadd.f32 %v3308, %v2704
    %v3325 = vadd.f32 %v3309, %v2707
    %v3326 = vadd.f32 %v3310, %v2712
    %v3327 = vadd.f32 %v3311, %v2715
    %v3328 = vadd.f32 %v3312, %v2720
    %v3329 = vadd.f32 %v3313, %v2723
    %v3330 = vadd.f32 %v3314, %v2728
    %v3331 = vadd.f32 %v3315, %v2731
    %v3332 = vadd.f32 %v3316, %v2736
    %v3333 = vadd.f32 %v3317, %v2739
    %v3334 = vadd.f32 %v3318, %v2744
    %v3335 = vadd.f32 %v3319, %v2747
    %v3336 = vmax.f32 %v3320, 0.0
    %v3337 = vmax.f32 %v3321, 0.0
    %v3338 = vmax.f32 %v3322, 0.0
    %v3339 = vmax.f32 %v3323, 0.0
    %v3340 = vmax.f32 %v3324, 0.0
    %v3341 = vmax.f32 %v3325, 0.0
    %v3342 = vmax.f32 %v3326, 0.0
    %v3343 = vmax.f32 %v3327, 0.0
    %v3344 = vmax.f32 %v3328, 0.0
    %v3345 = vmax.f32 %v3329, 0.0
    %v3346 = vmax.f32 %v3330, 0.0
    %v3347 = vmax.f32 %v3331, 0.0
    %v3348 = vmax.f32 %v3332, 0.0
    %v3349 = vmax.f32 %v3333, 0.0
    %v3350 = vmax.f32 %v3334, 0.0
    %v3351 = vmax.f32 %v3335, 0.0
    %3352 = vadd.xlane.f32.xlu0 %v3336
    %v3353 = vpop.xlane.xlu0 %3352
    %3354 = vadd.xlane.f32.xlu0 %v3337
    %v3355 = vpop.xlane.xlu0 %3354
    %3356 = vadd.xlane.f32.xlu0 %v3338
    %v3357 = vpop.xlane.xlu0 %3356
    %3358 = vadd.xlane.f32.xlu0 %v3339
    %v3359 = vpop.xlane.xlu0 %3358
    %3360 = vadd.xlane.f32.xlu0 %v3340
    %v3361 = vpop.xlane.xlu0 %3360
    %3362 = vadd.xlane.f32.xlu0 %v3341
    %v3363 = vpop.xlane.xlu0 %3362
    %3364 = vadd.xlane.f32.xlu0 %v3342
    %v3365 = vpop.xlane.xlu0 %3364
    %3366 = vadd.xlane.f32.xlu0 %v3343
    %v3367 = vpop.xlane.xlu0 %3366
    %3368 = vadd.xlane.f32.xlu0 %v3344
    %v3369 = vpop.xlane.xlu0 %3368
    %3370 = vadd.xlane.f32.xlu0 %v3345
    %v3371 = vpop.xlane.xlu0 %3370
    %3372 = vadd.xlane.f32.xlu0 %v3346
    %v3373 = vpop.xlane.xlu0 %3372
    %3374 = vadd.xlane.f32.xlu0 %v3347
    %v3375 = vpop.xlane.xlu0 %3374
    %3376 = vadd.xlane.f32.xlu0 %v3348
    %v3377 = vpop.xlane.xlu0 %3376
    %3378 = vadd.xlane.f32.xlu0 %v3349
    %v3379 = vpop.xlane.xlu0 %3378
    %3380 = vadd.xlane.f32.xlu0 %v3350
    %v3381 = vpop.xlane.xlu0 %3380
    %3382 = vadd.xlane.f32.xlu0 %v3351
    %v3383 = vpop.xlane.xlu0 %3382
    %v3384 = vmul.f32 %v3353, 0.03125
    %v3385 = vmul.f32 %v3355, 0.03125
    %v3386 = vmul.f32 %v3357, 0.03125
    %v3387 = vmul.f32 %v3359, 0.03125
    %v3388 = vmul.f32 %v3361, 0.03125
    %v3389 = vmul.f32 %v3363, 0.03125
    %v3390 = vmul.f32 %v3365, 0.03125
    %v3391 = vmul.f32 %v3367, 0.03125
    %v3392 = vmul.f32 %v3369, 0.03125
    %v3393 = vmul.f32 %v3371, 0.03125
    %v3394 = vmul.f32 %v3373, 0.03125
    %v3395 = vmul.f32 %v3375, 0.03125
    %v3396 = vmul.f32 %v3377, 0.03125
    %v3397 = vmul.f32 %v3379, 0.03125
    %v3398 = vmul.f32 %v3381, 0.03125
    %v3399 = vmul.f32 %v3383, 0.03125
    %v3400 = vmul.f32 %v3336, %v3336
    %v3401 = vmul.f32 %v3337, %v3337
    %v3402 = vmul.f32 %v3338, %v3338
    %v3403 = vmul.f32 %v3339, %v3339
    %v3404 = vmul.f32 %v3340, %v3340
    %v3405 = vmul.f32 %v3341, %v3341
    %v3406 = vmul.f32 %v3342, %v3342
    %v3407 = vmul.f32 %v3343, %v3343
    %v3408 = vmul.f32 %v3344, %v3344
    %v3409 = vmul.f32 %v3345, %v3345
    %v3410 = vmul.f32 %v3346, %v3346
    %v3411 = vmul.f32 %v3347, %v3347
    %v3412 = vmul.f32 %v3348, %v3348
    %v3413 = vmul.f32 %v3349, %v3349
    %v3414 = vmul.f32 %v3350, %v3350
    %v3415 = vmul.f32 %v3351, %v3351
    %3416 = vadd.xlane.f32.xlu0 %v3400
    %v3417 = vpop.xlane.xlu0 %3416
    %3418 = vadd.xlane.f32.xlu0 %v3401
    %v3419 = vpop.xlane.xlu0 %3418
    %3420 = vadd.xlane.f32.xlu0 %v3402
    %v3421 = vpop.xlane.xlu0 %3420
    %3422 = vadd.xlane.f32.xlu0 %v3403
    %v3423 = vpop.xlane.xlu0 %3422
    %3424 = vadd.xlane.f32.xlu0 %v3404
    %v3425 = vpop.xlane.xlu0 %3424
    %3426 = vadd.xlane.f32.xlu0 %v3405
    %v3427 = vpop.xlane.xlu0 %3426
    %3428 = vadd.xlane.f32.xlu0 %v3406
    %v3429 = vpop.xlane.xlu0 %3428
    %3430 = vadd.xlane.f32.xlu0 %v3407
    %v3431 = vpop.xlane.xlu0 %3430
    %3432 = vadd.xlane.f32.xlu0 %v3408
    %v3433 = vpop.xlane.xlu0 %3432
    %3434 = vadd.xlane.f32.xlu0 %v3409
    %v3435 = vpop.xlane.xlu0 %3434
    %3436 = vadd.xlane.f32.xlu0 %v3410
    %v3437 = vpop.xlane.xlu0 %3436
    %3438 = vadd.xlane.f32.xlu0 %v3411
    %v3439 = vpop.xlane.xlu0 %3438
    %3440 = vadd.xlane.f32.xlu0 %v3412
    %v3441 = vpop.xlane.xlu0 %3440
    %3442 = vadd.xlane.f32.xlu0 %v3413
    %v3443 = vpop.xlane.xlu0 %3442
    %3444 = vadd.xlane.f32.xlu0 %v3414
    %v3445 = vpop.xlane.xlu0 %3444
    %3446 = vadd.xlane.f32.xlu0 %v3415
    %v3447 = vpop.xlane.xlu0 %3446
    %v3448 = vmul.f32 %v3417, 0.03125
    %v3449 = vmul.f32 %v3419, 0.03125
    %v3450 = vmul.f32 %v3421, 0.03125
    %v3451 = vmul.f32 %v3423, 0.03125
    %v3452 = vmul.f32 %v3425, 0.03125
    %v3453 = vmul.f32 %v3427, 0.03125
    %v3454 = vmul.f32 %v3429, 0.03125
    %v3455 = vmul.f32 %v3431, 0.03125
    %v3456 = vmul.f32 %v3433, 0.03125
    %v3457 = vmul.f32 %v3435, 0.03125
    %v3458 = vmul.f32 %v3437, 0.03125
    %v3459 = vmul.f32 %v3439, 0.03125
    %v3460 = vmul.f32 %v3441, 0.03125
    %v3461 = vmul.f32 %v3443, 0.03125
    %v3462 = vmul.f32 %v3445, 0.03125
    %v3463 = vmul.f32 %v3447, 0.03125
    %v3464 = vmul.f32 %v3384, %v3384
    %v3465 = vmul.f32 %v3385, %v3385
    %v3466 = vmul.f32 %v3386, %v3386
    %v3467 = vmul.f32 %v3387, %v3387
    %v3468 = vmul.f32 %v3388, %v3388
    %v3469 = vmul.f32 %v3389, %v3389
    %v3470 = vmul.f32 %v3390, %v3390
    %v3471 = vmul.f32 %v3391, %v3391
    %v3472 = vmul.f32 %v3392, %v3392
    %v3473 = vmul.f32 %v3393, %v3393
    %v3474 = vmul.f32 %v3394, %v3394
    %v3475 = vmul.f32 %v3395, %v3395
    %v3476 = vmul.f32 %v3396, %v3396
    %v3477 = vmul.f32 %v3397, %v3397
    %v3478 = vmul.f32 %v3398, %v3398
    %v3479 = vmul.f32 %v3399, %v3399
    %v3480 = vsub.f32 %v3448, %v3464
    %v3481 = vsub.f32 %v3449, %v3465
    %v3482 = vsub.f32 %v3450, %v3466
    %v3483 = vsub.f32 %v3451, %v3467
    %v3484 = vsub.f32 %v3452, %v3468
    %v3485 = vsub.f32 %v3453, %v3469
    %v3486 = vsub.f32 %v3454, %v3470
    %v3487 = vsub.f32 %v3455, %v3471
    %v3488 = vsub.f32 %v3456, %v3472
    %v3489 = vsub.f32 %v3457, %v3473
    %v3490 = vsub.f32 %v3458, %v3474
    %v3491 = vsub.f32 %v3459, %v3475
    %v3492 = vsub.f32 %v3460, %v3476
    %v3493 = vsub.f32 %v3461, %v3477
    %v3494 = vsub.f32 %v3462, %v3478
    %v3495 = vsub.f32 %v3463, %v3479
    %v3496 = vmax.f32 %v3480, 0.0
    %v3497 = vmax.f32 %v3481, 0.0
    %v3498 = vmax.f32 %v3482, 0.0
    %v3499 = vmax.f32 %v3483, 0.0
    %v3500 = vmax.f32 %v3484, 0.0
    %v3501 = vmax.f32 %v3485, 0.0
    %v3502 = vmax.f32 %v3486, 0.0
    %v3503 = vmax.f32 %v3487, 0.0
    %v3504 = vmax.f32 %v3488, 0.0
    %v3505 = vmax.f32 %v3489, 0.0
    %v3506 = vmax.f32 %v3490, 0.0
    %v3507 = vmax.f32 %v3491, 0.0
    %v3508 = vmax.f32 %v3492, 0.0
    %v3509 = vmax.f32 %v3493, 0.0
    %v3510 = vmax.f32 %v3494, 0.0
    %v3511 = vmax.f32 %v3495, 0.0
    %v3512 = vsub.f32 %v3336, %v3384
    %v3513 = vsub.f32 %v3337, %v3385
    %v3514 = vsub.f32 %v3338, %v3386
    %v3515 = vsub.f32 %v3339, %v3387
    %v3516 = vsub.f32 %v3340, %v3388
    %v3517 = vsub.f32 %v3341, %v3389
    %v3518 = vsub.f32 %v3342, %v3390
    %v3519 = vsub.f32 %v3343, %v3391
    %v3520 = vsub.f32 %v3344, %v3392
    %v3521 = vsub.f32 %v3345, %v3393
    %v3522 = vsub.f32 %v3346, %v3394
    %v3523 = vsub.f32 %v3347, %v3395
    %v3524 = vsub.f32 %v3348, %v3396
    %v3525 = vsub.f32 %v3349, %v3397
    %v3526 = vsub.f32 %v3350, %v3398
    %v3527 = vsub.f32 %v3351, %v3399
    %v3528 = vadd.f32 %v3496, 1e-05
    %v3529 = vadd.f32 %v3497, 1e-05
    %v3530 = vadd.f32 %v3498, 1e-05
    %v3531 = vadd.f32 %v3499, 1e-05
    %v3532 = vadd.f32 %v3500, 1e-05
    %v3533 = vadd.f32 %v3501, 1e-05
    %v3534 = vadd.f32 %v3502, 1e-05
    %v3535 = vadd.f32 %v3503, 1e-05
    %v3536 = vadd.f32 %v3504, 1e-05
    %v3537 = vadd.f32 %v3505, 1e-05
    %v3538 = vadd.f32 %v3506, 1e-05
    %v3539 = vadd.f32 %v3507, 1e-05
    %v3540 = vadd.f32 %v3508, 1e-05
    %v3541 = vadd.f32 %v3509, 1e-05
    %v3542 = vadd.f32 %v3510, 1e-05
    %v3543 = vadd.f32 %v3511, 1e-05
    %v3544 = vrsqrt.pop %v3528
    %v3545 = vrsqrt.pop %v3529
    %v3546 = vrsqrt.pop %v3530
    %v3547 = vrsqrt.pop %v3531
    %v3548 = vrsqrt.pop %v3532
    %v3549 = vrsqrt.pop %v3533
    %v3550 = vrsqrt.pop %v3534
    %v3551 = vrsqrt.pop %v3535
    %v3552 = vrsqrt.pop %v3536
    %v3553 = vrsqrt.pop %v3537
    %v3554 = vrsqrt.pop %v3538
    %v3555 = vrsqrt.pop %v3539
    %v3556 = vrsqrt.pop %v3540
    %v3557 = vrsqrt.pop %v3541
    %v3558 = vrsqrt.pop %v3542
    %v3559 = vrsqrt.pop %v3543
    %v3560 = vmul.f32 %v3512, %v3544
    %v3561 = vmul.f32 %v3513, %v3545
    %v3562 = vmul.f32 %v3514, %v3546
    %v3563 = vmul.f32 %v3515, %v3547
    %v3564 = vmul.f32 %v3516, %v3548
    %v3565 = vmul.f32 %v3517, %v3549
    %v3566 = vmul.f32 %v3518, %v3550
    %v3567 = vmul.f32 %v3519, %v3551
    %v3568 = vmul.f32 %v3520, %v3552
    %v3569 = vmul.f32 %v3521, %v3553
    %v3570 = vmul.f32 %v3522, %v3554
    %v3571 = vmul.f32 %v3523, %v3555
    %v3572 = vmul.f32 %v3524, %v3556
    %v3573 = vmul.f32 %v3525, %v3557
    %v3574 = vmul.f32 %v3526, %v3558
    %v3575 = vmul.f32 %v3527, %v3559
    %v3576 = vmul.f32 %v3560, %v3248
    %v3577 = vmul.f32 %v3561, %v3248
    %v3578 = vmul.f32 %v3562, %v3248
    %v3579 = vmul.f32 %v3563, %v3248
    %v3580 = vmul.f32 %v3564, %v3248
    %v3581 = vmul.f32 %v3565, %v3248
    %v3582 = vmul.f32 %v3566, %v3248
    %v3583 = vmul.f32 %v3567, %v3248
    %v3584 = vmul.f32 %v3568, %v3248
    %v3585 = vmul.f32 %v3569, %v3248
    %v3586 = vmul.f32 %v3570, %v3248
    %v3587 = vmul.f32 %v3571, %v3248
    %v3588 = vmul.f32 %v3572, %v3248
    %v3589 = vmul.f32 %v3573, %v3248
    %v3590 = vmul.f32 %v3574, %v3248
    %v3591 = vmul.f32 %v3575, %v3248
    %v3592 = vadd.f32 %v3576, %v3270
    %v3593 = vadd.f32 %v3577, %v3270
    %v3594 = vadd.f32 %v3578, %v3270
    %v3595 = vadd.f32 %v3579, %v3270
    %v3596 = vadd.f32 %v3580, %v3270
    %v3597 = vadd.f32 %v3581, %v3270
    %v3598 = vadd.f32 %v3582, %v3270
    %v3599 = vadd.f32 %v3583, %v3270
    %v3600 = vadd.f32 %v3584, %v3270
    %v3601 = vadd.f32 %v3585, %v3270
    %v3602 = vadd.f32 %v3586, %v3270
    %v3603 = vadd.f32 %v3587, %v3270
    %v3604 = vadd.f32 %v3588, %v3270
    %v3605 = vadd.f32 %v3589, %v3270
    %v3606 = vadd.f32 %v3590, %v3270
    %v3607 = vadd.f32 %v3591, %v3270
    %v3608 = vadd.f32 %v1750, %v3592
    %v3609 = vadd.f32 %v1751, %v3593
    %v3610 = vadd.f32 %v1752, %v3594
    %v3611 = vadd.f32 %v1753, %v3595
    %v3612 = vadd.f32 %v1754, %v3596
    %v3613 = vadd.f32 %v1755, %v3597
    %v3614 = vadd.f32 %v1756, %v3598
    %v3615 = vadd.f32 %v1757, %v3599
    %v3616 = vadd.f32 %v1758, %v3600
    %v3617 = vadd.f32 %v1759, %v3601
    %v3618 = vadd.f32 %v1760, %v3602
    %v3619 = vadd.f32 %v1761, %v3603
    %v3620 = vadd.f32 %v1762, %v3604
    %v3621 = vadd.f32 %v1763, %v3605
    %v3622 = vadd.f32 %v1764, %v3606
    %v3623 = vadd.f32 %v1765, %v3607
    %v3624 = vxor.u32 %v3288, 2147483648
    %v3625 = vxor.u32 %v3289, 2147483648
    %v3626 = vxor.u32 %v3290, 2147483648
    %v3627 = vxor.u32 %v3291, 2147483648
    %v3628 = vxor.u32 %v3292, 2147483648
    %v3629 = vxor.u32 %v3293, 2147483648
    %v3630 = vxor.u32 %v3294, 2147483648
    %v3631 = vxor.u32 %v3295, 2147483648
    %v3632 = vxor.u32 %v3296, 2147483648
    %v3633 = vxor.u32 %v3297, 2147483648
    %v3634 = vxor.u32 %v3298, 2147483648
    %v3635 = vxor.u32 %v3299, 2147483648
    %v3636 = vxor.u32 %v3300, 2147483648
    %v3637 = vxor.u32 %v3301, 2147483648
    %v3638 = vxor.u32 %v3302, 2147483648
    %v3639 = vxor.u32 %v3303, 2147483648
    %v3640 = vmul.f32 %v3624, 1.442695
    %v3641 = vpow.pop %v3640
    %v3642 = vmul.f32 %v3625, 1.442695
    %v3643 = vpow.pop %v3642
    %v3644 = vmul.f32 %v3626, 1.442695
    %v3645 = vpow.pop %v3644
    %v3646 = vmul.f32 %v3627, 1.442695
    %v3647 = vpow.pop %v3646
    %v3648 = vmul.f32 %v3628, 1.442695
    %v3649 = vpow.pop %v3648
    %v3650 = vmul.f32 %v3629, 1.442695
    %v3651 = vpow.pop %v3650
    %v3652 = vmul.f32 %v3630, 1.442695
    %v3653 = vpow.pop %v3652
    %v3654 = vmul.f32 %v3631, 1.442695
    %v3655 = vpow.pop %v3654
    %v3656 = vmul.f32 %v3632, 1.442695
    %v3657 = vpow.pop %v3656
    %v3658 = vmul.f32 %v3633, 1.442695
    %v3659 = vpow.pop %v3658
    %v3660 = vmul.f32 %v3634, 1.442695
    %v3661 = vpow.pop %v3660
    %v3662 = vmul.f32 %v3635, 1.442695
    %v3663 = vpow.pop %v3662
    %v3664 = vmul.f32 %v3636, 1.442695
    %v3665 = vpow.pop %v3664
    %v3666 = vmul.f32 %v3637, 1.442695
    %v3667 = vpow.pop %v3666
    %v3668 = vmul.f32 %v3638, 1.442695
    %v3669 = vpow.pop %v3668
    %v3670 = vmul.f32 %v3639, 1.442695
    %v3671 = vpow.pop %v3670
    %v3672 = vadd.f32 %v3641, 1.0
    %v3673 = vadd.f32 %v3643, 1.0
    %v3674 = vadd.f32 %v3645, 1.0
    %v3675 = vadd.f32 %v3647, 1.0
    %v3676 = vadd.f32 %v3649, 1.0
    %v3677 = vadd.f32 %v3651, 1.0
    %v3678 = vadd.f32 %v3653, 1.0
    %v3679 = vadd.f32 %v3655, 1.0
    %v3680 = vadd.f32 %v3657, 1.0
    %v3681 = vadd.f32 %v3659, 1.0
    %v3682 = vadd.f32 %v3661, 1.0
    %v3683 = vadd.f32 %v3663, 1.0
    %v3684 = vadd.f32 %v3665, 1.0
    %v3685 = vadd.f32 %v3667, 1.0
    %v3686 = vadd.f32 %v3669, 1.0
    %v3687 = vadd.f32 %v3671, 1.0
    %v3688 = vrcp.pop %v3672
    %v3689 = vmul.f32 1.0, %v3688
    %v3690 = vrcp.pop %v3673
    %v3691 = vmul.f32 1.0, %v3690
    %v3692 = vrcp.pop %v3674
    %v3693 = vmul.f32 1.0, %v3692
    %v3694 = vrcp.pop %v3675
    %v3695 = vmul.f32 1.0, %v3694
    %v3696 = vrcp.pop %v3676
    %v3697 = vmul.f32 1.0, %v3696
    %v3698 = vrcp.pop %v3677
    %v3699 = vmul.f32 1.0, %v3698
    %v3700 = vrcp.pop %v3678
    %v3701 = vmul.f32 1.0, %v3700
    %v3702 = vrcp.pop %v3679
    %v3703 = vmul.f32 1.0, %v3702
    %v3704 = vrcp.pop %v3680
    %v3705 = vmul.f32 1.0, %v3704
    %v3706 = vrcp.pop %v3681
    %v3707 = vmul.f32 1.0, %v3706
    %v3708 = vrcp.pop %v3682
    %v3709 = vmul.f32 1.0, %v3708
    %v3710 = vrcp.pop %v3683
    %v3711 = vmul.f32 1.0, %v3710
    %v3712 = vrcp.pop %v3684
    %v3713 = vmul.f32 1.0, %v3712
    %v3714 = vrcp.pop %v3685
    %v3715 = vmul.f32 1.0, %v3714
    %v3716 = vrcp.pop %v3686
    %v3717 = vmul.f32 1.0, %v3716
    %v3718 = vrcp.pop %v3687
    %v3719 = vmul.f32 1.0, %v3718
    %v3720 = vxor.u32 %v3608, 2147483648
    %v3721 = vxor.u32 %v3609, 2147483648
    %v3722 = vxor.u32 %v3610, 2147483648
    %v3723 = vxor.u32 %v3611, 2147483648
    %v3724 = vxor.u32 %v3612, 2147483648
    %v3725 = vxor.u32 %v3613, 2147483648
    %v3726 = vxor.u32 %v3614, 2147483648
    %v3727 = vxor.u32 %v3615, 2147483648
    %v3728 = vxor.u32 %v3616, 2147483648
    %v3729 = vxor.u32 %v3617, 2147483648
    %v3730 = vxor.u32 %v3618, 2147483648
    %v3731 = vxor.u32 %v3619, 2147483648
    %v3732 = vxor.u32 %v3620, 2147483648
    %v3733 = vxor.u32 %v3621, 2147483648
    %v3734 = vxor.u32 %v3622, 2147483648
    %v3735 = vxor.u32 %v3623, 2147483648
    %v3736 = vmul.f32 %v3720, 1.442695
    %v3737 = vpow.pop %v3736
    %v3738 = vmul.f32 %v3721, 1.442695
    %v3739 = vpow.pop %v3738
    %v3740 = vmul.f32 %v3722, 1.442695
    %v3741 = vpow.pop %v3740
    %v3742 = vmul.f32 %v3723, 1.442695
    %v3743 = vpow.pop %v3742
    %v3744 = vmul.f32 %v3724, 1.442695
    %v3745 = vpow.pop %v3744
    %v3746 = vmul.f32 %v3725, 1.442695
    %v3747 = vpow.pop %v3746
    %v3748 = vmul.f32 %v3726, 1.442695
    %v3749 = vpow.pop %v3748
    %v3750 = vmul.f32 %v3727, 1.442695
    %v3751 = vpow.pop %v3750
    %v3752 = vmul.f32 %v3728, 1.442695
    %v3753 = vpow.pop %v3752
    %v3754 = vmul.f32 %v3729, 1.442695
    %v3755 = vpow.pop %v3754
    %v3756 = vmul.f32 %v3730, 1.442695
    %v3757 = vpow.pop %v3756
    %v3758 = vmul.f32 %v3731, 1.442695
    %v3759 = vpow.pop %v3758
    %v3760 = vmul.f32 %v3732, 1.442695
    %v3761 = vpow.pop %v3760
    %v3762 = vmul.f32 %v3733, 1.442695
    %v3763 = vpow.pop %v3762
    %v3764 = vmul.f32 %v3734, 1.442695
    %v3765 = vpow.pop %v3764
    %v3766 = vmul.f32 %v3735, 1.442695
    %v3767 = vpow.pop %v3766
    %v3768 = vadd.f32 %v3737, 1.0
    %v3769 = vadd.f32 %v3739, 1.0
    %v3770 = vadd.f32 %v3741, 1.0
    %v3771 = vadd.f32 %v3743, 1.0
    %v3772 = vadd.f32 %v3745, 1.0
    %v3773 = vadd.f32 %v3747, 1.0
    %v3774 = vadd.f32 %v3749, 1.0
    %v3775 = vadd.f32 %v3751, 1.0
    %v3776 = vadd.f32 %v3753, 1.0
    %v3777 = vadd.f32 %v3755, 1.0
    %v3778 = vadd.f32 %v3757, 1.0
    %v3779 = vadd.f32 %v3759, 1.0
    %v3780 = vadd.f32 %v3761, 1.0
    %v3781 = vadd.f32 %v3763, 1.0
    %v3782 = vadd.f32 %v3765, 1.0
    %v3783 = vadd.f32 %v3767, 1.0
    %v3784 = vrcp.pop %v3768
    %v3785 = vmul.f32 1.0, %v3784
    %v3786 = vrcp.pop %v3769
    %v3787 = vmul.f32 1.0, %v3786
    %v3788 = vrcp.pop %v3770
    %v3789 = vmul.f32 1.0, %v3788
    %v3790 = vrcp.pop %v3771
    %v3791 = vmul.f32 1.0, %v3790
    %v3792 = vrcp.pop %v3772
    %v3793 = vmul.f32 1.0, %v3792
    %v3794 = vrcp.pop %v3773
    %v3795 = vmul.f32 1.0, %v3794
    %v3796 = vrcp.pop %v3774
    %v3797 = vmul.f32 1.0, %v3796
    %v3798 = vrcp.pop %v3775
    %v3799 = vmul.f32 1.0, %v3798
    %v3800 = vrcp.pop %v3776
    %v3801 = vmul.f32 1.0, %v3800
    %v3802 = vrcp.pop %v3777
    %v3803 = vmul.f32 1.0, %v3802
    %v3804 = vrcp.pop %v3778
    %v3805 = vmul.f32 1.0, %v3804
    %v3806 = vrcp.pop %v3779
    %v3807 = vmul.f32 1.0, %v3806
    %v3808 = vrcp.pop %v3780
    %v3809 = vmul.f32 1.0, %v3808
    %v3810 = vrcp.pop %v3781
    %v3811 = vmul.f32 1.0, %v3810
    %v3812 = vrcp.pop %v3782
    %v3813 = vmul.f32 1.0, %v3812
    %v3814 = vrcp.pop %v3783
    %v3815 = vmul.f32 1.0, %v3814
    %3816 = vadd.xlane.f32.xlu0 %v3689
    %v3817 = vpop.xlane.xlu0 %3816
    %3818 = vadd.xlane.f32.xlu0 %v3691
    %v3819 = vpop.xlane.xlu0 %3818
    %3820 = vadd.xlane.f32.xlu0 %v3693
    %v3821 = vpop.xlane.xlu0 %3820
    %3822 = vadd.xlane.f32.xlu0 %v3695
    %v3823 = vpop.xlane.xlu0 %3822
    %3824 = vadd.xlane.f32.xlu0 %v3697
    %v3825 = vpop.xlane.xlu0 %3824
    %3826 = vadd.xlane.f32.xlu0 %v3699
    %v3827 = vpop.xlane.xlu0 %3826
    %3828 = vadd.xlane.f32.xlu0 %v3701
    %v3829 = vpop.xlane.xlu0 %3828
    %3830 = vadd.xlane.f32.xlu0 %v3703
    %v3831 = vpop.xlane.xlu0 %3830
    %3832 = vadd.xlane.f32.xlu0 %v3705
    %v3833 = vpop.xlane.xlu0 %3832
    %3834 = vadd.xlane.f32.xlu0 %v3707
    %v3835 = vpop.xlane.xlu0 %3834
    %3836 = vadd.xlane.f32.xlu0 %v3709
    %v3837 = vpop.xlane.xlu0 %3836
    %3838 = vadd.xlane.f32.xlu0 %v3711
    %v3839 = vpop.xlane.xlu0 %3838
    %3840 = vadd.xlane.f32.xlu0 %v3713
    %v3841 = vpop.xlane.xlu0 %3840
    %3842 = vadd.xlane.f32.xlu0 %v3715
    %v3843 = vpop.xlane.xlu0 %3842
    %3844 = vadd.xlane.f32.xlu0 %v3717
    %v3845 = vpop.xlane.xlu0 %3844
    %3846 = vadd.xlane.f32.xlu0 %v3719
    %v3847 = vpop.xlane.xlu0 %3846
    %v3848 = vsub.f32 %v3817, 48.0
    %v3849 = vsub.f32 %v3819, 48.0
    %v3850 = vsub.f32 %v3821, 48.0
    %v3851 = vsub.f32 %v3823, 48.0
    %v3852 = vsub.f32 %v3825, 48.0
    %v3853 = vsub.f32 %v3827, 48.0
    %v3854 = vsub.f32 %v3829, 48.0
    %v3855 = vsub.f32 %v3831, 48.0
    %v3856 = vsub.f32 %v3833, 48.0
    %v3857 = vsub.f32 %v3835, 48.0
    %v3858 = vsub.f32 %v3837, 48.0
    %v3859 = vsub.f32 %v3839, 48.0
    %v3860 = vsub.f32 %v3841, 48.0
    %v3861 = vsub.f32 %v3843, 48.0
    %v3862 = vsub.f32 %v3845, 48.0
    %v3863 = vsub.f32 %v3847, 48.0
    %v3864 = vadd.f32 %v3848, 1e-06
    %v3865 = vadd.f32 %v3849, 1e-06
    %v3866 = vadd.f32 %v3850, 1e-06
    %v3867 = vadd.f32 %v3851, 1e-06
    %v3868 = vadd.f32 %v3852, 1e-06
    %v3869 = vadd.f32 %v3853, 1e-06
    %v3870 = vadd.f32 %v3854, 1e-06
    %v3871 = vadd.f32 %v3855, 1e-06
    %v3872 = vadd.f32 %v3856, 1e-06
    %v3873 = vadd.f32 %v3857, 1e-06
    %v3874 = vadd.f32 %v3858, 1e-06
    %v3875 = vadd.f32 %v3859, 1e-06
    %v3876 = vadd.f32 %v3860, 1e-06
    %v3877 = vadd.f32 %v3861, 1e-06
    %v3878 = vadd.f32 %v3862, 1e-06
    %v3879 = vadd.f32 %v3863, 1e-06
    %v3880 = vrcp.pop %v3864
    %v3881 = vrcp.pop %v3865
    %v3882 = vrcp.pop %v3866
    %v3883 = vrcp.pop %v3867
    %v3884 = vrcp.pop %v3868
    %v3885 = vrcp.pop %v3869
    %v3886 = vrcp.pop %v3870
    %v3887 = vrcp.pop %v3871
    %v3888 = vrcp.pop %v3872
    %v3889 = vrcp.pop %v3873
    %v3890 = vrcp.pop %v3874
    %v3891 = vrcp.pop %v3875
    %v3892 = vrcp.pop %v3876
    %v3893 = vrcp.pop %v3877
    %v3894 = vrcp.pop %v3878
    %v3895 = vrcp.pop %v3879
    %3896 = vadd.xlane.f32.xlu0 %v3785
    %v3897 = vpop.xlane.xlu0 %3896
    %3898 = vadd.xlane.f32.xlu0 %v3787
    %v3899 = vpop.xlane.xlu0 %3898
    %3900 = vadd.xlane.f32.xlu0 %v3789
    %v3901 = vpop.xlane.xlu0 %3900
    %3902 = vadd.xlane.f32.xlu0 %v3791
    %v3903 = vpop.xlane.xlu0 %3902
    %3904 = vadd.xlane.f32.xlu0 %v3793
    %v3905 = vpop.xlane.xlu0 %3904
    %3906 = vadd.xlane.f32.xlu0 %v3795
    %v3907 = vpop.xlane.xlu0 %3906
    %3908 = vadd.xlane.f32.xlu0 %v3797
    %v3909 = vpop.xlane.xlu0 %3908
    %3910 = vadd.xlane.f32.xlu0 %v3799
    %v3911 = vpop.xlane.xlu0 %3910
    %3912 = vadd.xlane.f32.xlu0 %v3801
    %v3913 = vpop.xlane.xlu0 %3912
    %3914 = vadd.xlane.f32.xlu0 %v3803
    %v3915 = vpop.xlane.xlu0 %3914
    %3916 = vadd.xlane.f32.xlu0 %v3805
    %v3917 = vpop.xlane.xlu0 %3916
    %3918 = vadd.xlane.f32.xlu0 %v3807
    %v3919 = vpop.xlane.xlu0 %3918
    %3920 = vadd.xlane.f32.xlu0 %v3809
    %v3921 = vpop.xlane.xlu0 %3920
    %3922 = vadd.xlane.f32.xlu0 %v3811
    %v3923 = vpop.xlane.xlu0 %3922
    %3924 = vadd.xlane.f32.xlu0 %v3813
    %v3925 = vpop.xlane.xlu0 %3924
    %3926 = vadd.xlane.f32.xlu0 %v3815
    %v3927 = vpop.xlane.xlu0 %3926
    %v3928 = vsub.f32 %v3897, 48.0
    %v3929 = vsub.f32 %v3899, 48.0
    %v3930 = vsub.f32 %v3901, 48.0
    %v3931 = vsub.f32 %v3903, 48.0
    %v3932 = vsub.f32 %v3905, 48.0
    %v3933 = vsub.f32 %v3907, 48.0
    %v3934 = vsub.f32 %v3909, 48.0
    %v3935 = vsub.f32 %v3911, 48.0
    %v3936 = vsub.f32 %v3913, 48.0
    %v3937 = vsub.f32 %v3915, 48.0
    %v3938 = vsub.f32 %v3917, 48.0
    %v3939 = vsub.f32 %v3919, 48.0
    %v3940 = vsub.f32 %v3921, 48.0
    %v3941 = vsub.f32 %v3923, 48.0
    %v3942 = vsub.f32 %v3925, 48.0
    %v3943 = vsub.f32 %v3927, 48.0
    %v3944 = vadd.f32 %v3928, 1e-06
    %v3945 = vadd.f32 %v3929, 1e-06
    %v3946 = vadd.f32 %v3930, 1e-06
    %v3947 = vadd.f32 %v3931, 1e-06
    %v3948 = vadd.f32 %v3932, 1e-06
    %v3949 = vadd.f32 %v3933, 1e-06
    %v3950 = vadd.f32 %v3934, 1e-06
    %v3951 = vadd.f32 %v3935, 1e-06
    %v3952 = vadd.f32 %v3936, 1e-06
    %v3953 = vadd.f32 %v3937, 1e-06
    %v3954 = vadd.f32 %v3938, 1e-06
    %v3955 = vadd.f32 %v3939, 1e-06
    %v3956 = vadd.f32 %v3940, 1e-06
    %v3957 = vadd.f32 %v3941, 1e-06
    %v3958 = vadd.f32 %v3942, 1e-06
    %v3959 = vadd.f32 %v3943, 1e-06
    %v3960 = vrcp.pop %v3944
    %v3961 = vrcp.pop %v3945
    %v3962 = vrcp.pop %v3946
    %v3963 = vrcp.pop %v3947
    %v3964 = vrcp.pop %v3948
    %v3965 = vrcp.pop %v3949
    %v3966 = vrcp.pop %v3950
    %v3967 = vrcp.pop %v3951
    %v3968 = vrcp.pop %v3952
    %v3969 = vrcp.pop %v3953
    %v3970 = vrcp.pop %v3954
    %v3971 = vrcp.pop %v3955
    %v3972 = vrcp.pop %v3956
    %v3973 = vrcp.pop %v3957
    %v3974 = vrcp.pop %v3958
    %v3975 = vrcp.pop %v3959
    %v3976 = vmul.f32 %v2575, %v3689
    %v3977 = vmul.f32 %v2579, %v3691
    %v3978 = vmul.f32 %v2585, %v3693
    %v3979 = vmul.f32 %v2589, %v3695
    %v3980 = vmul.f32 %v2595, %v3697
    %v3981 = vmul.f32 %v2599, %v3699
    %v3982 = vmul.f32 %v2605, %v3701
    %v3983 = vmul.f32 %v2609, %v3703
    %v3984 = vmul.f32 %v2615, %v3705
    %v3985 = vmul.f32 %v2619, %v3707
    %v3986 = vmul.f32 %v2625, %v3709
    %v3987 = vmul.f32 %v2629, %v3711
    %v3988 = vmul.f32 %v2635, %v3713
    %v3989 = vmul.f32 %v2639, %v3715
    %v3990 = vmul.f32 %v2645, %v3717
    %v3991 = vmul.f32 %v2649, %v3719
    %v3992 = vmul.f32 %v3976, %v3880
    %v3993 = vmul.f32 %v3977, %v3881
    %v3994 = vmul.f32 %v3978, %v3882
    %v3995 = vmul.f32 %v3979, %v3883
    %v3996 = vmul.f32 %v3980, %v3884
    %v3997 = vmul.f32 %v3981, %v3885
    %v3998 = vmul.f32 %v3982, %v3886
    %v3999 = vmul.f32 %v3983, %v3887
    %v4000 = vmul.f32 %v3984, %v3888
    %v4001 = vmul.f32 %v3985, %v3889
    %v4002 = vmul.f32 %v3986, %v3890
    %v4003 = vmul.f32 %v3987, %v3891
    %v4004 = vmul.f32 %v3988, %v3892
    %v4005 = vmul.f32 %v3989, %v3893
    %v4006 = vmul.f32 %v3990, %v3894
    %v4007 = vmul.f32 %v3991, %v3895
    %v4008 = vmul.f32 %v2906, %v3785
    %v4009 = vmul.f32 %v2909, %v3787
    %v4010 = vmul.f32 %v2914, %v3789
    %v4011 = vmul.f32 %v2917, %v3791
    %v4012 = vmul.f32 %v2922, %v3793
    %v4013 = vmul.f32 %v2925, %v3795
    %v4014 = vmul.f32 %v2930, %v3797
    %v4015 = vmul.f32 %v2933, %v3799
    %v4016 = vmul.f32 %v2938, %v3801
    %v4017 = vmul.f32 %v2941, %v3803
    %v4018 = vmul.f32 %v2946, %v3805
    %v4019 = vmul.f32 %v2949, %v3807
    %v4020 = vmul.f32 %v2954, %v3809
    %v4021 = vmul.f32 %v2957, %v3811
    %v4022 = vmul.f32 %v2962, %v3813
    %v4023 = vmul.f32 %v2965, %v3815
    %v4024 = vmul.f32 %v4008, %v3960
    %v4025 = vmul.f32 %v4009, %v3961
    %v4026 = vmul.f32 %v4010, %v3962
    %v4027 = vmul.f32 %v4011, %v3963
    %v4028 = vmul.f32 %v4012, %v3964
    %v4029 = vmul.f32 %v4013, %v3965
    %v4030 = vmul.f32 %v4014, %v3966
    %v4031 = vmul.f32 %v4015, %v3967
    %v4032 = vmul.f32 %v4016, %v3968
    %v4033 = vmul.f32 %v4017, %v3969
    %v4034 = vmul.f32 %v4018, %v3970
    %v4035 = vmul.f32 %v4019, %v3971
    %v4036 = vmul.f32 %v4020, %v3972
    %v4037 = vmul.f32 %v4021, %v3973
    %v4038 = vmul.f32 %v4022, %v3974
    %v4039 = vmul.f32 %v4023, %v3975
    %v4040 = vpack.c.bf16 %v3993, %v3992
    %v4041 = vpack.c.bf16 %v3995, %v3994
    %v4042 = vpack.c.bf16 %v3997, %v3996
    %v4043 = vpack.c.bf16 %v3999, %v3998
    %v4044 = vpack.c.bf16 %v4001, %v4000
    %v4045 = vpack.c.bf16 %v4003, %v4002
    %v4046 = vpack.c.bf16 %v4005, %v4004
    %v4047 = vpack.c.bf16 %v4007, %v4006
    %4048 = vmatprep.subr.bf16.mxu0 0
    %4049 = vmatpush1.bf16.msra.mxu0 %v4040
    %4050 = vmatprep.subr.bf16.mxu0 0
    %4051 = vmatpush1.bf16.msra.mxu0 %v4041
    %4052 = vmatprep.subr.bf16.mxu0 0
    %4053 = vmatpush1.bf16.msra.mxu0 %v4042
    %4054 = vmatprep.subr.bf16.mxu0 0
    %4055 = vmatpush1.bf16.msra.mxu0 %v4043
    %4056 = vmatprep.subr.bf16.mxu0 0
    %4057 = vmatpush1.bf16.msra.mxu0 %v4044
    %4058 = vmatprep.subr.bf16.mxu0 0
    %4059 = vmatpush1.bf16.msra.mxu0 %v4045
    %4060 = vmatprep.subr.bf16.mxu0 0
    %4061 = vmatpush1.bf16.msra.mxu0 %v4046
    %4062 = vmatprep.subr.bf16.mxu0 0
    %4063 = vmatpush1.bf16.msra.mxu0 %v4047
    %4064 = vmatprep.subr.bf16.mxu0 0
    %4065 = vmatpush1.bf16.msra.mxu0 0
    %4066 = vmatprep.subr.bf16.mxu0 0
    %4067 = vmatpush1.bf16.msra.mxu0 0
    %4068 = vmatprep.subr.bf16.mxu0 0
    %4069 = vmatpush1.bf16.msra.mxu0 0
    %4070 = vmatprep.subr.bf16.mxu0 0
    %4071 = vmatpush1.bf16.msra.mxu0 0
    %4072 = vmatprep.subr.bf16.mxu0 0
    %4073 = vmatpush1.bf16.msra.mxu0 0
    %4074 = vmatprep.subr.bf16.mxu0 0
    %4075 = vmatpush1.bf16.msra.mxu0 0
    %4076 = vmatprep.subr.bf16.mxu0 0
    %4077 = vmatpush1.bf16.msra.mxu0 0
    %4078 = vmatprep.subr.bf16.mxu0 0
    %4079 = vmatpush1.bf16.msra.mxu0 0
    %4080 = vmatprep.mubr.bf16.mxu0 0
    %4081 = vmatmul.mubr.bf16.gmra.mrb[0].mxu0 %v444
    %v4082 = vpop.f32.mrb[0].mxu0
    %v4083 = vadd.f32 0.0, %v4082
    %v4084 = vpop.f32.mrb[0].mxu0
    %v4085 = vpop.f32.mrb[0].mxu0
    %v4086 = vadd.f32 0.0, %v4085
    %v4087 = vpop.f32.mrb[0].mxu0
    %4088 = vmatprep.mubr.bf16.mxu0 0
    %4089 = vmatmul.mubr.bf16.gmra.mrb[0].mxu0 %v445
    %v4090 = vpop.f32.mrb[0].mxu0
    %v4091 = vadd.f32 0.0, %v4090
    %v4092 = vpop.f32.mrb[0].mxu0
    %v4093 = vpop.f32.mrb[0].mxu0
    %v4094 = vadd.f32 0.0, %v4093
    %v4095 = vpop.f32.mrb[0].mxu0
    %4096 = vmatprep.mubr.bf16.mxu0 0
    %4097 = vmatmul.mubr.bf16.gmra.mrb[0].mxu0 %v446
    %v4098 = vpop.f32.mrb[0].mxu0
    %v4099 = vadd.f32 0.0, %v4098
    %v4100 = vpop.f32.mrb[0].mxu0
    %v4101 = vpop.f32.mrb[0].mxu0
    %v4102 = vadd.f32 0.0, %v4101
    %v4103 = vpop.f32.mrb[0].mxu0
    %4104 = vmatprep.mubr.bf16.mxu0 0
    %4105 = vmatmul.mubr.bf16.gmra.mrb[0].mxu0 %v447
    %v4106 = vpop.f32.mrb[0].mxu0
    %v4107 = vadd.f32 0.0, %v4106
    %v4108 = vpop.f32.mrb[0].mxu0
    %v4109 = vpop.f32.mrb[0].mxu0
    %v4110 = vadd.f32 0.0, %v4109
    %v4111 = vpop.f32.mrb[0].mxu0
    %4112 = vmatprep.mubr.bf16.mxu0 0
    %4113 = vmatmul.mubr.bf16.gmra.mrb[0].mxu0 %v448
    %v4114 = vpop.f32.mrb[0].mxu0
    %v4115 = vadd.f32 0.0, %v4114
    %v4116 = vpop.f32.mrb[0].mxu0
    %v4117 = vpop.f32.mrb[0].mxu0
    %v4118 = vadd.f32 0.0, %v4117
    %v4119 = vpop.f32.mrb[0].mxu0
    %4120 = vmatprep.mubr.bf16.mxu0 0
    %4121 = vmatmul.mubr.bf16.gmra.mrb[0].mxu0 %v449
    %v4122 = vpop.f32.mrb[0].mxu0
    %v4123 = vadd.f32 0.0, %v4122
    %v4124 = vpop.f32.mrb[0].mxu0
    %v4125 = vpop.f32.mrb[0].mxu0
    %v4126 = vadd.f32 0.0, %v4125
    %v4127 = vpop.f32.mrb[0].mxu0
    %4128 = vmatprep.mubr.bf16.mxu0 0
    %4129 = vmatmul.mubr.bf16.gmra.mrb[0].mxu0 %v450
    %v4130 = vpop.f32.mrb[0].mxu0
    %v4131 = vadd.f32 0.0, %v4130
    %v4132 = vpop.f32.mrb[0].mxu0
    %v4133 = vpop.f32.mrb[0].mxu0
    %v4134 = vadd.f32 0.0, %v4133
    %v4135 = vpop.f32.mrb[0].mxu0
    %4136 = vmatprep.mubr.bf16.mxu0 0
    %4137 = vmatmul.mubr.bf16.gmra.mrb[0].mxu0 %v451
    %v4138 = vpop.f32.mrb[0].mxu0
    %v4139 = vadd.f32 0.0, %v4138
    %v4140 = vpop.f32.mrb[0].mxu0
    %v4141 = vpop.f32.mrb[0].mxu0
    %v4142 = vadd.f32 0.0, %v4141
    %v4143 = vpop.f32.mrb[0].mxu0
    %4144 = vdwg.mxu0
    %v4145 = vpack.c.bf16 %v4025, %v4024
    %v4146 = vpack.c.bf16 %v4027, %v4026
    %v4147 = vpack.c.bf16 %v4029, %v4028
    %v4148 = vpack.c.bf16 %v4031, %v4030
    %v4149 = vpack.c.bf16 %v4033, %v4032
    %v4150 = vpack.c.bf16 %v4035, %v4034
    %v4151 = vpack.c.bf16 %v4037, %v4036
    %v4152 = vpack.c.bf16 %v4039, %v4038
    %4153 = vmatprep.subr.bf16.mxu0 0
    %4154 = vmatpush1.bf16.msra.mxu0 %v4145
    %4155 = vmatprep.subr.bf16.mxu0 0
    %4156 = vmatpush1.bf16.msra.mxu0 %v4146
    %4157 = vmatprep.subr.bf16.mxu0 0
    %4158 = vmatpush1.bf16.msra.mxu0 %v4147
    %4159 = vmatprep.subr.bf16.mxu0 0
    %4160 = vmatpush1.bf16.msra.mxu0 %v4148
    %4161 = vmatprep.subr.bf16.mxu0 0
    %4162 = vmatpush1.bf16.msra.mxu0 %v4149
    %4163 = vmatprep.subr.bf16.mxu0 0
    %4164 = vmatpush1.bf16.msra.mxu0 %v4150
    %4165 = vmatprep.subr.bf16.mxu0 0
    %4166 = vmatpush1.bf16.msra.mxu0 %v4151
    %4167 = vmatprep.subr.bf16.mxu0 0
    %4168 = vmatpush1.bf16.msra.mxu0 %v4152
    %4169 = vmatprep.subr.bf16.mxu0 0
    %4170 = vmatpush1.bf16.msra.mxu0 0
    %4171 = vmatprep.subr.bf16.mxu0 0
    %4172 = vmatpush1.bf16.msra.mxu0 0
    %4173 = vmatprep.subr.bf16.mxu0 0
    %4174 = vmatpush1.bf16.msra.mxu0 0
    %4175 = vmatprep.subr.bf16.mxu0 0
    %4176 = vmatpush1.bf16.msra.mxu0 0
    %4177 = vmatprep.subr.bf16.mxu0 0
    %4178 = vmatpush1.bf16.msra.mxu0 0
    %4179 = vmatprep.subr.bf16.mxu0 0
    %4180 = vmatpush1.bf16.msra.mxu0 0
    %4181 = vmatprep.subr.bf16.mxu0 0
    %4182 = vmatpush1.bf16.msra.mxu0 0
    %4183 = vmatprep.subr.bf16.mxu0 0
    %4184 = vmatpush1.bf16.msra.mxu0 0
    %4185 = vmatprep.mubr.bf16.mxu0 0
    %4186 = vmatmul.mubr.bf16.gmra.mrb[0].mxu0 %v399
    %v4187 = vpop.f32.mrb[0].mxu0
    %v4188 = vadd.f32 0.0, %v4187
    %v4189 = vpop.f32.mrb[0].mxu0
    %v4190 = vpop.f32.mrb[0].mxu0
    %v4191 = vadd.f32 0.0, %v4190
    %v4192 = vpop.f32.mrb[0].mxu0
    %4193 = vmatprep.mubr.bf16.mxu0 0
    %4194 = vmatmul.mubr.bf16.gmra.mrb[0].mxu0 %v400
    %v4195 = vpop.f32.mrb[0].mxu0
    %v4196 = vadd.f32 0.0, %v4195
    %v4197 = vpop.f32.mrb[0].mxu0
    %v4198 = vpop.f32.mrb[0].mxu0
    %v4199 = vadd.f32 0.0, %v4198
    %v4200 = vpop.f32.mrb[0].mxu0
    %4201 = vmatprep.mubr.bf16.mxu0 0
    %4202 = vmatmul.mubr.bf16.gmra.mrb[0].mxu0 %v401
    %v4203 = vpop.f32.mrb[0].mxu0
    %v4204 = vadd.f32 0.0, %v4203
    %v4205 = vpop.f32.mrb[0].mxu0
    %v4206 = vpop.f32.mrb[0].mxu0
    %v4207 = vadd.f32 0.0, %v4206
    %v4208 = vpop.f32.mrb[0].mxu0
    %4209 = vmatprep.mubr.bf16.mxu0 0
    %4210 = vmatmul.mubr.bf16.gmra.mrb[0].mxu0 %v402
    %v4211 = vpop.f32.mrb[0].mxu0
    %v4212 = vadd.f32 0.0, %v4211
    %v4213 = vpop.f32.mrb[0].mxu0
    %v4214 = vpop.f32.mrb[0].mxu0
    %v4215 = vadd.f32 0.0, %v4214
    %v4216 = vpop.f32.mrb[0].mxu0
    %4217 = vmatprep.mubr.bf16.mxu0 0
    %4218 = vmatmul.mubr.bf16.gmra.mrb[0].mxu0 %v403
    %v4219 = vpop.f32.mrb[0].mxu0
    %v4220 = vadd.f32 0.0, %v4219
    %v4221 = vpop.f32.mrb[0].mxu0
    %v4222 = vpop.f32.mrb[0].mxu0
    %v4223 = vadd.f32 0.0, %v4222
    %v4224 = vpop.f32.mrb[0].mxu0
    %4225 = vmatprep.mubr.bf16.mxu0 0
    %4226 = vmatmul.mubr.bf16.gmra.mrb[0].mxu0 %v404
    %v4227 = vpop.f32.mrb[0].mxu0
    %v4228 = vadd.f32 0.0, %v4227
    %v4229 = vpop.f32.mrb[0].mxu0
    %v4230 = vpop.f32.mrb[0].mxu0
    %v4231 = vadd.f32 0.0, %v4230
    %v4232 = vpop.f32.mrb[0].mxu0
    %4233 = vmatprep.mubr.bf16.mxu0 0
    %4234 = vmatmul.mubr.bf16.gmra.mrb[0].mxu0 %v405
    %v4235 = vpop.f32.mrb[0].mxu0
    %v4236 = vadd.f32 0.0, %v4235
    %v4237 = vpop.f32.mrb[0].mxu0
    %v4238 = vpop.f32.mrb[0].mxu0
    %v4239 = vadd.f32 0.0, %v4238
    %v4240 = vpop.f32.mrb[0].mxu0
    %4241 = vmatprep.mubr.bf16.mxu0 0
    %4242 = vmatmul.mubr.bf16.gmra.mrb[0].mxu0 %v406
    %v4243 = vpop.f32.mrb[0].mxu0
    %v4244 = vadd.f32 0.0, %v4243
    %v4245 = vpop.f32.mrb[0].mxu0
    %v4246 = vpop.f32.mrb[0].mxu0
    %v4247 = vadd.f32 0.0, %v4246
    %v4248 = vpop.f32.mrb[0].mxu0
    %4249 = vdwg.mxu0
    %v4250 = vadd.f32 %v1945, %v4083
    %v4251 = vadd.f32 %v1951, %v4086
    %v4252 = vadd.f32 %v1957, %v4091
    %v4253 = vadd.f32 %v1963, %v4094
    %v4254 = vadd.f32 %v1969, %v4099
    %v4255 = vadd.f32 %v1975, %v4102
    %v4256 = vadd.f32 %v1981, %v4107
    %v4257 = vadd.f32 %v1987, %v4110
    %v4258 = vadd.f32 %v1993, %v4115
    %v4259 = vadd.f32 %v1999, %v4118
    %v4260 = vadd.f32 %v2005, %v4123
    %v4261 = vadd.f32 %v2011, %v4126
    %v4262 = vadd.f32 %v2017, %v4131
    %v4263 = vadd.f32 %v2023, %v4134
    %v4264 = vadd.f32 %v2029, %v4139
    %v4265 = vadd.f32 %v2035, %v4142
    %v4266 = vadd.f32 %v4250, %v4188
    %v4267 = vadd.f32 %v4251, %v4191
    %v4268 = vadd.f32 %v4252, %v4196
    %v4269 = vadd.f32 %v4253, %v4199
    %v4270 = vadd.f32 %v4254, %v4204
    %v4271 = vadd.f32 %v4255, %v4207
    %v4272 = vadd.f32 %v4256, %v4212
    %v4273 = vadd.f32 %v4257, %v4215
    %v4274 = vadd.f32 %v4258, %v4220
    %v4275 = vadd.f32 %v4259, %v4223
    %v4276 = vadd.f32 %v4260, %v4228
    %v4277 = vadd.f32 %v4261, %v4231
    %v4278 = vadd.f32 %v4262, %v4236
    %v4279 = vadd.f32 %v4263, %v4239
    %v4280 = vadd.f32 %v4264, %v4244
    %v4281 = vadd.f32 %v4265, %v4247
    %v4282 = vmax.f32 %v4266, 0.0
    %v4283 = vmax.f32 %v4267, 0.0
    %v4284 = vmax.f32 %v4268, 0.0
    %v4285 = vmax.f32 %v4269, 0.0
    %v4286 = vmax.f32 %v4270, 0.0
    %v4287 = vmax.f32 %v4271, 0.0
    %v4288 = vmax.f32 %v4272, 0.0
    %v4289 = vmax.f32 %v4273, 0.0
    %v4290 = vmax.f32 %v4274, 0.0
    %v4291 = vmax.f32 %v4275, 0.0
    %v4292 = vmax.f32 %v4276, 0.0
    %v4293 = vmax.f32 %v4277, 0.0
    %v4294 = vmax.f32 %v4278, 0.0
    %v4295 = vmax.f32 %v4279, 0.0
    %v4296 = vmax.f32 %v4280, 0.0
    %v4297 = vmax.f32 %v4281, 0.0
    %s4298 = scalar_lea.vmem %s45, %s1729
    %v4299 = vld [vmem:[%s4298] sm:$0x1]
    %s4300 = scalar_lea.vmem %s47, %s1729
    %v4301 = vld [vmem:[%s4300] sm:$0x1]
    %4302 = vadd.xlane.f32.xlu0 %v4282
    %v4303 = vpop.xlane.xlu0 %4302
    %4304 = vadd.xlane.f32.xlu0 %v4283
    %v4305 = vpop.xlane.xlu0 %4304
    %4306 = vadd.xlane.f32.xlu0 %v4284
    %v4307 = vpop.xlane.xlu0 %4306
    %4308 = vadd.xlane.f32.xlu0 %v4285
    %v4309 = vpop.xlane.xlu0 %4308
    %4310 = vadd.xlane.f32.xlu0 %v4286
    %v4311 = vpop.xlane.xlu0 %4310
    %4312 = vadd.xlane.f32.xlu0 %v4287
    %v4313 = vpop.xlane.xlu0 %4312
    %4314 = vadd.xlane.f32.xlu0 %v4288
    %v4315 = vpop.xlane.xlu0 %4314
    %4316 = vadd.xlane.f32.xlu0 %v4289
    %v4317 = vpop.xlane.xlu0 %4316
    %4318 = vadd.xlane.f32.xlu0 %v4290
    %v4319 = vpop.xlane.xlu0 %4318
    %4320 = vadd.xlane.f32.xlu0 %v4291
    %v4321 = vpop.xlane.xlu0 %4320
    %4322 = vadd.xlane.f32.xlu0 %v4292
    %v4323 = vpop.xlane.xlu0 %4322
    %4324 = vadd.xlane.f32.xlu0 %v4293
    %v4325 = vpop.xlane.xlu0 %4324
    %4326 = vadd.xlane.f32.xlu0 %v4294
    %v4327 = vpop.xlane.xlu0 %4326
    %4328 = vadd.xlane.f32.xlu0 %v4295
    %v4329 = vpop.xlane.xlu0 %4328
    %4330 = vadd.xlane.f32.xlu0 %v4296
    %v4331 = vpop.xlane.xlu0 %4330
    %4332 = vadd.xlane.f32.xlu0 %v4297
    %v4333 = vpop.xlane.xlu0 %4332
    %v4334 = vmul.f32 %v4303, 0.03125
    %v4335 = vmul.f32 %v4305, 0.03125
    %v4336 = vmul.f32 %v4307, 0.03125
    %v4337 = vmul.f32 %v4309, 0.03125
    %v4338 = vmul.f32 %v4311, 0.03125
    %v4339 = vmul.f32 %v4313, 0.03125
    %v4340 = vmul.f32 %v4315, 0.03125
    %v4341 = vmul.f32 %v4317, 0.03125
    %v4342 = vmul.f32 %v4319, 0.03125
    %v4343 = vmul.f32 %v4321, 0.03125
    %v4344 = vmul.f32 %v4323, 0.03125
    %v4345 = vmul.f32 %v4325, 0.03125
    %v4346 = vmul.f32 %v4327, 0.03125
    %v4347 = vmul.f32 %v4329, 0.03125
    %v4348 = vmul.f32 %v4331, 0.03125
    %v4349 = vmul.f32 %v4333, 0.03125
    %v4350 = vmul.f32 %v4282, %v4282
    %v4351 = vmul.f32 %v4283, %v4283
    %v4352 = vmul.f32 %v4284, %v4284
    %v4353 = vmul.f32 %v4285, %v4285
    %v4354 = vmul.f32 %v4286, %v4286
    %v4355 = vmul.f32 %v4287, %v4287
    %v4356 = vmul.f32 %v4288, %v4288
    %v4357 = vmul.f32 %v4289, %v4289
    %v4358 = vmul.f32 %v4290, %v4290
    %v4359 = vmul.f32 %v4291, %v4291
    %v4360 = vmul.f32 %v4292, %v4292
    %v4361 = vmul.f32 %v4293, %v4293
    %v4362 = vmul.f32 %v4294, %v4294
    %v4363 = vmul.f32 %v4295, %v4295
    %v4364 = vmul.f32 %v4296, %v4296
    %v4365 = vmul.f32 %v4297, %v4297
    %4366 = vadd.xlane.f32.xlu0 %v4350
    %v4367 = vpop.xlane.xlu0 %4366
    %4368 = vadd.xlane.f32.xlu0 %v4351
    %v4369 = vpop.xlane.xlu0 %4368
    %4370 = vadd.xlane.f32.xlu0 %v4352
    %v4371 = vpop.xlane.xlu0 %4370
    %4372 = vadd.xlane.f32.xlu0 %v4353
    %v4373 = vpop.xlane.xlu0 %4372
    %4374 = vadd.xlane.f32.xlu0 %v4354
    %v4375 = vpop.xlane.xlu0 %4374
    %4376 = vadd.xlane.f32.xlu0 %v4355
    %v4377 = vpop.xlane.xlu0 %4376
    %4378 = vadd.xlane.f32.xlu0 %v4356
    %v4379 = vpop.xlane.xlu0 %4378
    %4380 = vadd.xlane.f32.xlu0 %v4357
    %v4381 = vpop.xlane.xlu0 %4380
    %4382 = vadd.xlane.f32.xlu0 %v4358
    %v4383 = vpop.xlane.xlu0 %4382
    %4384 = vadd.xlane.f32.xlu0 %v4359
    %v4385 = vpop.xlane.xlu0 %4384
    %4386 = vadd.xlane.f32.xlu0 %v4360
    %v4387 = vpop.xlane.xlu0 %4386
    %4388 = vadd.xlane.f32.xlu0 %v4361
    %v4389 = vpop.xlane.xlu0 %4388
    %4390 = vadd.xlane.f32.xlu0 %v4362
    %v4391 = vpop.xlane.xlu0 %4390
    %4392 = vadd.xlane.f32.xlu0 %v4363
    %v4393 = vpop.xlane.xlu0 %4392
    %4394 = vadd.xlane.f32.xlu0 %v4364
    %v4395 = vpop.xlane.xlu0 %4394
    %4396 = vadd.xlane.f32.xlu0 %v4365
    %v4397 = vpop.xlane.xlu0 %4396
    %v4398 = vmul.f32 %v4367, 0.03125
    %v4399 = vmul.f32 %v4369, 0.03125
    %v4400 = vmul.f32 %v4371, 0.03125
    %v4401 = vmul.f32 %v4373, 0.03125
    %v4402 = vmul.f32 %v4375, 0.03125
    %v4403 = vmul.f32 %v4377, 0.03125
    %v4404 = vmul.f32 %v4379, 0.03125
    %v4405 = vmul.f32 %v4381, 0.03125
    %v4406 = vmul.f32 %v4383, 0.03125
    %v4407 = vmul.f32 %v4385, 0.03125
    %v4408 = vmul.f32 %v4387, 0.03125
    %v4409 = vmul.f32 %v4389, 0.03125
    %v4410 = vmul.f32 %v4391, 0.03125
    %v4411 = vmul.f32 %v4393, 0.03125
    %v4412 = vmul.f32 %v4395, 0.03125
    %v4413 = vmul.f32 %v4397, 0.03125
    %v4414 = vmul.f32 %v4334, %v4334
    %v4415 = vmul.f32 %v4335, %v4335
    %v4416 = vmul.f32 %v4336, %v4336
    %v4417 = vmul.f32 %v4337, %v4337
    %v4418 = vmul.f32 %v4338, %v4338
    %v4419 = vmul.f32 %v4339, %v4339
    %v4420 = vmul.f32 %v4340, %v4340
    %v4421 = vmul.f32 %v4341, %v4341
    %v4422 = vmul.f32 %v4342, %v4342
    %v4423 = vmul.f32 %v4343, %v4343
    %v4424 = vmul.f32 %v4344, %v4344
    %v4425 = vmul.f32 %v4345, %v4345
    %v4426 = vmul.f32 %v4346, %v4346
    %v4427 = vmul.f32 %v4347, %v4347
    %v4428 = vmul.f32 %v4348, %v4348
    %v4429 = vmul.f32 %v4349, %v4349
    %v4430 = vsub.f32 %v4398, %v4414
    %v4431 = vsub.f32 %v4399, %v4415
    %v4432 = vsub.f32 %v4400, %v4416
    %v4433 = vsub.f32 %v4401, %v4417
    %v4434 = vsub.f32 %v4402, %v4418
    %v4435 = vsub.f32 %v4403, %v4419
    %v4436 = vsub.f32 %v4404, %v4420
    %v4437 = vsub.f32 %v4405, %v4421
    %v4438 = vsub.f32 %v4406, %v4422
    %v4439 = vsub.f32 %v4407, %v4423
    %v4440 = vsub.f32 %v4408, %v4424
    %v4441 = vsub.f32 %v4409, %v4425
    %v4442 = vsub.f32 %v4410, %v4426
    %v4443 = vsub.f32 %v4411, %v4427
    %v4444 = vsub.f32 %v4412, %v4428
    %v4445 = vsub.f32 %v4413, %v4429
    %v4446 = vmax.f32 %v4430, 0.0
    %v4447 = vmax.f32 %v4431, 0.0
    %v4448 = vmax.f32 %v4432, 0.0
    %v4449 = vmax.f32 %v4433, 0.0
    %v4450 = vmax.f32 %v4434, 0.0
    %v4451 = vmax.f32 %v4435, 0.0
    %v4452 = vmax.f32 %v4436, 0.0
    %v4453 = vmax.f32 %v4437, 0.0
    %v4454 = vmax.f32 %v4438, 0.0
    %v4455 = vmax.f32 %v4439, 0.0
    %v4456 = vmax.f32 %v4440, 0.0
    %v4457 = vmax.f32 %v4441, 0.0
    %v4458 = vmax.f32 %v4442, 0.0
    %v4459 = vmax.f32 %v4443, 0.0
    %v4460 = vmax.f32 %v4444, 0.0
    %v4461 = vmax.f32 %v4445, 0.0
    %v4462 = vsub.f32 %v4282, %v4334
    %v4463 = vsub.f32 %v4283, %v4335
    %v4464 = vsub.f32 %v4284, %v4336
    %v4465 = vsub.f32 %v4285, %v4337
    %v4466 = vsub.f32 %v4286, %v4338
    %v4467 = vsub.f32 %v4287, %v4339
    %v4468 = vsub.f32 %v4288, %v4340
    %v4469 = vsub.f32 %v4289, %v4341
    %v4470 = vsub.f32 %v4290, %v4342
    %v4471 = vsub.f32 %v4291, %v4343
    %v4472 = vsub.f32 %v4292, %v4344
    %v4473 = vsub.f32 %v4293, %v4345
    %v4474 = vsub.f32 %v4294, %v4346
    %v4475 = vsub.f32 %v4295, %v4347
    %v4476 = vsub.f32 %v4296, %v4348
    %v4477 = vsub.f32 %v4297, %v4349
    %v4478 = vadd.f32 %v4446, 1e-05
    %v4479 = vadd.f32 %v4447, 1e-05
    %v4480 = vadd.f32 %v4448, 1e-05
    %v4481 = vadd.f32 %v4449, 1e-05
    %v4482 = vadd.f32 %v4450, 1e-05
    %v4483 = vadd.f32 %v4451, 1e-05
    %v4484 = vadd.f32 %v4452, 1e-05
    %v4485 = vadd.f32 %v4453, 1e-05
    %v4486 = vadd.f32 %v4454, 1e-05
    %v4487 = vadd.f32 %v4455, 1e-05
    %v4488 = vadd.f32 %v4456, 1e-05
    %v4489 = vadd.f32 %v4457, 1e-05
    %v4490 = vadd.f32 %v4458, 1e-05
    %v4491 = vadd.f32 %v4459, 1e-05
    %v4492 = vadd.f32 %v4460, 1e-05
    %v4493 = vadd.f32 %v4461, 1e-05
    %v4494 = vrsqrt.pop %v4478
    %v4495 = vrsqrt.pop %v4479
    %v4496 = vrsqrt.pop %v4480
    %v4497 = vrsqrt.pop %v4481
    %v4498 = vrsqrt.pop %v4482
    %v4499 = vrsqrt.pop %v4483
    %v4500 = vrsqrt.pop %v4484
    %v4501 = vrsqrt.pop %v4485
    %v4502 = vrsqrt.pop %v4486
    %v4503 = vrsqrt.pop %v4487
    %v4504 = vrsqrt.pop %v4488
    %v4505 = vrsqrt.pop %v4489
    %v4506 = vrsqrt.pop %v4490
    %v4507 = vrsqrt.pop %v4491
    %v4508 = vrsqrt.pop %v4492
    %v4509 = vrsqrt.pop %v4493
    %v4510 = vmul.f32 %v4462, %v4494
    %v4511 = vmul.f32 %v4463, %v4495
    %v4512 = vmul.f32 %v4464, %v4496
    %v4513 = vmul.f32 %v4465, %v4497
    %v4514 = vmul.f32 %v4466, %v4498
    %v4515 = vmul.f32 %v4467, %v4499
    %v4516 = vmul.f32 %v4468, %v4500
    %v4517 = vmul.f32 %v4469, %v4501
    %v4518 = vmul.f32 %v4470, %v4502
    %v4519 = vmul.f32 %v4471, %v4503
    %v4520 = vmul.f32 %v4472, %v4504
    %v4521 = vmul.f32 %v4473, %v4505
    %v4522 = vmul.f32 %v4474, %v4506
    %v4523 = vmul.f32 %v4475, %v4507
    %v4524 = vmul.f32 %v4476, %v4508
    %v4525 = vmul.f32 %v4477, %v4509
    %v4527 = vlaneseq
    %v4528 = vshrl.u32 %v4527, 7
    %v4529 = vsub.s32 0, %v4528
    %v4530 = vrot.slane %v4299, %v4529
    %v4532 = vmul.f32 %v4510, %v4530
    %v4533 = vmul.f32 %v4511, %v4530
    %v4534 = vmul.f32 %v4512, %v4530
    %v4535 = vmul.f32 %v4513, %v4530
    %v4536 = vmul.f32 %v4514, %v4530
    %v4537 = vmul.f32 %v4515, %v4530
    %v4538 = vmul.f32 %v4516, %v4530
    %v4539 = vmul.f32 %v4517, %v4530
    %v4540 = vmul.f32 %v4518, %v4530
    %v4541 = vmul.f32 %v4519, %v4530
    %v4542 = vmul.f32 %v4520, %v4530
    %v4543 = vmul.f32 %v4521, %v4530
    %v4544 = vmul.f32 %v4522, %v4530
    %v4545 = vmul.f32 %v4523, %v4530
    %v4546 = vmul.f32 %v4524, %v4530
    %v4547 = vmul.f32 %v4525, %v4530
    %v4549 = vlaneseq
    %v4550 = vshrl.u32 %v4549, 7
    %v4551 = vsub.s32 0, %v4550
    %v4552 = vrot.slane %v4301, %v4551
    %v4554 = vadd.f32 %v4532, %v4552
    %v4555 = vadd.f32 %v4533, %v4552
    %v4556 = vadd.f32 %v4534, %v4552
    %v4557 = vadd.f32 %v4535, %v4552
    %v4558 = vadd.f32 %v4536, %v4552
    %v4559 = vadd.f32 %v4537, %v4552
    %v4560 = vadd.f32 %v4538, %v4552
    %v4561 = vadd.f32 %v4539, %v4552
    %v4562 = vadd.f32 %v4540, %v4552
    %v4563 = vadd.f32 %v4541, %v4552
    %v4564 = vadd.f32 %v4542, %v4552
    %v4565 = vadd.f32 %v4543, %v4552
    %v4566 = vadd.f32 %v4544, %v4552
    %v4567 = vadd.f32 %v4545, %v4552
    %v4568 = vadd.f32 %v4546, %v4552
    %v4569 = vadd.f32 %v4547, %v4552
    %v4570 = vadd.f32 %v1734, %v4554
    %v4571 = vadd.f32 %v1735, %v4555
    %v4572 = vadd.f32 %v1736, %v4556
    %v4573 = vadd.f32 %v1737, %v4557
    %v4574 = vadd.f32 %v1738, %v4558
    %v4575 = vadd.f32 %v1739, %v4559
    %v4576 = vadd.f32 %v1740, %v4560
    %v4577 = vadd.f32 %v1741, %v4561
    %v4578 = vadd.f32 %v1742, %v4562
    %v4579 = vadd.f32 %v1743, %v4563
    %v4580 = vadd.f32 %v1744, %v4564
    %v4581 = vadd.f32 %v1745, %v4565
    %v4582 = vadd.f32 %v1746, %v4566
    %v4583 = vadd.f32 %v1747, %v4567
    %v4584 = vadd.f32 %v1748, %v4568
    %v4585 = vadd.f32 %v1749, %v4569
  $region134: #{forward.1} parent=0 // loop_footer
    %s1733 = sadd.s32 1, %s1729
  $region135: #{forward.1} parent=0 // loop_footer_branch
    %1728 = sbr.rel target = $region131
  $region136: #{forward.1} parent=0 // loop_exit
    _
  %v4586 = vld [vmem:[%s53] sm:$0xff]
  %v4587 = vld [vmem:[%s53 + $0x8] sm:$0xff]
  %v4588 = vld [vmem:[%s53 + $0x10] sm:$0xff]
  %v4589 = vld [vmem:[%s53 + $0x18] sm:$0xff]
  %v4590 = vld [vmem:[%s53 + $0x20] sm:$0xff]
  %v4591 = vld [vmem:[%s53 + $0x28] sm:$0xff]
  %v4592 = vld [vmem:[%s53 + $0x30] sm:$0xff]
  %v4593 = vld [vmem:[%s53 + $0x38] sm:$0xff]
  %v4594 = vld [vmem:[%s53 + $0x40] sm:$0xff]
  %v4595 = vld [vmem:[%s53 + $0x48] sm:$0xff]
  %v4596 = vld [vmem:[%s53 + $0x50] sm:$0xff]
  %v4597 = vld [vmem:[%s53 + $0x58] sm:$0xff]
  %v4598 = vld [vmem:[%s53 + $0x60] sm:$0xff]
  %v4599 = vld [vmem:[%s53 + $0x68] sm:$0xff]
  %v4600 = vld [vmem:[%s53 + $0x70] sm:$0xff]
  %v4601 = vld [vmem:[%s53 + $0x78] sm:$0xff]
  %4602 = vmatprep.subr.mxu0 0.0
  %4603 = vmatpush1.msra.mxu0 %v4586
  %4604 = vmatprep.subr.mxu0 0.0
  %4605 = vmatpush1.msra.mxu0 %v4587
  %4606 = vmatprep.subr.mxu0 0.0
  %4607 = vmatpush1.msra.mxu0 %v4588
  %4608 = vmatprep.subr.mxu0 0.0
  %4609 = vmatpush1.msra.mxu0 %v4589
  %4610 = vmatprep.subr.mxu0 0.0
  %4611 = vmatpush1.msra.mxu0 %v4590
  %4612 = vmatprep.subr.mxu0 0.0
  %4613 = vmatpush1.msra.mxu0 %v4591
  %4614 = vmatprep.subr.mxu0 0.0
  %4615 = vmatpush1.msra.mxu0 %v4592
  %4616 = vmatprep.subr.mxu0 0.0
  %4617 = vmatpush1.msra.mxu0 %v4593
  %4618 = vmatprep.subr.mxu0 0.0
  %4619 = vmatpush1.msra.mxu0 %v4594
  %4620 = vmatprep.subr.mxu0 0.0
  %4621 = vmatpush1.msra.mxu0 %v4595
  %4622 = vmatprep.subr.mxu0 0.0
  %4623 = vmatpush1.msra.mxu0 %v4596
  %4624 = vmatprep.subr.mxu0 0.0
  %4625 = vmatpush1.msra.mxu0 %v4597
  %4626 = vmatprep.subr.mxu0 0.0
  %4627 = vmatpush1.msra.mxu0 %v4598
  %4628 = vmatprep.subr.mxu0 0.0
  %4629 = vmatpush1.msra.mxu0 %v4599
  %4630 = vmatprep.subr.mxu0 0.0
  %4631 = vmatpush1.msra.mxu0 %v4600
  %4632 = vmatprep.subr.mxu0 0.0
  %4633 = vmatpush1.msra.mxu0 %v4601
  %4634 = vmatprep.subr.mxu0 0.0
  %4635 = vmatpush1.msra.mxu0 0.0
  %4636 = vmatprep.subr.mxu0 0.0
  %4637 = vmatpush1.msra.mxu0 0.0
  %4638 = vmatprep.subr.mxu0 0.0
  %4639 = vmatpush1.msra.mxu0 0.0
  %4640 = vmatprep.subr.mxu0 0.0
  %4641 = vmatpush1.msra.mxu0 0.0
  %4642 = vmatprep.subr.mxu0 0.0
  %4643 = vmatpush1.msra.mxu0 0.0
  %4644 = vmatprep.subr.mxu0 0.0
  %4645 = vmatpush1.msra.mxu0 0.0
  %4646 = vmatprep.subr.mxu0 0.0
  %4647 = vmatpush1.msra.mxu0 0.0
  %4648 = vmatprep.subr.mxu0 0.0
  %4649 = vmatpush1.msra.mxu0 0.0
  %4650 = vmatprep.subr.mxu0 0.0
  %4651 = vmatpush1.msra.mxu0 0.0
  %4652 = vmatprep.subr.mxu0 0.0
  %4653 = vmatpush1.msra.mxu0 0.0
  %4654 = vmatprep.subr.mxu0 0.0
  %4655 = vmatpush1.msra.mxu0 0.0
  %4656 = vmatprep.subr.mxu0 0.0
  %4657 = vmatpush1.msra.mxu0 0.0
  %4658 = vmatprep.subr.mxu0 0.0
  %4659 = vmatpush1.msra.mxu0 0.0
  %4660 = vmatprep.subr.mxu0 0.0
  %4661 = vmatpush1.msra.mxu0 0.0
  %4662 = vmatprep.subr.mxu0 0.0
  %4663 = vmatpush1.msra.mxu0 0.0
  %4664 = vmatprep.subr.mxu0 0.0
  %4665 = vmatpush1.msra.mxu0 0.0
  %4666 = vmatprep.mubr.f32.mxu0 0.0
  %4667 = vmatmul.mubr.f32.gmra.mrb[0].mxu0 %v1734
  %v4668 = vpop.f32.mrb[0].mxu0
  %v4669 = vadd.f32 0.0, %v4668
  %v4670 = vpop.f32.mrb[0].mxu0
  %4671 = vmatprep.mubr.f32.mxu0 0.0
  %4672 = vmatmul.mubr.f32.gmra.mrb[0].mxu0 %v1735
  %v4673 = vpop.f32.mrb[0].mxu0
  %v4674 = vadd.f32 0.0, %v4673
  %v4675 = vpop.f32.mrb[0].mxu0
  %4676 = vmatprep.mubr.f32.mxu0 0.0
  %4677 = vmatmul.mubr.f32.gmra.mrb[0].mxu0 %v1736
  %v4678 = vpop.f32.mrb[0].mxu0
  %v4679 = vadd.f32 0.0, %v4678
  %v4680 = vpop.f32.mrb[0].mxu0
  %4681 = vmatprep.mubr.f32.mxu0 0.0
  %4682 = vmatmul.mubr.f32.gmra.mrb[0].mxu0 %v1737
  %v4683 = vpop.f32.mrb[0].mxu0
  %v4684 = vadd.f32 0.0, %v4683
  %v4685 = vpop.f32.mrb[0].mxu0
  %4686 = vmatprep.mubr.f32.mxu0 0.0
  %4687 = vmatmul.mubr.f32.gmra.mrb[0].mxu0 %v1738
  %v4688 = vpop.f32.mrb[0].mxu0
  %v4689 = vadd.f32 0.0, %v4688
  %v4690 = vpop.f32.mrb[0].mxu0
  %4691 = vmatprep.mubr.f32.mxu0 0.0
  %4692 = vmatmul.mubr.f32.gmra.mrb[0].mxu0 %v1739
  %v4693 = vpop.f32.mrb[0].mxu0
  %v4694 = vadd.f32 0.0, %v4693
  %v4695 = vpop.f32.mrb[0].mxu0
  %4696 = vmatprep.mubr.f32.mxu0 0.0
  %4697 = vmatmul.mubr.f32.gmra.mrb[0].mxu0 %v1740
  %v4698 = vpop.f32.mrb[0].mxu0
  %v4699 = vadd.f32 0.0, %v4698
  %v4700 = vpop.f32.mrb[0].mxu0
  %4701 = vmatprep.mubr.f32.mxu0 0.0
  %4702 = vmatmul.mubr.f32.gmra.mrb[0].mxu0 %v1741
  %v4703 = vpop.f32.mrb[0].mxu0
  %v4704 = vadd.f32 0.0, %v4703
  %v4705 = vpop.f32.mrb[0].mxu0
  %4706 = vmatprep.mubr.f32.mxu0 0.0
  %4707 = vmatmul.mubr.f32.gmra.mrb[0].mxu0 %v1742
  %v4708 = vpop.f32.mrb[0].mxu0
  %v4709 = vadd.f32 0.0, %v4708
  %v4710 = vpop.f32.mrb[0].mxu0
  %4711 = vmatprep.mubr.f32.mxu0 0.0
  %4712 = vmatmul.mubr.f32.gmra.mrb[0].mxu0 %v1743
  %v4713 = vpop.f32.mrb[0].mxu0
  %v4714 = vadd.f32 0.0, %v4713
  %v4715 = vpop.f32.mrb[0].mxu0
  %4716 = vmatprep.mubr.f32.mxu0 0.0
  %4717 = vmatmul.mubr.f32.gmra.mrb[0].mxu0 %v1744
  %v4718 = vpop.f32.mrb[0].mxu0
  %v4719 = vadd.f32 0.0, %v4718
  %v4720 = vpop.f32.mrb[0].mxu0
  %4721 = vmatprep.mubr.f32.mxu0 0.0
  %4722 = vmatmul.mubr.f32.gmra.mrb[0].mxu0 %v1745
  %v4723 = vpop.f32.mrb[0].mxu0
  %v4724 = vadd.f32 0.0, %v4723
  %v4725 = vpop.f32.mrb[0].mxu0
  %4726 = vmatprep.mubr.f32.mxu0 0.0
  %4727 = vmatmul.mubr.f32.gmra.mrb[0].mxu0 %v1746
  %v4728 = vpop.f32.mrb[0].mxu0
  %v4729 = vadd.f32 0.0, %v4728
  %v4730 = vpop.f32.mrb[0].mxu0
  %4731 = vmatprep.mubr.f32.mxu0 0.0
  %4732 = vmatmul.mubr.f32.gmra.mrb[0].mxu0 %v1747
  %v4733 = vpop.f32.mrb[0].mxu0
  %v4734 = vadd.f32 0.0, %v4733
  %v4735 = vpop.f32.mrb[0].mxu0
  %4736 = vmatprep.mubr.f32.mxu0 0.0
  %4737 = vmatmul.mubr.f32.gmra.mrb[0].mxu0 %v1748
  %v4738 = vpop.f32.mrb[0].mxu0
  %v4739 = vadd.f32 0.0, %v4738
  %v4740 = vpop.f32.mrb[0].mxu0
  %4741 = vmatprep.mubr.f32.mxu0 0.0
  %4742 = vmatmul.mubr.f32.gmra.mrb[0].mxu0 %v1749
  %v4743 = vpop.f32.mrb[0].mxu0
  %v4744 = vadd.f32 0.0, %v4743
  %v4745 = vpop.f32.mrb[0].mxu0
  %4746 = vdwg.mxu0
  %v4747 = vld [vmem:[%s55] sm:$0xff]
  %v4748 = vld [vmem:[%s55 + $0x8] sm:$0xff]
  %v4749 = vld [vmem:[%s55 + $0x10] sm:$0xff]
  %v4750 = vld [vmem:[%s55 + $0x18] sm:$0xff]
  %v4751 = vld [vmem:[%s55 + $0x20] sm:$0xff]
  %v4752 = vld [vmem:[%s55 + $0x28] sm:$0xff]
  %v4753 = vld [vmem:[%s55 + $0x30] sm:$0xff]
  %v4754 = vld [vmem:[%s55 + $0x38] sm:$0xff]
  %v4755 = vld [vmem:[%s55 + $0x40] sm:$0xff]
  %v4756 = vld [vmem:[%s55 + $0x48] sm:$0xff]
  %v4757 = vld [vmem:[%s55 + $0x50] sm:$0xff]
  %v4758 = vld [vmem:[%s55 + $0x58] sm:$0xff]
  %v4759 = vld [vmem:[%s55 + $0x60] sm:$0xff]
  %v4760 = vld [vmem:[%s55 + $0x68] sm:$0xff]
  %v4761 = vld [vmem:[%s55 + $0x70] sm:$0xff]
  %v4762 = vld [vmem:[%s55 + $0x78] sm:$0xff]
  %4763 = vmatprep.subr.mxu0 0.0
  %4764 = vmatpush1.msra.mxu0 %v4747
  %4765 = vmatprep.subr.mxu0 0.0
  %4766 = vmatpush1.msra.mxu0 %v4748
  %4767 = vmatprep.subr.mxu0 0.0
  %4768 = vmatpush1.msra.mxu0 %v4749
  %4769 = vmatprep.subr.mxu0 0.0
  %4770 = vmatpush1.msra.mxu0 %v4750
  %4771 = vmatprep.subr.mxu0 0.0
  %4772 = vmatpush1.msra.mxu0 %v4751
  %4773 = vmatprep.subr.mxu0 0.0
  %4774 = vmatpush1.msra.mxu0 %v4752
  %4775 = vmatprep.subr.mxu0 0.0
  %4776 = vmatpush1.msra.mxu0 %v4753
  %4777 = vmatprep.subr.mxu0 0.0
  %4778 = vmatpush1.msra.mxu0 %v4754
  %4779 = vmatprep.subr.mxu0 0.0
  %4780 = vmatpush1.msra.mxu0 %v4755
  %4781 = vmatprep.subr.mxu0 0.0
  %4782 = vmatpush1.msra.mxu0 %v4756
  %4783 = vmatprep.subr.mxu0 0.0
  %4784 = vmatpush1.msra.mxu0 %v4757
  %4785 = vmatprep.subr.mxu0 0.0
  %4786 = vmatpush1.msra.mxu0 %v4758
  %4787 = vmatprep.subr.mxu0 0.0
  %4788 = vmatpush1.msra.mxu0 %v4759
  %4789 = vmatprep.subr.mxu0 0.0
  %4790 = vmatpush1.msra.mxu0 %v4760
  %4791 = vmatprep.subr.mxu0 0.0
  %4792 = vmatpush1.msra.mxu0 %v4761
  %4793 = vmatprep.subr.mxu0 0.0
  %4794 = vmatpush1.msra.mxu0 %v4762
  %4795 = vmatprep.subr.mxu0 0.0
  %4796 = vmatpush1.msra.mxu0 0.0
  %4797 = vmatprep.subr.mxu0 0.0
  %4798 = vmatpush1.msra.mxu0 0.0
  %4799 = vmatprep.subr.mxu0 0.0
  %4800 = vmatpush1.msra.mxu0 0.0
  %4801 = vmatprep.subr.mxu0 0.0
  %4802 = vmatpush1.msra.mxu0 0.0
  %4803 = vmatprep.subr.mxu0 0.0
  %4804 = vmatpush1.msra.mxu0 0.0
  %4805 = vmatprep.subr.mxu0 0.0
  %4806 = vmatpush1.msra.mxu0 0.0
  %4807 = vmatprep.subr.mxu0 0.0
  %4808 = vmatpush1.msra.mxu0 0.0
  %4809 = vmatprep.subr.mxu0 0.0
  %4810 = vmatpush1.msra.mxu0 0.0
  %4811 = vmatprep.subr.mxu0 0.0
  %4812 = vmatpush1.msra.mxu0 0.0
  %4813 = vmatprep.subr.mxu0 0.0
  %4814 = vmatpush1.msra.mxu0 0.0
  %4815 = vmatprep.subr.mxu0 0.0
  %4816 = vmatpush1.msra.mxu0 0.0
  %4817 = vmatprep.subr.mxu0 0.0
  %4818 = vmatpush1.msra.mxu0 0.0
  %4819 = vmatprep.subr.mxu0 0.0
  %4820 = vmatpush1.msra.mxu0 0.0
  %4821 = vmatprep.subr.mxu0 0.0
  %4822 = vmatpush1.msra.mxu0 0.0
  %4823 = vmatprep.subr.mxu0 0.0
  %4824 = vmatpush1.msra.mxu0 0.0
  %4825 = vmatprep.subr.mxu0 0.0
  %4826 = vmatpush1.msra.mxu0 0.0
  %4827 = vmatprep.mubr.f32.mxu0 0.0
  %4828 = vmatmul.mubr.f32.gmra.mrb[0].mxu0 %v1734
  %v4829 = vpop.f32.mrb[0].mxu0
  %v4830 = vadd.f32 0.0, %v4829
  %v4831 = vpop.f32.mrb[0].mxu0
  %4832 = vmatprep.mubr.f32.mxu0 0.0
  %4833 = vmatmul.mubr.f32.gmra.mrb[0].mxu0 %v1735
  %v4834 = vpop.f32.mrb[0].mxu0
  %v4835 = vadd.f32 0.0, %v4834
  %v4836 = vpop.f32.mrb[0].mxu0
  %4837 = vmatprep.mubr.f32.mxu0 0.0
  %4838 = vmatmul.mubr.f32.gmra.mrb[0].mxu0 %v1736
  %v4839 = vpop.f32.mrb[0].mxu0
  %v4840 = vadd.f32 0.0, %v4839
  %v4841 = vpop.f32.mrb[0].mxu0
  %4842 = vmatprep.mubr.f32.mxu0 0.0
  %4843 = vmatmul.mubr.f32.gmra.mrb[0].mxu0 %v1737
  %v4844 = vpop.f32.mrb[0].mxu0
  %v4845 = vadd.f32 0.0, %v4844
  %v4846 = vpop.f32.mrb[0].mxu0
  %4847 = vmatprep.mubr.f32.mxu0 0.0
  %4848 = vmatmul.mubr.f32.gmra.mrb[0].mxu0 %v1738
  %v4849 = vpop.f32.mrb[0].mxu0
  %v4850 = vadd.f32 0.0, %v4849
  %v4851 = vpop.f32.mrb[0].mxu0
  %4852 = vmatprep.mubr.f32.mxu0 0.0
  %4853 = vmatmul.mubr.f32.gmra.mrb[0].mxu0 %v1739
  %v4854 = vpop.f32.mrb[0].mxu0
  %v4855 = vadd.f32 0.0, %v4854
  %v4856 = vpop.f32.mrb[0].mxu0
  %4857 = vmatprep.mubr.f32.mxu0 0.0
  %4858 = vmatmul.mubr.f32.gmra.mrb[0].mxu0 %v1740
  %v4859 = vpop.f32.mrb[0].mxu0
  %v4860 = vadd.f32 0.0, %v4859
  %v4861 = vpop.f32.mrb[0].mxu0
  %4862 = vmatprep.mubr.f32.mxu0 0.0
  %4863 = vmatmul.mubr.f32.gmra.mrb[0].mxu0 %v1741
  %v4864 = vpop.f32.mrb[0].mxu0
  %v4865 = vadd.f32 0.0, %v4864
  %v4866 = vpop.f32.mrb[0].mxu0
  %4867 = vmatprep.mubr.f32.mxu0 0.0
  %4868 = vmatmul.mubr.f32.gmra.mrb[0].mxu0 %v1742
  %v4869 = vpop.f32.mrb[0].mxu0
  %v4870 = vadd.f32 0.0, %v4869
  %v4871 = vpop.f32.mrb[0].mxu0
  %4872 = vmatprep.mubr.f32.mxu0 0.0
  %4873 = vmatmul.mubr.f32.gmra.mrb[0].mxu0 %v1743
  %v4874 = vpop.f32.mrb[0].mxu0
  %v4875 = vadd.f32 0.0, %v4874
  %v4876 = vpop.f32.mrb[0].mxu0
  %4877 = vmatprep.mubr.f32.mxu0 0.0
  %4878 = vmatmul.mubr.f32.gmra.mrb[0].mxu0 %v1744
  %v4879 = vpop.f32.mrb[0].mxu0
  %v4880 = vadd.f32 0.0, %v4879
  %v4881 = vpop.f32.mrb[0].mxu0
  %4882 = vmatprep.mubr.f32.mxu0 0.0
  %4883 = vmatmul.mubr.f32.gmra.mrb[0].mxu0 %v1745
  %v4884 = vpop.f32.mrb[0].mxu0
  %v4885 = vadd.f32 0.0, %v4884
  %v4886 = vpop.f32.mrb[0].mxu0
  %4887 = vmatprep.mubr.f32.mxu0 0.0
  %4888 = vmatmul.mubr.f32.gmra.mrb[0].mxu0 %v1746
  %v4889 = vpop.f32.mrb[0].mxu0
  %v4890 = vadd.f32 0.0, %v4889
  %v4891 = vpop.f32.mrb[0].mxu0
  %4892 = vmatprep.mubr.f32.mxu0 0.0
  %4893 = vmatmul.mubr.f32.gmra.mrb[0].mxu0 %v1747
  %v4894 = vpop.f32.mrb[0].mxu0
  %v4895 = vadd.f32 0.0, %v4894
  %v4896 = vpop.f32.mrb[0].mxu0
  %4897 = vmatprep.mubr.f32.mxu0 0.0
  %4898 = vmatmul.mubr.f32.gmra.mrb[0].mxu0 %v1748
  %v4899 = vpop.f32.mrb[0].mxu0
  %v4900 = vadd.f32 0.0, %v4899
  %v4901 = vpop.f32.mrb[0].mxu0
  %4902 = vmatprep.mubr.f32.mxu0 0.0
  %4903 = vmatmul.mubr.f32.gmra.mrb[0].mxu0 %v1749
  %v4904 = vpop.f32.mrb[0].mxu0
  %v4905 = vadd.f32 0.0, %v4904
  %v4906 = vpop.f32.mrb[0].mxu0
  %4907 = vdwg.mxu0
  %v4908 = vpack.c.bf16 %v4674, %v4669
  %v4909 = vpack.c.bf16 %v4684, %v4679
  %v4910 = vpack.c.bf16 %v4694, %v4689
  %v4911 = vpack.c.bf16 %v4704, %v4699
  %v4912 = vpack.c.bf16 %v4714, %v4709
  %v4913 = vpack.c.bf16 %v4724, %v4719
  %v4914 = vpack.c.bf16 %v4734, %v4729
  %v4915 = vpack.c.bf16 %v4744, %v4739
  %v4916 = vpack.c.bf16 %v4835, %v4830
  %v4917 = vpack.c.bf16 %v4845, %v4840
  %v4918 = vpack.c.bf16 %v4855, %v4850
  %v4919 = vpack.c.bf16 %v4865, %v4860
  %v4920 = vpack.c.bf16 %v4875, %v4870
  %v4921 = vpack.c.bf16 %v4885, %v4880
  %v4922 = vpack.c.bf16 %v4895, %v4890
  %v4923 = vpack.c.bf16 %v4905, %v4900
  %4924 = vmatprep.subr.bf16.mxu0 0
  %4925 = vmatpush1.bf16.msra.mxu0 %v4916
  %4926 = vmatprep.subr.bf16.mxu0 0
  %4927 = vmatpush1.bf16.msra.mxu0 %v4917
  %4928 = vmatprep.subr.bf16.mxu0 0
  %4929 = vmatpush1.bf16.msra.mxu0 %v4918
  %4930 = vmatprep.subr.bf16.mxu0 0
  %4931 = vmatpush1.bf16.msra.mxu0 %v4919
  %4932 = vmatprep.subr.bf16.mxu0 0
  %4933 = vmatpush1.bf16.msra.mxu0 %v4920
  %4934 = vmatprep.subr.bf16.mxu0 0
  %4935 = vmatpush1.bf16.msra.mxu0 %v4921
  %4936 = vmatprep.subr.bf16.mxu0 0
  %4937 = vmatpush1.bf16.msra.mxu0 %v4922
  %4938 = vmatprep.subr.bf16.mxu0 0
  %4939 = vmatpush1.bf16.msra.mxu0 %v4923
  %4940 = vmatprep.subr.bf16.mxu0 0
  %4941 = vmatpush1.bf16.msra.mxu0 0
  %4942 = vmatprep.subr.bf16.mxu0 0
  %4943 = vmatpush1.bf16.msra.mxu0 0
  %4944 = vmatprep.subr.bf16.mxu0 0
  %4945 = vmatpush1.bf16.msra.mxu0 0
  %4946 = vmatprep.subr.bf16.mxu0 0
  %4947 = vmatpush1.bf16.msra.mxu0 0
  %4948 = vmatprep.subr.bf16.mxu0 0
  %4949 = vmatpush1.bf16.msra.mxu0 0
  %4950 = vmatprep.subr.bf16.mxu0 0
  %4951 = vmatpush1.bf16.msra.mxu0 0
  %4952 = vmatprep.subr.bf16.mxu0 0
  %4953 = vmatpush1.bf16.msra.mxu0 0
  %4954 = vmatprep.subr.bf16.mxu0 0
  %4955 = vmatpush1.bf16.msra.mxu0 0
  %4956 = vmatprep.mubr.bf16.mxu0 0
  %4957 = vmatmul.mubr.bf16.gmra.mrb[0].mxu0 %v354
  %v4958 = vpop.f32.mrb[0].mxu0
  %v4959 = vadd.f32 0.0, %v4958
  %v4960 = vpop.f32.mrb[0].mxu0
  %v4961 = vpop.f32.mrb[0].mxu0
  %v4962 = vadd.f32 0.0, %v4961
  %v4963 = vpop.f32.mrb[0].mxu0
  %4964 = vmatprep.mubr.bf16.mxu0 0
  %4965 = vmatmul.mubr.bf16.gmra.mrb[0].mxu0 %v355
  %v4966 = vpop.f32.mrb[0].mxu0
  %v4967 = vadd.f32 0.0, %v4966
  %v4968 = vpop.f32.mrb[0].mxu0
  %v4969 = vpop.f32.mrb[0].mxu0
  %v4970 = vadd.f32 0.0, %v4969
  %v4971 = vpop.f32.mrb[0].mxu0
  %4972 = vmatprep.mubr.bf16.mxu0 0
  %4973 = vmatmul.mubr.bf16.gmra.mrb[0].mxu0 %v356
  %v4974 = vpop.f32.mrb[0].mxu0
  %v4975 = vadd.f32 0.0, %v4974
  %v4976 = vpop.f32.mrb[0].mxu0
  %v4977 = vpop.f32.mrb[0].mxu0
  %v4978 = vadd.f32 0.0, %v4977
  %v4979 = vpop.f32.mrb[0].mxu0
  %4980 = vmatprep.mubr.bf16.mxu0 0
  %4981 = vmatmul.mubr.bf16.gmra.mrb[0].mxu0 %v357
  %v4982 = vpop.f32.mrb[0].mxu0
  %v4983 = vadd.f32 0.0, %v4982
  %v4984 = vpop.f32.mrb[0].mxu0
  %v4985 = vpop.f32.mrb[0].mxu0
  %v4986 = vadd.f32 0.0, %v4985
  %v4987 = vpop.f32.mrb[0].mxu0
  %4988 = vmatprep.mubr.bf16.mxu0 0
  %4989 = vmatmul.mubr.bf16.gmra.mrb[0].mxu0 %v358
  %v4990 = vpop.f32.mrb[0].mxu0
  %v4991 = vadd.f32 0.0, %v4990
  %v4992 = vpop.f32.mrb[0].mxu0
  %v4993 = vpop.f32.mrb[0].mxu0
  %v4994 = vadd.f32 0.0, %v4993
  %v4995 = vpop.f32.mrb[0].mxu0
  %4996 = vmatprep.mubr.bf16.mxu0 0
  %4997 = vmatmul.mubr.bf16.gmra.mrb[0].mxu0 %v359
  %v4998 = vpop.f32.mrb[0].mxu0
  %v4999 = vadd.f32 0.0, %v4998
  %v5000 = vpop.f32.mrb[0].mxu0
  %v5001 = vpop.f32.mrb[0].mxu0
  %v5002 = vadd.f32 0.0, %v5001
  %v5003 = vpop.f32.mrb[0].mxu0
  %5004 = vmatprep.mubr.bf16.mxu0 0
  %5005 = vmatmul.mubr.bf16.gmra.mrb[0].mxu0 %v360
  %v5006 = vpop.f32.mrb[0].mxu0
  %v5007 = vadd.f32 0.0, %v5006
  %v5008 = vpop.f32.mrb[0].mxu0
  %v5009 = vpop.f32.mrb[0].mxu0
  %v5010 = vadd.f32 0.0, %v5009
  %v5011 = vpop.f32.mrb[0].mxu0
  %5012 = vmatprep.mubr.bf16.mxu0 0
  %5013 = vmatmul.mubr.bf16.gmra.mrb[0].mxu0 %v361
  %v5014 = vpop.f32.mrb[0].mxu0
  %v5015 = vadd.f32 0.0, %v5014
  %v5016 = vpop.f32.mrb[0].mxu0
  %v5017 = vpop.f32.mrb[0].mxu0
  %v5018 = vadd.f32 0.0, %v5017
  %v5019 = vpop.f32.mrb[0].mxu0
  %5020 = vdwg.mxu0
  %5021 = vmatprep.subr.bf16.mxu0 0
  %5022 = vmatpush1.bf16.msra.mxu0 %v4908
  %5023 = vmatprep.subr.bf16.mxu0 0
  %5024 = vmatpush1.bf16.msra.mxu0 %v4909
  %5025 = vmatprep.subr.bf16.mxu0 0
  %5026 = vmatpush1.bf16.msra.mxu0 %v4910
  %5027 = vmatprep.subr.bf16.mxu0 0
  %5028 = vmatpush1.bf16.msra.mxu0 %v4911
  %5029 = vmatprep.subr.bf16.mxu0 0
  %5030 = vmatpush1.bf16.msra.mxu0 %v4912
  %5031 = vmatprep.subr.bf16.mxu0 0
  %5032 = vmatpush1.bf16.msra.mxu0 %v4913
  %5033 = vmatprep.subr.bf16.mxu0 0
  %5034 = vmatpush1.bf16.msra.mxu0 %v4914
  %5035 = vmatprep.subr.bf16.mxu0 0
  %5036 = vmatpush1.bf16.msra.mxu0 %v4915
  %5037 = vmatprep.subr.bf16.mxu0 0
  %5038 = vmatpush1.bf16.msra.mxu0 0
  %5039 = vmatprep.subr.bf16.mxu0 0
  %5040 = vmatpush1.bf16.msra.mxu0 0
  %5041 = vmatprep.subr.bf16.mxu0 0
  %5042 = vmatpush1.bf16.msra.mxu0 0
  %5043 = vmatprep.subr.bf16.mxu0 0
  %5044 = vmatpush1.bf16.msra.mxu0 0
  %5045 = vmatprep.subr.bf16.mxu0 0
  %5046 = vmatpush1.bf16.msra.mxu0 0
  %5047 = vmatprep.subr.bf16.mxu0 0
  %5048 = vmatpush1.bf16.msra.mxu0 0
  %5049 = vmatprep.subr.bf16.mxu0 0
  %5050 = vmatpush1.bf16.msra.mxu0 0
  %5051 = vmatprep.subr.bf16.mxu0 0
  %5052 = vmatpush1.bf16.msra.mxu0 0
  %5053 = vmatprep.mubr.bf16.mxu0 0
  %5054 = vmatmul.mubr.bf16.gmra.mrb[0].mxu0 %v250
  %v5055 = vpop.f32.mrb[0].mxu0
  %v5056 = vadd.f32 %v4959, %v5055
  %v5057 = vpop.f32.mrb[0].mxu0
  %v5058 = vpop.f32.mrb[0].mxu0
  %v5059 = vadd.f32 %v4962, %v5058
  %v5060 = vpop.f32.mrb[0].mxu0
  %5061 = vmatprep.mubr.bf16.mxu0 0
  %5062 = vmatmul.mubr.bf16.gmra.mrb[0].mxu0 %v251
  %v5063 = vpop.f32.mrb[0].mxu0
  %v5064 = vadd.f32 %v4967, %v5063
  %v5065 = vpop.f32.mrb[0].mxu0
  %v5066 = vpop.f32.mrb[0].mxu0
  %v5067 = vadd.f32 %v4970, %v5066
  %v5068 = vpop.f32.mrb[0].mxu0
  %5069 = vmatprep.mubr.bf16.mxu0 0
  %5070 = vmatmul.mubr.bf16.gmra.mrb[0].mxu0 %v252
  %v5071 = vpop.f32.mrb[0].mxu0
  %v5072 = vadd.f32 %v4975, %v5071
  %v5073 = vpop.f32.mrb[0].mxu0
  %v5074 = vpop.f32.mrb[0].mxu0
  %v5075 = vadd.f32 %v4978, %v5074
  %v5076 = vpop.f32.mrb[0].mxu0
  %5077 = vmatprep.mubr.bf16.mxu0 0
  %5078 = vmatmul.mubr.bf16.gmra.mrb[0].mxu0 %v253
  %v5079 = vpop.f32.mrb[0].mxu0
  %v5080 = vadd.f32 %v4983, %v5079
  %v5081 = vpop.f32.mrb[0].mxu0
  %v5082 = vpop.f32.mrb[0].mxu0
  %v5083 = vadd.f32 %v4986, %v5082
  %v5084 = vpop.f32.mrb[0].mxu0
  %5085 = vmatprep.mubr.bf16.mxu0 0
  %5086 = vmatmul.mubr.bf16.gmra.mrb[0].mxu0 %v254
  %v5087 = vpop.f32.mrb[0].mxu0
  %v5088 = vadd.f32 %v4991, %v5087
  %v5089 = vpop.f32.mrb[0].mxu0
  %v5090 = vpop.f32.mrb[0].mxu0
  %v5091 = vadd.f32 %v4994, %v5090
  %v5092 = vpop.f32.mrb[0].mxu0
  %5093 = vmatprep.mubr.bf16.mxu0 0
  %5094 = vmatmul.mubr.bf16.gmra.mrb[0].mxu0 %v255
  %v5095 = vpop.f32.mrb[0].mxu0
  %v5096 = vadd.f32 %v4999, %v5095
  %v5097 = vpop.f32.mrb[0].mxu0
  %v5098 = vpop.f32.mrb[0].mxu0
  %v5099 = vadd.f32 %v5002, %v5098
  %v5100 = vpop.f32.mrb[0].mxu0
  %5101 = vmatprep.mubr.bf16.mxu0 0
  %5102 = vmatmul.mubr.bf16.gmra.mrb[0].mxu0 %v256
  %v5103 = vpop.f32.mrb[0].mxu0
  %v5104 = vadd.f32 %v5007, %v5103
  %v5105 = vpop.f32.mrb[0].mxu0
  %v5106 = vpop.f32.mrb[0].mxu0
  %v5107 = vadd.f32 %v5010, %v5106
  %v5108 = vpop.f32.mrb[0].mxu0
  %5109 = vmatprep.mubr.bf16.mxu0 0
  %5110 = vmatmul.mubr.bf16.gmra.mrb[0].mxu0 %v257
  %v5111 = vpop.f32.mrb[0].mxu0
  %v5112 = vadd.f32 %v5015, %v5111
  %v5113 = vpop.f32.mrb[0].mxu0
  %v5114 = vpop.f32.mrb[0].mxu0
  %v5115 = vadd.f32 %v5018, %v5114
  %v5116 = vpop.f32.mrb[0].mxu0
  %5117 = vdwg.mxu0
  %v5118 = vld [vmem:[%s57] sm:$0xff]
  %v5119 = vld [vmem:[%s57 + $0x8] sm:$0xff]
  %v5120 = vld [vmem:[%s57 + $0x10] sm:$0xff]
  %v5121 = vld [vmem:[%s57 + $0x18] sm:$0xff]
  %v5122 = vld [vmem:[%s57 + $0x20] sm:$0xff]
  %v5123 = vld [vmem:[%s57 + $0x28] sm:$0xff]
  %v5124 = vld [vmem:[%s57 + $0x30] sm:$0xff]
  %v5125 = vld [vmem:[%s57 + $0x38] sm:$0xff]
  %v5126 = vld [vmem:[%s57 + $0x40] sm:$0xff]
  %v5127 = vld [vmem:[%s57 + $0x48] sm:$0xff]
  %v5128 = vld [vmem:[%s57 + $0x50] sm:$0xff]
  %v5129 = vld [vmem:[%s57 + $0x58] sm:$0xff]
  %v5130 = vld [vmem:[%s57 + $0x60] sm:$0xff]
  %v5131 = vld [vmem:[%s57 + $0x68] sm:$0xff]
  %v5132 = vld [vmem:[%s57 + $0x70] sm:$0xff]
  %v5133 = vld [vmem:[%s57 + $0x78] sm:$0xff]
  %5134 = vmatprep.subr.mxu0 0.0
  %5135 = vmatpush1.msra.mxu0 %v5118
  %5136 = vmatprep.subr.mxu0 0.0
  %5137 = vmatpush1.msra.mxu0 %v5119
  %5138 = vmatprep.subr.mxu0 0.0
  %5139 = vmatpush1.msra.mxu0 %v5120
  %5140 = vmatprep.subr.mxu0 0.0
  %5141 = vmatpush1.msra.mxu0 %v5121
  %5142 = vmatprep.subr.mxu0 0.0
  %5143 = vmatpush1.msra.mxu0 %v5122
  %5144 = vmatprep.subr.mxu0 0.0
  %5145 = vmatpush1.msra.mxu0 %v5123
  %5146 = vmatprep.subr.mxu0 0.0
  %5147 = vmatpush1.msra.mxu0 %v5124
  %5148 = vmatprep.subr.mxu0 0.0
  %5149 = vmatpush1.msra.mxu0 %v5125
  %5150 = vmatprep.subr.mxu0 0.0
  %5151 = vmatpush1.msra.mxu0 %v5126
  %5152 = vmatprep.subr.mxu0 0.0
  %5153 = vmatpush1.msra.mxu0 %v5127
  %5154 = vmatprep.subr.mxu0 0.0
  %5155 = vmatpush1.msra.mxu0 %v5128
  %5156 = vmatprep.subr.mxu0 0.0
  %5157 = vmatpush1.msra.mxu0 %v5129
  %5158 = vmatprep.subr.mxu0 0.0
  %5159 = vmatpush1.msra.mxu0 %v5130
  %5160 = vmatprep.subr.mxu0 0.0
  %5161 = vmatpush1.msra.mxu0 %v5131
  %5162 = vmatprep.subr.mxu0 0.0
  %5163 = vmatpush1.msra.mxu0 %v5132
  %5164 = vmatprep.subr.mxu0 0.0
  %5165 = vmatpush1.msra.mxu0 %v5133
  %5166 = vmatprep.subr.mxu0 0.0
  %5167 = vmatpush1.msra.mxu0 0.0
  %5168 = vmatprep.subr.mxu0 0.0
  %5169 = vmatpush1.msra.mxu0 0.0
  %5170 = vmatprep.subr.mxu0 0.0
  %5171 = vmatpush1.msra.mxu0 0.0
  %5172 = vmatprep.subr.mxu0 0.0
  %5173 = vmatpush1.msra.mxu0 0.0
  %5174 = vmatprep.subr.mxu0 0.0
  %5175 = vmatpush1.msra.mxu0 0.0
  %5176 = vmatprep.subr.mxu0 0.0
  %5177 = vmatpush1.msra.mxu0 0.0
  %5178 = vmatprep.subr.mxu0 0.0
  %5179 = vmatpush1.msra.mxu0 0.0
  %5180 = vmatprep.subr.mxu0 0.0
  %5181 = vmatpush1.msra.mxu0 0.0
  %5182 = vmatprep.subr.mxu0 0.0
  %5183 = vmatpush1.msra.mxu0 0.0
  %5184 = vmatprep.subr.mxu0 0.0
  %5185 = vmatpush1.msra.mxu0 0.0
  %5186 = vmatprep.subr.mxu0 0.0
  %5187 = vmatpush1.msra.mxu0 0.0
  %5188 = vmatprep.subr.mxu0 0.0
  %5189 = vmatpush1.msra.mxu0 0.0
  %5190 = vmatprep.subr.mxu0 0.0
  %5191 = vmatpush1.msra.mxu0 0.0
  %5192 = vmatprep.subr.mxu0 0.0
  %5193 = vmatpush1.msra.mxu0 0.0
  %5194 = vmatprep.subr.mxu0 0.0
  %5195 = vmatpush1.msra.mxu0 0.0
  %5196 = vmatprep.subr.mxu0 0.0
  %5197 = vmatpush1.msra.mxu0 0.0
  %5198 = vmatprep.mubr.f32.mxu0 0.0
  %5199 = vmatmul.mubr.f32.gmra.mrb[0].mxu0 %v1750
  %v5200 = vpop.f32.mrb[0].mxu0
  %v5201 = vadd.f32 0.0, %v5200
  %v5202 = vpop.f32.mrb[0].mxu0
  %5203 = vmatprep.mubr.f32.mxu0 0.0
  %5204 = vmatmul.mubr.f32.gmra.mrb[0].mxu0 %v1751
  %v5205 = vpop.f32.mrb[0].mxu0
  %v5206 = vadd.f32 0.0, %v5205
  %v5207 = vpop.f32.mrb[0].mxu0
  %5208 = vmatprep.mubr.f32.mxu0 0.0
  %5209 = vmatmul.mubr.f32.gmra.mrb[0].mxu0 %v1752
  %v5210 = vpop.f32.mrb[0].mxu0
  %v5211 = vadd.f32 0.0, %v5210
  %v5212 = vpop.f32.mrb[0].mxu0
  %5213 = vmatprep.mubr.f32.mxu0 0.0
  %5214 = vmatmul.mubr.f32.gmra.mrb[0].mxu0 %v1753
  %v5215 = vpop.f32.mrb[0].mxu0
  %v5216 = vadd.f32 0.0, %v5215
  %v5217 = vpop.f32.mrb[0].mxu0
  %5218 = vmatprep.mubr.f32.mxu0 0.0
  %5219 = vmatmul.mubr.f32.gmra.mrb[0].mxu0 %v1754
  %v5220 = vpop.f32.mrb[0].mxu0
  %v5221 = vadd.f32 0.0, %v5220
  %v5222 = vpop.f32.mrb[0].mxu0
  %5223 = vmatprep.mubr.f32.mxu0 0.0
  %5224 = vmatmul.mubr.f32.gmra.mrb[0].mxu0 %v1755
  %v5225 = vpop.f32.mrb[0].mxu0
  %v5226 = vadd.f32 0.0, %v5225
  %v5227 = vpop.f32.mrb[0].mxu0
  %5228 = vmatprep.mubr.f32.mxu0 0.0
  %5229 = vmatmul.mubr.f32.gmra.mrb[0].mxu0 %v1756
  %v5230 = vpop.f32.mrb[0].mxu0
  %v5231 = vadd.f32 0.0, %v5230
  %v5232 = vpop.f32.mrb[0].mxu0
  %5233 = vmatprep.mubr.f32.mxu0 0.0
  %5234 = vmatmul.mubr.f32.gmra.mrb[0].mxu0 %v1757
  %v5235 = vpop.f32.mrb[0].mxu0
  %v5236 = vadd.f32 0.0, %v5235
  %v5237 = vpop.f32.mrb[0].mxu0
  %5238 = vmatprep.mubr.f32.mxu0 0.0
  %5239 = vmatmul.mubr.f32.gmra.mrb[0].mxu0 %v1758
  %v5240 = vpop.f32.mrb[0].mxu0
  %v5241 = vadd.f32 0.0, %v5240
  %v5242 = vpop.f32.mrb[0].mxu0
  %5243 = vmatprep.mubr.f32.mxu0 0.0
  %5244 = vmatmul.mubr.f32.gmra.mrb[0].mxu0 %v1759
  %v5245 = vpop.f32.mrb[0].mxu0
  %v5246 = vadd.f32 0.0, %v5245
  %v5247 = vpop.f32.mrb[0].mxu0
  %5248 = vmatprep.mubr.f32.mxu0 0.0
  %5249 = vmatmul.mubr.f32.gmra.mrb[0].mxu0 %v1760
  %v5250 = vpop.f32.mrb[0].mxu0
  %v5251 = vadd.f32 0.0, %v5250
  %v5252 = vpop.f32.mrb[0].mxu0
  %5253 = vmatprep.mubr.f32.mxu0 0.0
  %5254 = vmatmul.mubr.f32.gmra.mrb[0].mxu0 %v1761
  %v5255 = vpop.f32.mrb[0].mxu0
  %v5256 = vadd.f32 0.0, %v5255
  %v5257 = vpop.f32.mrb[0].mxu0
  %5258 = vmatprep.mubr.f32.mxu0 0.0
  %5259 = vmatmul.mubr.f32.gmra.mrb[0].mxu0 %v1762
  %v5260 = vpop.f32.mrb[0].mxu0
  %v5261 = vadd.f32 0.0, %v5260
  %v5262 = vpop.f32.mrb[0].mxu0
  %5263 = vmatprep.mubr.f32.mxu0 0.0
  %5264 = vmatmul.mubr.f32.gmra.mrb[0].mxu0 %v1763
  %v5265 = vpop.f32.mrb[0].mxu0
  %v5266 = vadd.f32 0.0, %v5265
  %v5267 = vpop.f32.mrb[0].mxu0
  %5268 = vmatprep.mubr.f32.mxu0 0.0
  %5269 = vmatmul.mubr.f32.gmra.mrb[0].mxu0 %v1764
  %v5270 = vpop.f32.mrb[0].mxu0
  %v5271 = vadd.f32 0.0, %v5270
  %v5272 = vpop.f32.mrb[0].mxu0
  %5273 = vmatprep.mubr.f32.mxu0 0.0
  %5274 = vmatmul.mubr.f32.gmra.mrb[0].mxu0 %v1765
  %v5275 = vpop.f32.mrb[0].mxu0
  %v5276 = vadd.f32 0.0, %v5275
  %v5277 = vpop.f32.mrb[0].mxu0
  %5278 = vdwg.mxu0
  %v5279 = vadd.f32 %v5056, %v5201
  %v5280 = vadd.f32 %v5059, %v5206
  %v5281 = vadd.f32 %v5064, %v5211
  %v5282 = vadd.f32 %v5067, %v5216
  %v5283 = vadd.f32 %v5072, %v5221
  %v5284 = vadd.f32 %v5075, %v5226
  %v5285 = vadd.f32 %v5080, %v5231
  %v5286 = vadd.f32 %v5083, %v5236
  %v5287 = vadd.f32 %v5088, %v5241
  %v5288 = vadd.f32 %v5091, %v5246
  %v5289 = vadd.f32 %v5096, %v5251
  %v5290 = vadd.f32 %v5099, %v5256
  %v5291 = vadd.f32 %v5104, %v5261
  %v5292 = vadd.f32 %v5107, %v5266
  %v5293 = vadd.f32 %v5112, %v5271
  %v5294 = vadd.f32 %v5115, %v5276
  %v5295 = vld [vmem:[%s59] sm:$0x1]
  %v5297 = vlaneseq
  %v5298 = vshrl.u32 %v5297, 7
  %v5299 = vsub.s32 0, %v5298
  %v5300 = vrot.slane %v5295, %v5299
  %v5302 = vadd.f32 %v5279, %v5300
  %v5303 = vadd.f32 %v5280, %v5300
  %v5304 = vadd.f32 %v5281, %v5300
  %v5305 = vadd.f32 %v5282, %v5300
  %v5306 = vadd.f32 %v5283, %v5300
  %v5307 = vadd.f32 %v5284, %v5300
  %v5308 = vadd.f32 %v5285, %v5300
  %v5309 = vadd.f32 %v5286, %v5300
  %v5310 = vadd.f32 %v5287, %v5300
  %v5311 = vadd.f32 %v5288, %v5300
  %v5312 = vadd.f32 %v5289, %v5300
  %v5313 = vadd.f32 %v5290, %v5300
  %v5314 = vadd.f32 %v5291, %v5300
  %v5315 = vadd.f32 %v5292, %v5300
  %v5316 = vadd.f32 %v5293, %v5300
  %v5317 = vadd.f32 %v5294, %v5300
  %v5318 = vmax.f32 %v5302, 0.0
  %v5319 = vmax.f32 %v5303, 0.0
  %v5320 = vmax.f32 %v5304, 0.0
  %v5321 = vmax.f32 %v5305, 0.0
  %v5322 = vmax.f32 %v5306, 0.0
  %v5323 = vmax.f32 %v5307, 0.0
  %v5324 = vmax.f32 %v5308, 0.0
  %v5325 = vmax.f32 %v5309, 0.0
  %v5326 = vmax.f32 %v5310, 0.0
  %v5327 = vmax.f32 %v5311, 0.0
  %v5328 = vmax.f32 %v5312, 0.0
  %v5329 = vmax.f32 %v5313, 0.0
  %v5330 = vmax.f32 %v5314, 0.0
  %v5331 = vmax.f32 %v5315, 0.0
  %v5332 = vmax.f32 %v5316, 0.0
  %v5333 = vmax.f32 %v5317, 0.0
  %v5334 = vld [vmem:[%s61] sm:$0xff]
  %v5335 = vld [vmem:[%s61 + $0x8] sm:$0xff]
  %v5336 = vld [vmem:[%s61 + $0x10] sm:$0xff]
  %v5337 = vld [vmem:[%s61 + $0x18] sm:$0xff]
  %v5338 = vld [vmem:[%s61 + $0x20] sm:$0xff]
  %v5339 = vld [vmem:[%s61 + $0x28] sm:$0xff]
  %v5340 = vld [vmem:[%s61 + $0x30] sm:$0xff]
  %v5341 = vld [vmem:[%s61 + $0x38] sm:$0xff]
  %v5342 = vld [vmem:[%s61 + $0x40] sm:$0xff]
  %v5343 = vld [vmem:[%s61 + $0x48] sm:$0xff]
  %v5344 = vld [vmem:[%s61 + $0x50] sm:$0xff]
  %v5345 = vld [vmem:[%s61 + $0x58] sm:$0xff]
  %v5346 = vld [vmem:[%s61 + $0x60] sm:$0xff]
  %v5347 = vld [vmem:[%s61 + $0x68] sm:$0xff]
  %v5348 = vld [vmem:[%s61 + $0x70] sm:$0xff]
  %v5349 = vld [vmem:[%s61 + $0x78] sm:$0xff]
  %v5350 = vld [vmem:[%s63] sm:$0x1]
  %v5352 = vlaneseq
  %v5353 = vshrl.u32 %v5352, 7
  %v5354 = vsub.s32 0, %v5353
  %v5355 = vrot.slane %v5350, %v5354
  %5357 = vmatprep.subr.mxu0 0.0
  %5358 = vmatpush1.msra.mxu0 %v5334
  %5359 = vmatprep.subr.mxu0 0.0
  %5360 = vmatpush1.msra.mxu0 %v5335
  %5361 = vmatprep.subr.mxu0 0.0
  %5362 = vmatpush1.msra.mxu0 %v5336
  %5363 = vmatprep.subr.mxu0 0.0
  %5364 = vmatpush1.msra.mxu0 %v5337
  %5365 = vmatprep.subr.mxu0 0.0
  %5366 = vmatpush1.msra.mxu0 %v5338
  %5367 = vmatprep.subr.mxu0 0.0
  %5368 = vmatpush1.msra.mxu0 %v5339
  %5369 = vmatprep.subr.mxu0 0.0
  %5370 = vmatpush1.msra.mxu0 %v5340
  %5371 = vmatprep.subr.mxu0 0.0
  %5372 = vmatpush1.msra.mxu0 %v5341
  %5373 = vmatprep.subr.mxu0 0.0
  %5374 = vmatpush1.msra.mxu0 %v5342
  %5375 = vmatprep.subr.mxu0 0.0
  %5376 = vmatpush1.msra.mxu0 %v5343
  %5377 = vmatprep.subr.mxu0 0.0
  %5378 = vmatpush1.msra.mxu0 %v5344
  %5379 = vmatprep.subr.mxu0 0.0
  %5380 = vmatpush1.msra.mxu0 %v5345
  %5381 = vmatprep.subr.mxu0 0.0
  %5382 = vmatpush1.msra.mxu0 %v5346
  %5383 = vmatprep.subr.mxu0 0.0
  %5384 = vmatpush1.msra.mxu0 %v5347
  %5385 = vmatprep.subr.mxu0 0.0
  %5386 = vmatpush1.msra.mxu0 %v5348
  %5387 = vmatprep.subr.mxu0 0.0
  %5388 = vmatpush1.msra.mxu0 %v5349
  %5389 = vmatprep.subr.mxu0 0.0
  %5390 = vmatpush1.msra.mxu0 0.0
  %5391 = vmatprep.subr.mxu0 0.0
  %5392 = vmatpush1.msra.mxu0 0.0
  %5393 = vmatprep.subr.mxu0 0.0
  %5394 = vmatpush1.msra.mxu0 0.0
  %5395 = vmatprep.subr.mxu0 0.0
  %5396 = vmatpush1.msra.mxu0 0.0
  %5397 = vmatprep.subr.mxu0 0.0
  %5398 = vmatpush1.msra.mxu0 0.0
  %5399 = vmatprep.subr.mxu0 0.0
  %5400 = vmatpush1.msra.mxu0 0.0
  %5401 = vmatprep.subr.mxu0 0.0
  %5402 = vmatpush1.msra.mxu0 0.0
  %5403 = vmatprep.subr.mxu0 0.0
  %5404 = vmatpush1.msra.mxu0 0.0
  %5405 = vmatprep.subr.mxu0 0.0
  %5406 = vmatpush1.msra.mxu0 0.0
  %5407 = vmatprep.subr.mxu0 0.0
  %5408 = vmatpush1.msra.mxu0 0.0
  %5409 = vmatprep.subr.mxu0 0.0
  %5410 = vmatpush1.msra.mxu0 0.0
  %5411 = vmatprep.subr.mxu0 0.0
  %5412 = vmatpush1.msra.mxu0 0.0
  %5413 = vmatprep.subr.mxu0 0.0
  %5414 = vmatpush1.msra.mxu0 0.0
  %5415 = vmatprep.subr.mxu0 0.0
  %5416 = vmatpush1.msra.mxu0 0.0
  %5417 = vmatprep.subr.mxu0 0.0
  %5418 = vmatpush1.msra.mxu0 0.0
  %5419 = vmatprep.subr.mxu0 0.0
  %5420 = vmatpush1.msra.mxu0 0.0
  %5421 = vmatprep.mubr.f32.mxu0 0.0
  %5422 = vmatmul.mubr.f32.gmra.mrb[0].mxu0 %v5318
  %v5423 = vpop.f32.mrb[0].mxu0
  %v5424 = vadd.f32 %v5355, %v5423
  %v5425 = vpop.f32.mrb[0].mxu0
  %5426 = vmatprep.mubr.f32.mxu0 0.0
  %5427 = vmatmul.mubr.f32.gmra.mrb[0].mxu0 %v5319
  %v5428 = vpop.f32.mrb[0].mxu0
  %v5429 = vadd.f32 %v5355, %v5428
  %v5430 = vpop.f32.mrb[0].mxu0
  %5431 = vmatprep.mubr.f32.mxu0 0.0
  %5432 = vmatmul.mubr.f32.gmra.mrb[0].mxu0 %v5320
  %v5433 = vpop.f32.mrb[0].mxu0
  %v5434 = vadd.f32 %v5355, %v5433
  %v5435 = vpop.f32.mrb[0].mxu0
  %5436 = vmatprep.mubr.f32.mxu0 0.0
  %5437 = vmatmul.mubr.f32.gmra.mrb[0].mxu0 %v5321
  %v5438 = vpop.f32.mrb[0].mxu0
  %v5439 = vadd.f32 %v5355, %v5438
  %v5440 = vpop.f32.mrb[0].mxu0
  %5441 = vmatprep.mubr.f32.mxu0 0.0
  %5442 = vmatmul.mubr.f32.gmra.mrb[0].mxu0 %v5322
  %v5443 = vpop.f32.mrb[0].mxu0
  %v5444 = vadd.f32 %v5355, %v5443
  %v5445 = vpop.f32.mrb[0].mxu0
  %5446 = vmatprep.mubr.f32.mxu0 0.0
  %5447 = vmatmul.mubr.f32.gmra.mrb[0].mxu0 %v5323
  %v5448 = vpop.f32.mrb[0].mxu0
  %v5449 = vadd.f32 %v5355, %v5448
  %v5450 = vpop.f32.mrb[0].mxu0
  %5451 = vmatprep.mubr.f32.mxu0 0.0
  %5452 = vmatmul.mubr.f32.gmra.mrb[0].mxu0 %v5324
  %v5453 = vpop.f32.mrb[0].mxu0
  %v5454 = vadd.f32 %v5355, %v5453
  %v5455 = vpop.f32.mrb[0].mxu0
  %5456 = vmatprep.mubr.f32.mxu0 0.0
  %5457 = vmatmul.mubr.f32.gmra.mrb[0].mxu0 %v5325
  %v5458 = vpop.f32.mrb[0].mxu0
  %v5459 = vadd.f32 %v5355, %v5458
  %v5460 = vpop.f32.mrb[0].mxu0
  %5461 = vmatprep.mubr.f32.mxu0 0.0
  %5462 = vmatmul.mubr.f32.gmra.mrb[0].mxu0 %v5326
  %v5463 = vpop.f32.mrb[0].mxu0
  %v5464 = vadd.f32 %v5355, %v5463
  %v5465 = vpop.f32.mrb[0].mxu0
  %5466 = vmatprep.mubr.f32.mxu0 0.0
  %5467 = vmatmul.mubr.f32.gmra.mrb[0].mxu0 %v5327
  %v5468 = vpop.f32.mrb[0].mxu0
  %v5469 = vadd.f32 %v5355, %v5468
  %v5470 = vpop.f32.mrb[0].mxu0
  %5471 = vmatprep.mubr.f32.mxu0 0.0
  %5472 = vmatmul.mubr.f32.gmra.mrb[0].mxu0 %v5328
  %v5473 = vpop.f32.mrb[0].mxu0
  %v5474 = vadd.f32 %v5355, %v5473
  %v5475 = vpop.f32.mrb[0].mxu0
  %5476 = vmatprep.mubr.f32.mxu0 0.0
  %5477 = vmatmul.mubr.f32.gmra.mrb[0].mxu0 %v5329
  %v5478 = vpop.f32.mrb[0].mxu0
  %v5479 = vadd.f32 %v5355, %v5478
  %v5480 = vpop.f32.mrb[0].mxu0
  %5481 = vmatprep.mubr.f32.mxu0 0.0
  %5482 = vmatmul.mubr.f32.gmra.mrb[0].mxu0 %v5330
  %v5483 = vpop.f32.mrb[0].mxu0
  %v5484 = vadd.f32 %v5355, %v5483
  %v5485 = vpop.f32.mrb[0].mxu0
  %5486 = vmatprep.mubr.f32.mxu0 0.0
  %5487 = vmatmul.mubr.f32.gmra.mrb[0].mxu0 %v5331
  %v5488 = vpop.f32.mrb[0].mxu0
  %v5489 = vadd.f32 %v5355, %v5488
  %v5490 = vpop.f32.mrb[0].mxu0
  %5491 = vmatprep.mubr.f32.mxu0 0.0
  %5492 = vmatmul.mubr.f32.gmra.mrb[0].mxu0 %v5332
  %v5493 = vpop.f32.mrb[0].mxu0
  %v5494 = vadd.f32 %v5355, %v5493
  %v5495 = vpop.f32.mrb[0].mxu0
  %5496 = vmatprep.mubr.f32.mxu0 0.0
  %5497 = vmatmul.mubr.f32.gmra.mrb[0].mxu0 %v5333
  %v5498 = vpop.f32.mrb[0].mxu0
  %v5499 = vadd.f32 %v5355, %v5498
  %v5500 = vpop.f32.mrb[0].mxu0
  %5501 = vdwg.mxu0
  %5502 = vst [vmem:[%s65] sm:$0xff] %v5424
  %5503 = vst [vmem:[%s65 + $0x8] sm:$0xff] %v5429
  %5504 = vst [vmem:[%s65 + $0x10] sm:$0xff] %v5434
  %5505 = vst [vmem:[%s65 + $0x18] sm:$0xff] %v5439
  %5506 = vst [vmem:[%s65 + $0x20] sm:$0xff] %v5444
  %5507 = vst [vmem:[%s65 + $0x28] sm:$0xff] %v5449
  %5508 = vst [vmem:[%s65 + $0x30] sm:$0xff] %v5454
  %5509 = vst [vmem:[%s65 + $0x38] sm:$0xff] %v5459
  %5510 = vst [vmem:[%s65 + $0x40] sm:$0xff] %v5464
  %5511 = vst [vmem:[%s65 + $0x48] sm:$0xff] %v5469
  %5512 = vst [vmem:[%s65 + $0x50] sm:$0xff] %v5474
  %5513 = vst [vmem:[%s65 + $0x58] sm:$0xff] %v5479
  %5514 = vst [vmem:[%s65 + $0x60] sm:$0xff] %v5484
  %5515 = vst [vmem:[%s65 + $0x68] sm:$0xff] %v5489
  %5516 = vst [vmem:[%s65 + $0x70] sm:$0xff] %v5494
  %5517 = vst [vmem:[%s65 + $0x78] sm:$0xff] %v5499
  // Predicated region
  $region137: #{forward.1} parent=0 // pred_check
    _
  $region138: #{forward.1} parent=0 // pred_check_branch
    %5519 = sbr.rel (0) target = $region140
  $region139: #{forward.1} parent=0 // pred_region
    _
  $region140: #{forward.1} parent=0 // pred_fallthru
    _
  // Predicated region
  $region141: #{forward.1} parent=0 // pred_check
    _
  $region142: #{forward.1} parent=0 // pred_check_branch
    %5521 = sbr.rel (0) target = $region144
  $region143: #{forward.1} parent=0 // pred_region
    _
  $region144: #{forward.1} parent=0 // pred_fallthru
    _

</llo_original>
